<compile_context>
chip_gen: v5e
topology: v5e:2x2
jax: 0.10.0
libtpu: 0.0.40
codegen_flags: <defaults>
</compile_context>

<pallas_src>
import functools

import jax
import jax.numpy as jnp
from jax import lax
from jax.experimental import pallas as pl
from jax.experimental.pallas import tpu as pltpu


def _nalini_relu(v):
    # Simplified: v + relu((v-1)/2) + relu((-v-1)/2) == v + 0.5*relu(|v|-1)
    # (the two relu branches are mutually exclusive).
    return v + 0.5 * jax.nn.relu(jnp.abs(v) - 1.0)


def _nalini_relu_ref(v):
    # Literal PyTorch formula (used only by the pure-JAX reference).
    return v + jax.nn.relu((v - 1.0) / 2.0) + jax.nn.relu((-v - 1.0) / 2.0)


def _spark_kernel(x_ref, mask_ref, w1_ref, w2_ref, w3_ref, w4_ref, w5_ref,
                  w6_ref, out_ref, *, NB, Wp, K, naliniflag):
    """One batch chunk (NB images) per grid step, channels-first layout.

    x_ref:    (NB, 2*coils, Mpad)  flattened zero-padded images (pad lanes = 0)
    mask_ref: (1, Mpad)            1.0 at interior pixels, 0.0 at pad / tail
    w1/3/4:   (K*K, Cout, Cin)     per-tap 3x3 weights, (ky, kx) row-major
    w2/5:     (Cout, Cin)          1x1 weights
    w6:       (K*K, Cin, 1)        per-tap final-conv columns (Cout == 1)
    out_ref:  (NB, 1, Mpad)        conv6 output over the full padded domain
    """
    act = _nalini_relu if naliniflag else jax.nn.relu
    mask = mask_ref[...]                                   # (1, Mpad)

    # Flattened-lane offset of tap (ky, kx) relative to the output pixel.
    offsets = [(ky - 1) * Wp + (kx - 1) for ky in range(K) for kx in range(K)]

    def shift_m(x2d, d):
        # out[:, m] = x2d[:, m + d]  (zero where m + d is out of range).
        # For every interior output pixel, m + d stays inside the same image's
        # padded frame, so this is exactly the conv tap read; pad-position
        # outputs are garbage and get masked / discarded.
        cc, _ = x2d.shape
        if d == 0:
            return x2d
        if d > 0:
            return jnp.concatenate(
                [x2d[:, d:], jnp.zeros((cc, d), x2d.dtype)], axis=-1)
        return jnp.concatenate(
            [jnp.zeros((cc, -d), x2d.dtype), x2d[:, :d]], axis=-1)

    def conv3x3(xp, wt_ref):
        # xp: (Cin, Mpad) with zeroed pad lanes; wt_ref: (K*K, Cout, Cin).
        # 9 accumulated per-tap matmuls; taps are lane shifts of one slab.
        acc = None
        for t, d in enumerate(offsets):
            contrib = jnp.dot(wt_ref[t], shift_m(xp, d),
                              preferred_element_type=jnp.float32)
            acc = contrib if acc is None else acc + contrib
        return acc                                          # (Cout, Mpad)

    for b in range(NB):
        xb = x_ref[b]                                       # (2C, Mpad), pad = 0
        # conv1: 3x3, 2C -> 2C, + act
        y1 = act(conv3x3(xb, w1_ref))
        # conv2: 1x1, 2C -> C, + act   (mask -> pad lanes back to 0)
        y2 = act(jnp.dot(w2_ref[...], y1,
                         preferred_element_type=jnp.float32)) * mask
        # conv3: 3x3, C -> 2C, + act
        y3 = act(conv3x3(y2, w3_ref)) * mask
        # residual (pad lanes of both terms are 0)
        z = xb + y3
        # conv4: 3x3, 2C -> C, + act
        z4 = act(conv3x3(z, w4_ref))
        # conv5: 1x1, C -> C//4, + act
        z5 = act(jnp.dot(w5_ref[...], z4,
                         preferred_element_type=jnp.float32)) * mask
        # conv6: 3x3, C//4 -> 1, no activation.  Cout == 1 -> keep it on the
        # VPU (per-tap broadcast-mul + sublane reduce), not a degenerate MXU op.
        acc6 = jnp.zeros_like(z5)
        for t, d in enumerate(offsets):
            acc6 = acc6 + w6_ref[t] * shift_m(z5, d)        # (cq,1)*(cq,Mpad)
        out_ref[b] = jnp.sum(acc6, axis=0, keepdims=True)   # (1, Mpad)


def spark_netv2_forward(x_nchw, params, acsx, acsy, *, naliniflag=0,
                        kernelsize=3):
    """Matches SPARK_Netv2.forward.  x_nchw: (N, 2*coils, H, W) float32."""
    N, c2, H, W = x_nchw.shape
    coils = c2 // 2
    c = coils
    cq = max(coils // 4, 1)
    K = kernelsize
    assert K == 3, "padding=1 implies 'same' output only for kernelsize=3"
    Hp, Wp = H + 2, W + 2
    Mp = Hp * Wp
    Mpad = -(-Mp // 128) * 128          # lane-dense: round up to 128 lanes

    w1, w2, w3, w4, w5, w6 = params

    # Channels-first per-tap weights: (K*K, Cout, Cin); tap order (ky, kx)
    # row-major, matching `offsets` in the kernel.
    w1t = jnp.transpose(w1, (0, 1, 3, 2)).reshape(K * K, c2, c2)
    w3t = jnp.transpose(w3, (0, 1, 3, 2)).reshape(K * K, c2, c)
    w4t = jnp.transpose(w4, (0, 1, 3, 2)).reshape(K * K, c, c2)
    w6t = w6.reshape(K * K, cq, 1)      # Cout == 1: per-tap (Cin, 1) columns
    w2t = w2.T                          # (c, c2)
    w5t = w5.T                          # (cq, c)

    # Batch chunking: keep the "parallel" grid axis at >= 2 steps when N >= 2
    # so v7x's second TensorCore gets work; neutral on v5e/v6e (1 TC).
    NB = max(1, min(8, -(-N // 2)))
    G = -(-N // NB)
    Npad = G * NB

    # Plain-JAX glue: zero-pad H/W (conv pad=1), flatten spatial, pad the lane
    # axis up to a multiple of 128, pad batch to a multiple of NB.  Layout
    # stays channels-first (NCHW-like), so no NHWC transpose is needed.
    xp = jnp.pad(x_nchw, ((0, Npad - N), (0, 0), (1, 1), (1, 1)))
    xflat = jnp.pad(xp.reshape(Npad, c2, Mp), ((0, 0), (0, 0), (0, Mpad - Mp)))

    # Interior mask over the flattened padded frame (1.0 at real pixels only).
    idx = jnp.arange(Mpad)
    hh, ww = idx // Wp, idx % Wp
    mask = ((hh >= 1) & (hh <= H) & (ww >= 1) & (ww <= W) & (idx < Mp))
    mask = mask.astype(jnp.float32)[None, :]                # (1, Mpad)

    kernel = functools.partial(_spark_kernel, NB=NB, Wp=Wp, K=K,
                               naliniflag=naliniflag)

    def full_spec(shape):
        nd = len(shape)
        return pl.BlockSpec(shape, lambda n, _nd=nd: (0,) * _nd)

    out_flat = pl.pallas_call(
        kernel,
        out_shape=jax.ShapeDtypeStruct((Npad, 1, Mpad), jnp.float32),
        grid_spec=pltpu.PrefetchScalarGridSpec(
            num_scalar_prefetch=0,
            grid=(G,),
            in_specs=[
                pl.BlockSpec((NB, c2, Mpad), lambda n: (n, 0, 0)),
                full_spec(mask.shape),
                full_spec(w1t.shape),
                full_spec(w2t.shape),
                full_spec(w3t.shape),
                full_spec(w4t.shape),
                full_spec(w5t.shape),
                full_spec(w6t.shape),
            ],
            out_specs=pl.BlockSpec((NB, 1, Mpad), lambda n: (n, 0, 0)),
        ),
        compiler_params=pltpu.CompilerParams(
            dimension_semantics=("parallel",),
            # Explicit scoped-VMEM budget (safe on v5e/v6e/v7x); should become
            # a per-generation byte budget once H-strip tiling lands.
            vmem_limit_bytes=48 * 1024 * 1024),
    )(xflat, mask, w1t, w2t, w3t, w4t, w5t, w6t)

    # Interior extraction (lane-dense slab -> (N, 1, H, W)) in plain JAX.
    out = out_flat[:N, 0, :Mp].reshape(N, Hp, Wp)[:, 1:1 + H, 1:1 + W]
    out = out[:, None, :, :]
    loss_out = out[:, :, acsx[0]:acsx[-1] + 1, acsy[0]:acsy[-1] + 1]
    return out, loss_out


def _reference_forward(x_nchw, params, acsx, acsy, naliniflag=0):
    """Pure-JAX (lax.conv) reference of the PyTorch forward, NCHW in/out."""
    w1, w2, w3, w4, w5, w6 = params
    act = _nalini_relu_ref if naliniflag else jax.nn.relu
    x = jnp.transpose(x_nchw, (0, 2, 3, 1))  # NHWC
    dn = ('NHWC', 'HWIO', 'NHWC')

    def conv(v, w, pad):
        return lax.conv_general_dilated(v, w, (1, 1), [(pad, pad), (pad, pad)],
                                        dimension_numbers=dn)

    y = act(conv(x, w1, 1))
    y = act(conv(y, w2.reshape(1, 1, *w2.shape), 0))
    y = act(conv(y, w3, 1))
    z = x + y
    z = act(conv(z, w4, 1))
    z = act(conv(z, w5.reshape(1, 1, *w5.shape), 0))
    out = conv(z, w6, 1)
    out = jnp.transpose(out, (0, 3, 1, 2))  # NCHW
    loss_out = out[:, :, acsx[0]:acsx[-1] + 1, acsy[0]:acsy[-1] + 1]
    return out, loss_out


if __name__ == "__main__":
    key = jax.random.PRNGKey(0)
    coils, K = 4, 3
    N, H, W = 2, 16, 16
    c2, c, cq = 2 * coils, coils, coils // 4
    acsx = list(range(6, 10))   # ACS region rows
    acsy = list(range(6, 10))   # ACS region cols

    keys = jax.random.split(key, 7)
    # weights in (K, K, Cin, Cout) / (Cin, Cout) layout, deterministic init
    w1 = 0.1 * jax.random.normal(keys[0], (K, K, c2, c2), jnp.float32)
    w2 = 0.1 * jax.random.normal(keys[1], (c2, c), jnp.float32)
    w3 = 0.1 * jax.random.normal(keys[2], (K, K, c, c2), jnp.float32)
    w4 = 0.1 * jax.random.normal(keys[3], (K, K, c2, c), jnp.float32)
    w5 = 0.1 * jax.random.normal(keys[4], (c, cq), jnp.float32)
    w6 = 0.1 * jax.random.normal(keys[5], (K, K, cq, 1), jnp.float32)
    params = (w1, w2, w3, w4, w5, w6)

    x = jax.random.normal(keys[6], (N, c2, H, W), jnp.float32)

    for naliniflag in (0, 1):
        out, loss_out = spark_netv2_forward(x, params, acsx, acsy,
                                            naliniflag=naliniflag,
                                            kernelsize=K)
        out, loss_out = jax.block_until_ready((out, loss_out))

        ref_out, ref_loss = _reference_forward(x, params, acsx, acsy,
                                               naliniflag)
        assert out.shape == (N, 1, H, W)
        assert loss_out.shape == (N, 1, len(acsx), len(acsy))
        assert jnp.allclose(out, ref_out, atol=1e-3, rtol=1e-3), naliniflag
        assert jnp.allclose(loss_out, ref_loss, atol=1e-3, rtol=1e-3), naliniflag

    print("KERNEL_OK")
</pallas_src>

<mosaic_0001>
module attributes {stable_mosaic.version = 11 : i64} {
  func.func @_spark_kernel(%arg0: i32, %arg1: memref<1x8x384xf32, #tpu.memory_space<vmem>>, %arg2: memref<1x384xf32, #tpu.memory_space<vmem>>, %arg3: memref<9x8x8xf32, #tpu.memory_space<vmem>>, %arg4: memref<4x8xf32, #tpu.memory_space<vmem>>, %arg5: memref<9x8x4xf32, #tpu.memory_space<vmem>>, %arg6: memref<9x4x8xf32, #tpu.memory_space<vmem>>, %arg7: memref<1x4xf32, #tpu.memory_space<vmem>>, %arg8: memref<9x1x1xf32, #tpu.memory_space<vmem>>, %arg9: memref<1x1x384xf32, #tpu.memory_space<vmem>>) attributes {dimension_semantics = [#tpu.dimension_semantics<parallel>], iteration_bounds = array<i64: 2>, scalar_prefetch = 0 : i64, scratch_operands = 0 : i64, tpu.core_type = #tpu.core_type<tc>, window_params = [{transform_indices = @transform_0, window_bounds = array<i64: 1, 8, 384>}, {pipeline_mode = #tpu.pipeline_mode<synchronous>, transform_indices = @transform_1, window_bounds = array<i64: 1, 384>}, {pipeline_mode = #tpu.pipeline_mode<synchronous>, transform_indices = @transform_2, window_bounds = array<i64: 9, 8, 8>}, {pipeline_mode = #tpu.pipeline_mode<synchronous>, transform_indices = @transform_3, window_bounds = array<i64: 4, 8>}, {pipeline_mode = #tpu.pipeline_mode<synchronous>, transform_indices = @transform_4, window_bounds = array<i64: 9, 8, 4>}, {pipeline_mode = #tpu.pipeline_mode<synchronous>, transform_indices = @transform_5, window_bounds = array<i64: 9, 4, 8>}, {pipeline_mode = #tpu.pipeline_mode<synchronous>, transform_indices = @transform_6, window_bounds = array<i64: 1, 4>}, {pipeline_mode = #tpu.pipeline_mode<synchronous>, transform_indices = @transform_7, window_bounds = array<i64: 9, 1, 1>}, {transform_indices = @transform_8, window_bounds = array<i64: 1, 1, 384>}]} {
    %c0 = arith.constant 0 : index
    %c0_0 = arith.constant 0 : index
    %0 = vector.load %arg2[%c0, %c0_0] : memref<1x384xf32, #tpu.memory_space<vmem>>, vector<1x384xf32>
    %c0_1 = arith.constant 0 : index
    %c0_2 = arith.constant 0 : index
    %c0_3 = arith.constant 0 : index
    %1 = vector.load %arg1[%c0_1, %c0_2, %c0_3] : memref<1x8x384xf32, #tpu.memory_space<vmem>>, vector<1x8x384xf32>
    %2 = vector.shape_cast %1 : vector<1x8x384xf32> to vector<8x384xf32>
    %c0_4 = arith.constant 0 : index
    %c0_5 = arith.constant 0 : index
    %c0_6 = arith.constant 0 : index
    %3 = vector.load %arg3[%c0_4, %c0_5, %c0_6] : memref<9x8x8xf32, #tpu.memory_space<vmem>>, vector<1x8x8xf32>
    %4 = vector.shape_cast %3 : vector<1x8x8xf32> to vector<8x8xf32>
    %cst = arith.constant 0.000000e+00 : f32
    %5 = vector.broadcast %cst : f32 to vector<8x19xf32>
    %6 = vector.extract_strided_slice %2 {offsets = [0, 0], sizes = [8, 365], strides = [1, 1]} : vector<8x384xf32> to vector<8x365xf32>
    %7 = tpu.concatenate %5, %6 in 1 : vector<8x19xf32>, vector<8x365xf32> -> vector<8x384xf32>
    %cst_7 = arith.constant dense<0.000000e+00> : vector<8x384xf32>
    %8 = tpu.matmul %4, %7, %cst_7 {dimension_numbers = #tpu.dot_dimension_numbers<[1], [0], [0], [1], [0, 0, 1, 1], [], []>} : vector<8x8xf32>, vector<8x384xf32>, vector<8x384xf32> -> vector<8x384xf32>
    %c1 = arith.constant 1 : index
    %c0_8 = arith.constant 0 : index
    %c0_9 = arith.constant 0 : index
    %9 = vector.load %arg3[%c1, %c0_8, %c0_9] : memref<9x8x8xf32, #tpu.memory_space<vmem>>, vector<1x8x8xf32>
    %10 = vector.shape_cast %9 : vector<1x8x8xf32> to vector<8x8xf32>
    %cst_10 = arith.constant 0.000000e+00 : f32
    %11 = vector.broadcast %cst_10 : f32 to vector<8x18xf32>
    %12 = vector.extract_strided_slice %2 {offsets = [0, 0], sizes = [8, 366], strides = [1, 1]} : vector<8x384xf32> to vector<8x366xf32>
    %13 = tpu.concatenate %11, %12 in 1 : vector<8x18xf32>, vector<8x366xf32> -> vector<8x384xf32>
    %cst_11 = arith.constant dense<0.000000e+00> : vector<8x384xf32>
    %14 = tpu.matmul %10, %13, %cst_11 {dimension_numbers = #tpu.dot_dimension_numbers<[1], [0], [0], [1], [0, 0, 1, 1], [], []>} : vector<8x8xf32>, vector<8x384xf32>, vector<8x384xf32> -> vector<8x384xf32>
    %15 = arith.addf %8, %14 : vector<8x384xf32>
    %c2 = arith.constant 2 : index
    %c0_12 = arith.constant 0 : index
    %c0_13 = arith.constant 0 : index
    %16 = vector.load %arg3[%c2, %c0_12, %c0_13] : memref<9x8x8xf32, #tpu.memory_space<vmem>>, vector<1x8x8xf32>
    %17 = vector.shape_cast %16 : vector<1x8x8xf32> to vector<8x8xf32>
    %cst_14 = arith.constant 0.000000e+00 : f32
    %18 = vector.broadcast %cst_14 : f32 to vector<8x17xf32>
    %19 = vector.extract_strided_slice %2 {offsets = [0, 0], sizes = [8, 367], strides = [1, 1]} : vector<8x384xf32> to vector<8x367xf32>
    %20 = tpu.concatenate %18, %19 in 1 : vector<8x17xf32>, vector<8x367xf32> -> vector<8x384xf32>
    %cst_15 = arith.constant dense<0.000000e+00> : vector<8x384xf32>
    %21 = tpu.matmul %17, %20, %cst_15 {dimension_numbers = #tpu.dot_dimension_numbers<[1], [0], [0], [1], [0, 0, 1, 1], [], []>} : vector<8x8xf32>, vector<8x384xf32>, vector<8x384xf32> -> vector<8x384xf32>
    %22 = arith.addf %15, %21 : vector<8x384xf32>
    %c3 = arith.constant 3 : index
    %c0_16 = arith.constant 0 : index
    %c0_17 = arith.constant 0 : index
    %23 = vector.load %arg3[%c3, %c0_16, %c0_17] : memref<9x8x8xf32, #tpu.memory_space<vmem>>, vector<1x8x8xf32>
    %24 = vector.shape_cast %23 : vector<1x8x8xf32> to vector<8x8xf32>
    %cst_18 = arith.constant 0.000000e+00 : f32
    %25 = vector.broadcast %cst_18 : f32 to vector<8x1xf32>
    %26 = vector.extract_strided_slice %2 {offsets = [0, 0], sizes = [8, 383], strides = [1, 1]} : vector<8x384xf32> to vector<8x383xf32>
    %27 = tpu.concatenate %25, %26 in 1 : vector<8x1xf32>, vector<8x383xf32> -> vector<8x384xf32>
    %cst_19 = arith.constant dense<0.000000e+00> : vector<8x384xf32>
    %28 = tpu.matmul %24, %27, %cst_19 {dimension_numbers = #tpu.dot_dimension_numbers<[1], [0], [0], [1], [0, 0, 1, 1], [], []>} : vector<8x8xf32>, vector<8x384xf32>, vector<8x384xf32> -> vector<8x384xf32>
    %29 = arith.addf %22, %28 : vector<8x384xf32>
    %c4 = arith.constant 4 : index
    %c0_20 = arith.constant 0 : index
    %c0_21 = arith.constant 0 : index
    %30 = vector.load %arg3[%c4, %c0_20, %c0_21] : memref<9x8x8xf32, #tpu.memory_space<vmem>>, vector<1x8x8xf32>
    %31 = vector.shape_cast %30 : vector<1x8x8xf32> to vector<8x8xf32>
    %cst_22 = arith.constant dense<0.000000e+00> : vector<8x384xf32>
    %32 = tpu.matmul %31, %2, %cst_22 {dimension_numbers = #tpu.dot_dimension_numbers<[1], [0], [0], [1], [0, 0, 1, 1], [], []>} : vector<8x8xf32>, vector<8x384xf32>, vector<8x384xf32> -> vector<8x384xf32>
    %33 = arith.addf %29, %32 : vector<8x384xf32>
    %c5 = arith.constant 5 : index
    %c0_23 = arith.constant 0 : index
    %c0_24 = arith.constant 0 : index
    %34 = vector.load %arg3[%c5, %c0_23, %c0_24] : memref<9x8x8xf32, #tpu.memory_space<vmem>>, vector<1x8x8xf32>
    %35 = vector.shape_cast %34 : vector<1x8x8xf32> to vector<8x8xf32>
    %36 = vector.extract_strided_slice %2 {offsets = [0, 1], sizes = [8, 383], strides = [1, 1]} : vector<8x384xf32> to vector<8x383xf32>
    %cst_25 = arith.constant 0.000000e+00 : f32
    %37 = vector.broadcast %cst_25 : f32 to vector<8x1xf32>
    %38 = tpu.concatenate %36, %37 in 1 : vector<8x383xf32>, vector<8x1xf32> -> vector<8x384xf32>
    %cst_26 = arith.constant dense<0.000000e+00> : vector<8x384xf32>
    %39 = tpu.matmul %35, %38, %cst_26 {dimension_numbers = #tpu.dot_dimension_numbers<[1], [0], [0], [1], [0, 0, 1, 1], [], []>} : vector<8x8xf32>, vector<8x384xf32>, vector<8x384xf32> -> vector<8x384xf32>
    %40 = arith.addf %33, %39 : vector<8x384xf32>
    %c6 = arith.constant 6 : index
    %c0_27 = arith.constant 0 : index
    %c0_28 = arith.constant 0 : index
    %41 = vector.load %arg3[%c6, %c0_27, %c0_28] : memref<9x8x8xf32, #tpu.memory_space<vmem>>, vector<1x8x8xf32>
    %42 = vector.shape_cast %41 : vector<1x8x8xf32> to vector<8x8xf32>
    %43 = vector.extract_strided_slice %2 {offsets = [0, 17], sizes = [8, 367], strides = [1, 1]} : vector<8x384xf32> to vector<8x367xf32>
    %cst_29 = arith.constant 0.000000e+00 : f32
    %44 = vector.broadcast %cst_29 : f32 to vector<8x17xf32>
    %45 = tpu.concatenate %43, %44 in 1 : vector<8x367xf32>, vector<8x17xf32> -> vector<8x384xf32>
    %cst_30 = arith.constant dense<0.000000e+00> : vector<8x384xf32>
    %46 = tpu.matmul %42, %45, %cst_30 {dimension_numbers = #tpu.dot_dimension_numbers<[1], [0], [0], [1], [0, 0, 1, 1], [], []>} : vector<8x8xf32>, vector<8x384xf32>, vector<8x384xf32> -> vector<8x384xf32>
    %47 = arith.addf %40, %46 : vector<8x384xf32>
    %c7 = arith.constant 7 : index
    %c0_31 = arith.constant 0 : index
    %c0_32 = arith.constant 0 : index
    %48 = vector.load %arg3[%c7, %c0_31, %c0_32] : memref<9x8x8xf32, #tpu.memory_space<vmem>>, vector<1x8x8xf32>
    %49 = vector.shape_cast %48 : vector<1x8x8xf32> to vector<8x8xf32>
    %50 = vector.extract_strided_slice %2 {offsets = [0, 18], sizes = [8, 366], strides = [1, 1]} : vector<8x384xf32> to vector<8x366xf32>
    %cst_33 = arith.constant 0.000000e+00 : f32
    %51 = vector.broadcast %cst_33 : f32 to vector<8x18xf32>
    %52 = tpu.concatenate %50, %51 in 1 : vector<8x366xf32>, vector<8x18xf32> -> vector<8x384xf32>
    %cst_34 = arith.constant dense<0.000000e+00> : vector<8x384xf32>
    %53 = tpu.matmul %49, %52, %cst_34 {dimension_numbers = #tpu.dot_dimension_numbers<[1], [0], [0], [1], [0, 0, 1, 1], [], []>} : vector<8x8xf32>, vector<8x384xf32>, vector<8x384xf32> -> vector<8x384xf32>
    %54 = arith.addf %47, %53 : vector<8x384xf32>
    %c8 = arith.constant 8 : index
    %c0_35 = arith.constant 0 : index
    %c0_36 = arith.constant 0 : index
    %55 = vector.load %arg3[%c8, %c0_35, %c0_36] : memref<9x8x8xf32, #tpu.memory_space<vmem>>, vector<1x8x8xf32>
    %56 = vector.shape_cast %55 : vector<1x8x8xf32> to vector<8x8xf32>
    %57 = vector.extract_strided_slice %2 {offsets = [0, 19], sizes = [8, 365], strides = [1, 1]} : vector<8x384xf32> to vector<8x365xf32>
    %cst_37 = arith.constant 0.000000e+00 : f32
    %58 = vector.broadcast %cst_37 : f32 to vector<8x19xf32>
    %59 = tpu.concatenate %57, %58 in 1 : vector<8x365xf32>, vector<8x19xf32> -> vector<8x384xf32>
    %cst_38 = arith.constant dense<0.000000e+00> : vector<8x384xf32>
    %60 = tpu.matmul %56, %59, %cst_38 {dimension_numbers = #tpu.dot_dimension_numbers<[1], [0], [0], [1], [0, 0, 1, 1], [], []>} : vector<8x8xf32>, vector<8x384xf32>, vector<8x384xf32> -> vector<8x384xf32>
    %61 = arith.addf %54, %60 : vector<8x384xf32>
    %cst_39 = arith.constant 0.000000e+00 : f32
    %62 = vector.broadcast %cst_39 : f32 to vector<8x384xf32>
    %63 = arith.maximumf %61, %62 : vector<8x384xf32>
    %c0_40 = arith.constant 0 : index
    %c0_41 = arith.constant 0 : index
    %64 = vector.load %arg4[%c0_40, %c0_41] : memref<4x8xf32, #tpu.memory_space<vmem>>, vector<4x8xf32>
    %cst_42 = arith.constant dense<0.000000e+00> : vector<4x384xf32>
    %65 = tpu.matmul %64, %63, %cst_42 {dimension_numbers = #tpu.dot_dimension_numbers<[1], [0], [0], [1], [0, 0, 1, 1], [], []>} : vector<4x8xf32>, vector<8x384xf32>, vector<4x384xf32> -> vector<4x384xf32>
    %cst_43 = arith.constant 0.000000e+00 : f32
    %66 = vector.broadcast %cst_43 : f32 to vector<4x384xf32>
    %67 = arith.maximumf %65, %66 : vector<4x384xf32>
    %68 = vector.broadcast %0 : vector<1x384xf32> to vector<4x384xf32>
    %69 = arith.mulf %67, %68 : vector<4x384xf32>
    %c0_44 = arith.constant 0 : index
    %c0_45 = arith.constant 0 : index
    %c0_46 = arith.constant 0 : index
    %70 = vector.load %arg5[%c0_44, %c0_45, %c0_46] : memref<9x8x4xf32, #tpu.memory_space<vmem>>, vector<1x8x4xf32>
    %71 = vector.shape_cast %70 : vector<1x8x4xf32> to vector<8x4xf32>
    %cst_47 = arith.constant 0.000000e+00 : f32
    %72 = vector.broadcast %cst_47 : f32 to vector<4x19xf32>
    %73 = vector.extract_strided_slice %69 {offsets = [0, 0], sizes = [4, 365], strides = [1, 1]} : vector<4x384xf32> to vector<4x365xf32>
    %74 = tpu.concatenate %72, %73 in 1 : vector<4x19xf32>, vector<4x365xf32> -> vector<4x384xf32>
    %cst_48 = arith.constant dense<0.000000e+00> : vector<8x384xf32>
    %75 = tpu.matmul %71, %74, %cst_48 {dimension_numbers = #tpu.dot_dimension_numbers<[1], [0], [0], [1], [0, 0, 1, 1], [], []>} : vector<8x4xf32>, vector<4x384xf32>, vector<8x384xf32> -> vector<8x384xf32>
    %c1_49 = arith.constant 1 : index
    %c0_50 = arith.constant 0 : index
    %c0_51 = arith.constant 0 : index
    %76 = vector.load %arg5[%c1_49, %c0_50, %c0_51] : memref<9x8x4xf32, #tpu.memory_space<vmem>>, vector<1x8x4xf32>
    %77 = vector.shape_cast %76 : vector<1x8x4xf32> to vector<8x4xf32>
    %cst_52 = arith.constant 0.000000e+00 : f32
    %78 = vector.broadcast %cst_52 : f32 to vector<4x18xf32>
    %79 = vector.extract_strided_slice %69 {offsets = [0, 0], sizes = [4, 366], strides = [1, 1]} : vector<4x384xf32> to vector<4x366xf32>
    %80 = tpu.concatenate %78, %79 in 1 : vector<4x18xf32>, vector<4x366xf32> -> vector<4x384xf32>
    %cst_53 = arith.constant dense<0.000000e+00> : vector<8x384xf32>
    %81 = tpu.matmul %77, %80, %cst_53 {dimension_numbers = #tpu.dot_dimension_numbers<[1], [0], [0], [1], [0, 0, 1, 1], [], []>} : vector<8x4xf32>, vector<4x384xf32>, vector<8x384xf32> -> vector<8x384xf32>
    %82 = arith.addf %75, %81 : vector<8x384xf32>
    %c2_54 = arith.constant 2 : index
    %c0_55 = arith.constant 0 : index
    %c0_56 = arith.constant 0 : index
    %83 = vector.load %arg5[%c2_54, %c0_55, %c0_56] : memref<9x8x4xf32, #tpu.memory_space<vmem>>, vector<1x8x4xf32>
    %84 = vector.shape_cast %83 : vector<1x8x4xf32> to vector<8x4xf32>
    %cst_57 = arith.constant 0.000000e+00 : f32
    %85 = vector.broadcast %cst_57 : f32 to vector<4x17xf32>
    %86 = vector.extract_strided_slice %69 {offsets = [0, 0], sizes = [4, 367], strides = [1, 1]} : vector<4x384xf32> to vector<4x367xf32>
    %87 = tpu.concatenate %85, %86 in 1 : vector<4x17xf32>, vector<4x367xf32> -> vector<4x384xf32>
    %cst_58 = arith.constant dense<0.000000e+00> : vector<8x384xf32>
    %88 = tpu.matmul %84, %87, %cst_58 {dimension_numbers = #tpu.dot_dimension_numbers<[1], [0], [0], [1], [0, 0, 1, 1], [], []>} : vector<8x4xf32>, vector<4x384xf32>, vector<8x384xf32> -> vector<8x384xf32>
    %89 = arith.addf %82, %88 : vector<8x384xf32>
    %c3_59 = arith.constant 3 : index
    %c0_60 = arith.constant 0 : index
    %c0_61 = arith.constant 0 : index
    %90 = vector.load %arg5[%c3_59, %c0_60, %c0_61] : memref<9x8x4xf32, #tpu.memory_space<vmem>>, vector<1x8x4xf32>
    %91 = vector.shape_cast %90 : vector<1x8x4xf32> to vector<8x4xf32>
    %cst_62 = arith.constant 0.000000e+00 : f32
    %92 = vector.broadcast %cst_62 : f32 to vector<4x1xf32>
    %93 = vector.extract_strided_slice %69 {offsets = [0, 0], sizes = [4, 383], strides = [1, 1]} : vector<4x384xf32> to vector<4x383xf32>
    %94 = tpu.concatenate %92, %93 in 1 : vector<4x1xf32>, vector<4x383xf32> -> vector<4x384xf32>
    %cst_63 = arith.constant dense<0.000000e+00> : vector<8x384xf32>
    %95 = tpu.matmul %91, %94, %cst_63 {dimension_numbers = #tpu.dot_dimension_numbers<[1], [0], [0], [1], [0, 0, 1, 1], [], []>} : vector<8x4xf32>, vector<4x384xf32>, vector<8x384xf32> -> vector<8x384xf32>
    %96 = arith.addf %89, %95 : vector<8x384xf32>
    %c4_64 = arith.constant 4 : index
    %c0_65 = arith.constant 0 : index
    %c0_66 = arith.constant 0 : index
    %97 = vector.load %arg5[%c4_64, %c0_65, %c0_66] : memref<9x8x4xf32, #tpu.memory_space<vmem>>, vector<1x8x4xf32>
    %98 = vector.shape_cast %97 : vector<1x8x4xf32> to vector<8x4xf32>
    %cst_67 = arith.constant dense<0.000000e+00> : vector<8x384xf32>
    %99 = tpu.matmul %98, %69, %cst_67 {dimension_numbers = #tpu.dot_dimension_numbers<[1], [0], [0], [1], [0, 0, 1, 1], [], []>} : vector<8x4xf32>, vector<4x384xf32>, vector<8x384xf32> -> vector<8x384xf32>
    %100 = arith.addf %96, %99 : vector<8x384xf32>
    %c5_68 = arith.constant 5 : index
    %c0_69 = arith.constant 0 : index
    %c0_70 = arith.constant 0 : index
    %101 = vector.load %arg5[%c5_68, %c0_69, %c0_70] : memref<9x8x4xf32, #tpu.memory_space<vmem>>, vector<1x8x4xf32>
    %102 = vector.shape_cast %101 : vector<1x8x4xf32> to vector<8x4xf32>
    %103 = vector.extract_strided_slice %69 {offsets = [0, 1], sizes = [4, 383], strides = [1, 1]} : vector<4x384xf32> to vector<4x383xf32>
    %cst_71 = arith.constant 0.000000e+00 : f32
    %104 = vector.broadcast %cst_71 : f32 to vector<4x1xf32>
    %105 = tpu.concatenate %103, %104 in 1 : vector<4x383xf32>, vector<4x1xf32> -> vector<4x384xf32>
    %cst_72 = arith.constant dense<0.000000e+00> : vector<8x384xf32>
    %106 = tpu.matmul %102, %105, %cst_72 {dimension_numbers = #tpu.dot_dimension_numbers<[1], [0], [0], [1], [0, 0, 1, 1], [], []>} : vector<8x4xf32>, vector<4x384xf32>, vector<8x384xf32> -> vector<8x384xf32>
    %107 = arith.addf %100, %106 : vector<8x384xf32>
    %c6_73 = arith.constant 6 : index
    %c0_74 = arith.constant 0 : index
    %c0_75 = arith.constant 0 : index
    %108 = vector.load %arg5[%c6_73, %c0_74, %c0_75] : memref<9x8x4xf32, #tpu.memory_space<vmem>>, vector<1x8x4xf32>
    %109 = vector.shape_cast %108 : vector<1x8x4xf32> to vector<8x4xf32>
    %110 = vector.extract_strided_slice %69 {offsets = [0, 17], sizes = [4, 367], strides = [1, 1]} : vector<4x384xf32> to vector<4x367xf32>
    %cst_76 = arith.constant 0.000000e+00 : f32
    %111 = vector.broadcast %cst_76 : f32 to vector<4x17xf32>
    %112 = tpu.concatenate %110, %111 in 1 : vector<4x367xf32>, vector<4x17xf32> -> vector<4x384xf32>
    %cst_77 = arith.constant dense<0.000000e+00> : vector<8x384xf32>
    %113 = tpu.matmul %109, %112, %cst_77 {dimension_numbers = #tpu.dot_dimension_numbers<[1], [0], [0], [1], [0, 0, 1, 1], [], []>} : vector<8x4xf32>, vector<4x384xf32>, vector<8x384xf32> -> vector<8x384xf32>
    %114 = arith.addf %107, %113 : vector<8x384xf32>
    %c7_78 = arith.constant 7 : index
    %c0_79 = arith.constant 0 : index
    %c0_80 = arith.constant 0 : index
    %115 = vector.load %arg5[%c7_78, %c0_79, %c0_80] : memref<9x8x4xf32, #tpu.memory_space<vmem>>, vector<1x8x4xf32>
    %116 = vector.shape_cast %115 : vector<1x8x4xf32> to vector<8x4xf32>
    %117 = vector.extract_strided_slice %69 {offsets = [0, 18], sizes = [4, 366], strides = [1, 1]} : vector<4x384xf32> to vector<4x366xf32>
    %cst_81 = arith.constant 0.000000e+00 : f32
    %118 = vector.broadcast %cst_81 : f32 to vector<4x18xf32>
    %119 = tpu.concatenate %117, %118 in 1 : vector<4x366xf32>, vector<4x18xf32> -> vector<4x384xf32>
    %cst_82 = arith.constant dense<0.000000e+00> : vector<8x384xf32>
    %120 = tpu.matmul %116, %119, %cst_82 {dimension_numbers = #tpu.dot_dimension_numbers<[1], [0], [0], [1], [0, 0, 1, 1], [], []>} : vector<8x4xf32>, vector<4x384xf32>, vector<8x384xf32> -> vector<8x384xf32>
    %121 = arith.addf %114, %120 : vector<8x384xf32>
    %c8_83 = arith.constant 8 : index
    %c0_84 = arith.constant 0 : index
    %c0_85 = arith.constant 0 : index
    %122 = vector.load %arg5[%c8_83, %c0_84, %c0_85] : memref<9x8x4xf32, #tpu.memory_space<vmem>>, vector<1x8x4xf32>
    %123 = vector.shape_cast %122 : vector<1x8x4xf32> to vector<8x4xf32>
    %124 = vector.extract_strided_slice %69 {offsets = [0, 19], sizes = [4, 365], strides = [1, 1]} : vector<4x384xf32> to vector<4x365xf32>
    %cst_86 = arith.constant 0.000000e+00 : f32
    %125 = vector.broadcast %cst_86 : f32 to vector<4x19xf32>
    %126 = tpu.concatenate %124, %125 in 1 : vector<4x365xf32>, vector<4x19xf32> -> vector<4x384xf32>
    %cst_87 = arith.constant dense<0.000000e+00> : vector<8x384xf32>
    %127 = tpu.matmul %123, %126, %cst_87 {dimension_numbers = #tpu.dot_dimension_numbers<[1], [0], [0], [1], [0, 0, 1, 1], [], []>} : vector<8x4xf32>, vector<4x384xf32>, vector<8x384xf32> -> vector<8x384xf32>
    %128 = arith.addf %121, %127 : vector<8x384xf32>
    %cst_88 = arith.constant 0.000000e+00 : f32
    %129 = vector.broadcast %cst_88 : f32 to vector<8x384xf32>
    %130 = arith.maximumf %128, %129 : vector<8x384xf32>
    %131 = vector.broadcast %0 : vector<1x384xf32> to vector<8x384xf32>
    %132 = arith.mulf %130, %131 : vector<8x384xf32>
    %133 = arith.addf %2, %132 : vector<8x384xf32>
    %c0_89 = arith.constant 0 : index
    %c0_90 = arith.constant 0 : index
    %c0_91 = arith.constant 0 : index
    %134 = vector.load %arg6[%c0_89, %c0_90, %c0_91] : memref<9x4x8xf32, #tpu.memory_space<vmem>>, vector<1x4x8xf32>
    %135 = vector.shape_cast %134 : vector<1x4x8xf32> to vector<4x8xf32>
    %cst_92 = arith.constant 0.000000e+00 : f32
    %136 = vector.broadcast %cst_92 : f32 to vector<8x19xf32>
    %137 = vector.extract_strided_slice %133 {offsets = [0, 0], sizes = [8, 365], strides = [1, 1]} : vector<8x384xf32> to vector<8x365xf32>
    %138 = tpu.concatenate %136, %137 in 1 : vector<8x19xf32>, vector<8x365xf32> -> vector<8x384xf32>
    %cst_93 = arith.constant dense<0.000000e+00> : vector<4x384xf32>
    %139 = tpu.matmul %135, %138, %cst_93 {dimension_numbers = #tpu.dot_dimension_numbers<[1], [0], [0], [1], [0, 0, 1, 1], [], []>} : vector<4x8xf32>, vector<8x384xf32>, vector<4x384xf32> -> vector<4x384xf32>
    %c1_94 = arith.constant 1 : index
    %c0_95 = arith.constant 0 : index
    %c0_96 = arith.constant 0 : index
    %140 = vector.load %arg6[%c1_94, %c0_95, %c0_96] : memref<9x4x8xf32, #tpu.memory_space<vmem>>, vector<1x4x8xf32>
    %141 = vector.shape_cast %140 : vector<1x4x8xf32> to vector<4x8xf32>
    %cst_97 = arith.constant 0.000000e+00 : f32
    %142 = vector.broadcast %cst_97 : f32 to vector<8x18xf32>
    %143 = vector.extract_strided_slice %133 {offsets = [0, 0], sizes = [8, 366], strides = [1, 1]} : vector<8x384xf32> to vector<8x366xf32>
    %144 = tpu.concatenate %142, %143 in 1 : vector<8x18xf32>, vector<8x366xf32> -> vector<8x384xf32>
    %cst_98 = arith.constant dense<0.000000e+00> : vector<4x384xf32>
    %145 = tpu.matmul %141, %144, %cst_98 {dimension_numbers = #tpu.dot_dimension_numbers<[1], [0], [0], [1], [0, 0, 1, 1], [], []>} : vector<4x8xf32>, vector<8x384xf32>, vector<4x384xf32> -> vector<4x384xf32>
    %146 = arith.addf %139, %145 : vector<4x384xf32>
    %c2_99 = arith.constant 2 : index
    %c0_100 = arith.constant 0 : index
    %c0_101 = arith.constant 0 : index
    %147 = vector.load %arg6[%c2_99, %c0_100, %c0_101] : memref<9x4x8xf32, #tpu.memory_space<vmem>>, vector<1x4x8xf32>
    %148 = vector.shape_cast %147 : vector<1x4x8xf32> to vector<4x8xf32>
    %cst_102 = arith.constant 0.000000e+00 : f32
    %149 = vector.broadcast %cst_102 : f32 to vector<8x17xf32>
    %150 = vector.extract_strided_slice %133 {offsets = [0, 0], sizes = [8, 367], strides = [1, 1]} : vector<8x384xf32> to vector<8x367xf32>
    %151 = tpu.concatenate %149, %150 in 1 : vector<8x17xf32>, vector<8x367xf32> -> vector<8x384xf32>
    %cst_103 = arith.constant dense<0.000000e+00> : vector<4x384xf32>
    %152 = tpu.matmul %148, %151, %cst_103 {dimension_numbers = #tpu.dot_dimension_numbers<[1], [0], [0], [1], [0, 0, 1, 1], [], []>} : vector<4x8xf32>, vector<8x384xf32>, vector<4x384xf32> -> vector<4x384xf32>
    %153 = arith.addf %146, %152 : vector<4x384xf32>
    %c3_104 = arith.constant 3 : index
    %c0_105 = arith.constant 0 : index
    %c0_106 = arith.constant 0 : index
    %154 = vector.load %arg6[%c3_104, %c0_105, %c0_106] : memref<9x4x8xf32, #tpu.memory_space<vmem>>, vector<1x4x8xf32>
    %155 = vector.shape_cast %154 : vector<1x4x8xf32> to vector<4x8xf32>
    %cst_107 = arith.constant 0.000000e+00 : f32
    %156 = vector.broadcast %cst_107 : f32 to vector<8x1xf32>
    %157 = vector.extract_strided_slice %133 {offsets = [0, 0], sizes = [8, 383], strides = [1, 1]} : vector<8x384xf32> to vector<8x383xf32>
    %158 = tpu.concatenate %156, %157 in 1 : vector<8x1xf32>, vector<8x383xf32> -> vector<8x384xf32>
    %cst_108 = arith.constant dense<0.000000e+00> : vector<4x384xf32>
    %159 = tpu.matmul %155, %158, %cst_108 {dimension_numbers = #tpu.dot_dimension_numbers<[1], [0], [0], [1], [0, 0, 1, 1], [], []>} : vector<4x8xf32>, vector<8x384xf32>, vector<4x384xf32> -> vector<4x384xf32>
    %160 = arith.addf %153, %159 : vector<4x384xf32>
    %c4_109 = arith.constant 4 : index
    %c0_110 = arith.constant 0 : index
    %c0_111 = arith.constant 0 : index
    %161 = vector.load %arg6[%c4_109, %c0_110, %c0_111] : memref<9x4x8xf32, #tpu.memory_space<vmem>>, vector<1x4x8xf32>
    %162 = vector.shape_cast %161 : vector<1x4x8xf32> to vector<4x8xf32>
    %cst_112 = arith.constant dense<0.000000e+00> : vector<4x384xf32>
    %163 = tpu.matmul %162, %133, %cst_112 {dimension_numbers = #tpu.dot_dimension_numbers<[1], [0], [0], [1], [0, 0, 1, 1], [], []>} : vector<4x8xf32>, vector<8x384xf32>, vector<4x384xf32> -> vector<4x384xf32>
    %164 = arith.addf %160, %163 : vector<4x384xf32>
    %c5_113 = arith.constant 5 : index
    %c0_114 = arith.constant 0 : index
    %c0_115 = arith.constant 0 : index
    %165 = vector.load %arg6[%c5_113, %c0_114, %c0_115] : memref<9x4x8xf32, #tpu.memory_space<vmem>>, vector<1x4x8xf32>
    %166 = vector.shape_cast %165 : vector<1x4x8xf32> to vector<4x8xf32>
    %167 = vector.extract_strided_slice %133 {offsets = [0, 1], sizes = [8, 383], strides = [1, 1]} : vector<8x384xf32> to vector<8x383xf32>
    %cst_116 = arith.constant 0.000000e+00 : f32
    %168 = vector.broadcast %cst_116 : f32 to vector<8x1xf32>
    %169 = tpu.concatenate %167, %168 in 1 : vector<8x383xf32>, vector<8x1xf32> -> vector<8x384xf32>
    %cst_117 = arith.constant dense<0.000000e+00> : vector<4x384xf32>
    %170 = tpu.matmul %166, %169, %cst_117 {dimension_numbers = #tpu.dot_dimension_numbers<[1], [0], [0], [1], [0, 0, 1, 1], [], []>} : vector<4x8xf32>, vector<8x384xf32>, vector<4x384xf32> -> vector<4x384xf32>
    %171 = arith.addf %164, %170 : vector<4x384xf32>
    %c6_118 = arith.constant 6 : index
    %c0_119 = arith.constant 0 : index
    %c0_120 = arith.constant 0 : index
    %172 = vector.load %arg6[%c6_118, %c0_119, %c0_120] : memref<9x4x8xf32, #tpu.memory_space<vmem>>, vector<1x4x8xf32>
    %173 = vector.shape_cast %172 : vector<1x4x8xf32> to vector<4x8xf32>
    %174 = vector.extract_strided_slice %133 {offsets = [0, 17], sizes = [8, 367], strides = [1, 1]} : vector<8x384xf32> to vector<8x367xf32>
    %cst_121 = arith.constant 0.000000e+00 : f32
    %175 = vector.broadcast %cst_121 : f32 to vector<8x17xf32>
    %176 = tpu.concatenate %174, %175 in 1 : vector<8x367xf32>, vector<8x17xf32> -> vector<8x384xf32>
    %cst_122 = arith.constant dense<0.000000e+00> : vector<4x384xf32>
    %177 = tpu.matmul %173, %176, %cst_122 {dimension_numbers = #tpu.dot_dimension_numbers<[1], [0], [0], [1], [0, 0, 1, 1], [], []>} : vector<4x8xf32>, vector<8x384xf32>, vector<4x384xf32> -> vector<4x384xf32>
    %178 = arith.addf %171, %177 : vector<4x384xf32>
    %c7_123 = arith.constant 7 : index
    %c0_124 = arith.constant 0 : index
    %c0_125 = arith.constant 0 : index
    %179 = vector.load %arg6[%c7_123, %c0_124, %c0_125] : memref<9x4x8xf32, #tpu.memory_space<vmem>>, vector<1x4x8xf32>
    %180 = vector.shape_cast %179 : vector<1x4x8xf32> to vector<4x8xf32>
    %181 = vector.extract_strided_slice %133 {offsets = [0, 18], sizes = [8, 366], strides = [1, 1]} : vector<8x384xf32> to vector<8x366xf32>
    %cst_126 = arith.constant 0.000000e+00 : f32
    %182 = vector.broadcast %cst_126 : f32 to vector<8x18xf32>
    %183 = tpu.concatenate %181, %182 in 1 : vector<8x366xf32>, vector<8x18xf32> -> vector<8x384xf32>
    %cst_127 = arith.constant dense<0.000000e+00> : vector<4x384xf32>
    %184 = tpu.matmul %180, %183, %cst_127 {dimension_numbers = #tpu.dot_dimension_numbers<[1], [0], [0], [1], [0, 0, 1, 1], [], []>} : vector<4x8xf32>, vector<8x384xf32>, vector<4x384xf32> -> vector<4x384xf32>
    %185 = arith.addf %178, %184 : vector<4x384xf32>
    %c8_128 = arith.constant 8 : index
    %c0_129 = arith.constant 0 : index
    %c0_130 = arith.constant 0 : index
    %186 = vector.load %arg6[%c8_128, %c0_129, %c0_130] : memref<9x4x8xf32, #tpu.memory_space<vmem>>, vector<1x4x8xf32>
    %187 = vector.shape_cast %186 : vector<1x4x8xf32> to vector<4x8xf32>
    %188 = vector.extract_strided_slice %133 {offsets = [0, 19], sizes = [8, 365], strides = [1, 1]} : vector<8x384xf32> to vector<8x365xf32>
    %cst_131 = arith.constant 0.000000e+00 : f32
    %189 = vector.broadcast %cst_131 : f32 to vector<8x19xf32>
    %190 = tpu.concatenate %188, %189 in 1 : vector<8x365xf32>, vector<8x19xf32> -> vector<8x384xf32>
    %cst_132 = arith.constant dense<0.000000e+00> : vector<4x384xf32>
    %191 = tpu.matmul %187, %190, %cst_132 {dimension_numbers = #tpu.dot_dimension_numbers<[1], [0], [0], [1], [0, 0, 1, 1], [], []>} : vector<4x8xf32>, vector<8x384xf32>, vector<4x384xf32> -> vector<4x384xf32>
    %192 = arith.addf %185, %191 : vector<4x384xf32>
    %cst_133 = arith.constant 0.000000e+00 : f32
    %193 = vector.broadcast %cst_133 : f32 to vector<4x384xf32>
    %194 = arith.maximumf %192, %193 : vector<4x384xf32>
    %c0_134 = arith.constant 0 : index
    %c0_135 = arith.constant 0 : index
    %195 = vector.load %arg7[%c0_134, %c0_135] : memref<1x4xf32, #tpu.memory_space<vmem>>, vector<1x4xf32>
    %cst_136 = arith.constant dense<0.000000e+00> : vector<1x384xf32>
    %196 = tpu.matmul %195, %194, %cst_136 {dimension_numbers = #tpu.dot_dimension_numbers<[1], [0], [0], [1], [0, 0, 1, 1], [], []>} : vector<1x4xf32>, vector<4x384xf32>, vector<1x384xf32> -> vector<1x384xf32>
    %cst_137 = arith.constant 0.000000e+00 : f32
    %197 = vector.broadcast %cst_137 : f32 to vector<1x384xf32>
    %198 = arith.maximumf %196, %197 : vector<1x384xf32>
    %199 = arith.mulf %198, %0 : vector<1x384xf32>
    %cst_138 = arith.constant 0.000000e+00 : f32
    %200 = vector.broadcast %cst_138 : f32 to vector<1x384xf32>
    %c0_139 = arith.constant 0 : index
    %c0_140 = arith.constant 0 : index
    %c0_141 = arith.constant 0 : index
    %201 = vector.load %arg8[%c0_139, %c0_140, %c0_141] : memref<9x1x1xf32, #tpu.memory_space<vmem>>, vector<1x1x1xf32>
    %202 = vector.shape_cast %201 : vector<1x1x1xf32> to vector<1x1xf32>
    %cst_142 = arith.constant 0.000000e+00 : f32
    %203 = vector.broadcast %cst_142 : f32 to vector<1x19xf32>
    %204 = vector.extract_strided_slice %199 {offsets = [0, 0], sizes = [1, 365], strides = [1, 1]} : vector<1x384xf32> to vector<1x365xf32>
    %205 = tpu.concatenate %203, %204 in 1 : vector<1x19xf32>, vector<1x365xf32> -> vector<1x384xf32>
    %206 = vector.broadcast %202 : vector<1x1xf32> to vector<1x384xf32>
    %207 = arith.mulf %206, %205 : vector<1x384xf32>
    %208 = arith.addf %200, %207 : vector<1x384xf32>
    %c1_143 = arith.constant 1 : index
    %c0_144 = arith.constant 0 : index
    %c0_145 = arith.constant 0 : index
    %209 = vector.load %arg8[%c1_143, %c0_144, %c0_145] : memref<9x1x1xf32, #tpu.memory_space<vmem>>, vector<1x1x1xf32>
    %210 = vector.shape_cast %209 : vector<1x1x1xf32> to vector<1x1xf32>
    %cst_146 = arith.constant 0.000000e+00 : f32
    %211 = vector.broadcast %cst_146 : f32 to vector<1x18xf32>
    %212 = vector.extract_strided_slice %199 {offsets = [0, 0], sizes = [1, 366], strides = [1, 1]} : vector<1x384xf32> to vector<1x366xf32>
    %213 = tpu.concatenate %211, %212 in 1 : vector<1x18xf32>, vector<1x366xf32> -> vector<1x384xf32>
    %214 = vector.broadcast %210 : vector<1x1xf32> to vector<1x384xf32>
    %215 = arith.mulf %214, %213 : vector<1x384xf32>
    %216 = arith.addf %208, %215 : vector<1x384xf32>
    %c2_147 = arith.constant 2 : index
    %c0_148 = arith.constant 0 : index
    %c0_149 = arith.constant 0 : index
    %217 = vector.load %arg8[%c2_147, %c0_148, %c0_149] : memref<9x1x1xf32, #tpu.memory_space<vmem>>, vector<1x1x1xf32>
    %218 = vector.shape_cast %217 : vector<1x1x1xf32> to vector<1x1xf32>
    %cst_150 = arith.constant 0.000000e+00 : f32
    %219 = vector.broadcast %cst_150 : f32 to vector<1x17xf32>
    %220 = vector.extract_strided_slice %199 {offsets = [0, 0], sizes = [1, 367], strides = [1, 1]} : vector<1x384xf32> to vector<1x367xf32>
    %221 = tpu.concatenate %219, %220 in 1 : vector<1x17xf32>, vector<1x367xf32> -> vector<1x384xf32>
    %222 = vector.broadcast %218 : vector<1x1xf32> to vector<1x384xf32>
    %223 = arith.mulf %222, %221 : vector<1x384xf32>
    %224 = arith.addf %216, %223 : vector<1x384xf32>
    %c3_151 = arith.constant 3 : index
    %c0_152 = arith.constant 0 : index
    %c0_153 = arith.constant 0 : index
    %225 = vector.load %arg8[%c3_151, %c0_152, %c0_153] : memref<9x1x1xf32, #tpu.memory_space<vmem>>, vector<1x1x1xf32>
    %226 = vector.shape_cast %225 : vector<1x1x1xf32> to vector<1x1xf32>
    %cst_154 = arith.constant 0.000000e+00 : f32
    %227 = vector.broadcast %cst_154 : f32 to vector<1x1xf32>
    %228 = vector.extract_strided_slice %199 {offsets = [0, 0], sizes = [1, 383], strides = [1, 1]} : vector<1x384xf32> to vector<1x383xf32>
    %229 = tpu.concatenate %227, %228 in 1 : vector<1x1xf32>, vector<1x383xf32> -> vector<1x384xf32>
    %230 = vector.broadcast %226 : vector<1x1xf32> to vector<1x384xf32>
    %231 = arith.mulf %230, %229 : vector<1x384xf32>
    %232 = arith.addf %224, %231 : vector<1x384xf32>
    %c4_155 = arith.constant 4 : index
    %c0_156 = arith.constant 0 : index
    %c0_157 = arith.constant 0 : index
    %233 = vector.load %arg8[%c4_155, %c0_156, %c0_157] : memref<9x1x1xf32, #tpu.memory_space<vmem>>, vector<1x1x1xf32>
    %234 = vector.shape_cast %233 : vector<1x1x1xf32> to vector<1x1xf32>
    %235 = vector.broadcast %234 : vector<1x1xf32> to vector<1x384xf32>
    %236 = arith.mulf %235, %199 : vector<1x384xf32>
    %237 = arith.addf %232, %236 : vector<1x384xf32>
    %c5_158 = arith.constant 5 : index
    %c0_159 = arith.constant 0 : index
    %c0_160 = arith.constant 0 : index
    %238 = vector.load %arg8[%c5_158, %c0_159, %c0_160] : memref<9x1x1xf32, #tpu.memory_space<vmem>>, vector<1x1x1xf32>
    %239 = vector.shape_cast %238 : vector<1x1x1xf32> to vector<1x1xf32>
    %240 = vector.extract_strided_slice %199 {offsets = [0, 1], sizes = [1, 383], strides = [1, 1]} : vector<1x384xf32> to vector<1x383xf32>
    %cst_161 = arith.constant 0.000000e+00 : f32
    %241 = vector.broadcast %cst_161 : f32 to vector<1x1xf32>
    %242 = tpu.concatenate %240, %241 in 1 : vector<1x383xf32>, vector<1x1xf32> -> vector<1x384xf32>
    %243 = vector.broadcast %239 : vector<1x1xf32> to vector<1x384xf32>
    %244 = arith.mulf %243, %242 : vector<1x384xf32>
    %245 = arith.addf %237, %244 : vector<1x384xf32>
    %c6_162 = arith.constant 6 : index
    %c0_163 = arith.constant 0 : index
    %c0_164 = arith.constant 0 : index
    %246 = vector.load %arg8[%c6_162, %c0_163, %c0_164] : memref<9x1x1xf32, #tpu.memory_space<vmem>>, vector<1x1x1xf32>
    %247 = vector.shape_cast %246 : vector<1x1x1xf32> to vector<1x1xf32>
    %248 = vector.extract_strided_slice %199 {offsets = [0, 17], sizes = [1, 367], strides = [1, 1]} : vector<1x384xf32> to vector<1x367xf32>
    %cst_165 = arith.constant 0.000000e+00 : f32
    %249 = vector.broadcast %cst_165 : f32 to vector<1x17xf32>
    %250 = tpu.concatenate %248, %249 in 1 : vector<1x367xf32>, vector<1x17xf32> -> vector<1x384xf32>
    %251 = vector.broadcast %247 : vector<1x1xf32> to vector<1x384xf32>
    %252 = arith.mulf %251, %250 : vector<1x384xf32>
    %253 = arith.addf %245, %252 : vector<1x384xf32>
    %c7_166 = arith.constant 7 : index
    %c0_167 = arith.constant 0 : index
    %c0_168 = arith.constant 0 : index
    %254 = vector.load %arg8[%c7_166, %c0_167, %c0_168] : memref<9x1x1xf32, #tpu.memory_space<vmem>>, vector<1x1x1xf32>
    %255 = vector.shape_cast %254 : vector<1x1x1xf32> to vector<1x1xf32>
    %256 = vector.extract_strided_slice %199 {offsets = [0, 18], sizes = [1, 366], strides = [1, 1]} : vector<1x384xf32> to vector<1x366xf32>
    %cst_169 = arith.constant 0.000000e+00 : f32
    %257 = vector.broadcast %cst_169 : f32 to vector<1x18xf32>
    %258 = tpu.concatenate %256, %257 in 1 : vector<1x366xf32>, vector<1x18xf32> -> vector<1x384xf32>
    %259 = vector.broadcast %255 : vector<1x1xf32> to vector<1x384xf32>
    %260 = arith.mulf %259, %258 : vector<1x384xf32>
    %261 = arith.addf %253, %260 : vector<1x384xf32>
    %c8_170 = arith.constant 8 : index
    %c0_171 = arith.constant 0 : index
    %c0_172 = arith.constant 0 : index
    %262 = vector.load %arg8[%c8_170, %c0_171, %c0_172] : memref<9x1x1xf32, #tpu.memory_space<vmem>>, vector<1x1x1xf32>
    %263 = vector.shape_cast %262 : vector<1x1x1xf32> to vector<1x1xf32>
    %264 = vector.extract_strided_slice %199 {offsets = [0, 19], sizes = [1, 365], strides = [1, 1]} : vector<1x384xf32> to vector<1x365xf32>
    %cst_173 = arith.constant 0.000000e+00 : f32
    %265 = vector.broadcast %cst_173 : f32 to vector<1x19xf32>
    %266 = tpu.concatenate %264, %265 in 1 : vector<1x365xf32>, vector<1x19xf32> -> vector<1x384xf32>
    %267 = vector.broadcast %263 : vector<1x1xf32> to vector<1x384xf32>
    %268 = arith.mulf %267, %266 : vector<1x384xf32>
    %269 = arith.addf %261, %268 : vector<1x384xf32>
    %cst_174 = arith.constant dense<0.000000e+00> : vector<384xf32>
    %270 = vector.multi_reduction <add>, %269, %cst_174 [0] : vector<1x384xf32> to vector<384xf32>
    %271 = vector.shape_cast %270 : vector<384xf32> to vector<1x384xf32>
    %c0_175 = arith.constant 0 : index
    %c0_176 = arith.constant 0 : index
    %c0_177 = arith.constant 0 : index
    %272 = vector.load %arg9[%c0_175, %c0_176, %c0_177] : memref<1x1x384xf32, #tpu.memory_space<vmem>>, vector<1x1x384xf32>
    %273 = vector.shape_cast %272 : vector<1x1x384xf32> to vector<1x384xf32>
    %274 = vector.shape_cast %271 : vector<1x384xf32> to vector<1x1x384xf32>
    tpu.vector_store %arg9[%c0_175, %c0_176, %c0_177], %274 {strides = array<i32>} : memref<1x1x384xf32, #tpu.memory_space<vmem>>, vector<1x1x384xf32>,
    return
  }
  func.func @transform_0(%arg0: i32) -> (i32, i32, i32) {
    %c0_i32 = arith.constant 0 : i32
    %c0_i32_0 = arith.constant 0 : i32
    %c0_i32_1 = arith.constant 0 : i32
    return %arg0, %c0_i32, %c0_i32_0 : i32, i32, i32
  }
  func.func @transform_1(%arg0: i32) -> (i32, i32) {
    %c0_i32 = arith.constant 0 : i32
    %c0_i32_0 = arith.constant 0 : i32
    %c0_i32_1 = arith.constant 0 : i32
    return %c0_i32, %c0_i32_0 : i32, i32
  }
  func.func @transform_2(%arg0: i32) -> (i32, i32, i32) {
    %c0_i32 = arith.constant 0 : i32
    %c0_i32_0 = arith.constant 0 : i32
    %c0_i32_1 = arith.constant 0 : i32
    %c0_i32_2 = arith.constant 0 : i32
    return %c0_i32, %c0_i32_0, %c0_i32_1 : i32, i32, i32
  }
  func.func @transform_3(%arg0: i32) -> (i32, i32) {
    %c0_i32 = arith.constant 0 : i32
    %c0_i32_0 = arith.constant 0 : i32
    %c0_i32_1 = arith.constant 0 : i32
    return %c0_i32, %c0_i32_0 : i32, i32
  }
  func.func @transform_4(%arg0: i32) -> (i32, i32, i32) {
    %c0_i32 = arith.constant 0 : i32
    %c0_i32_0 = arith.constant 0 : i32
    %c0_i32_1 = arith.constant 0 : i32
    %c0_i32_2 = arith.constant 0 : i32
    return %c0_i32, %c0_i32_0, %c0_i32_1 : i32, i32, i32
  }
  func.func @transform_5(%arg0: i32) -> (i32, i32, i32) {
    %c0_i32 = arith.constant 0 : i32
    %c0_i32_0 = arith.constant 0 : i32
    %c0_i32_1 = arith.constant 0 : i32
    %c0_i32_2 = arith.constant 0 : i32
    return %c0_i32, %c0_i32_0, %c0_i32_1 : i32, i32, i32
  }
  func.func @transform_6(%arg0: i32) -> (i32, i32) {
    %c0_i32 = arith.constant 0 : i32
    %c0_i32_0 = arith.constant 0 : i32
    %c0_i32_1 = arith.constant 0 : i32
    return %c0_i32, %c0_i32_0 : i32, i32
  }
  func.func @transform_7(%arg0: i32) -> (i32, i32, i32) {
    %c0_i32 = arith.constant 0 : i32
    %c0_i32_0 = arith.constant 0 : i32
    %c0_i32_1 = arith.constant 0 : i32
    %c0_i32_2 = arith.constant 0 : i32
    return %c0_i32, %c0_i32_0, %c0_i32_1 : i32, i32, i32
  }
  func.func @transform_8(%arg0: i32) -> (i32, i32, i32) {
    %c0_i32 = arith.constant 0 : i32
    %c0_i32_0 = arith.constant 0 : i32
    %c0_i32_1 = arith.constant 0 : i32
    return %arg0, %c0_i32, %c0_i32_0 : i32, i32, i32
  }
}

</mosaic_0001>

<llo_original>
// kernel: tpu_custom_call.1
$region0: #{tpu_custom_call.1}
  #allocation0 [shape = 'u32[]', space=smem, size = 0x4, offset = 0x4, fixed_abs, tag = 'smem constant byte address 0x4 - core index']
  #allocation1 [shape = 'u32[72,128]{1,0:T(1,128)}', space=vmem, size = 0x9000, scoped, tag = 'internal scratch']
  %s0 = inlined_call_operand.vmem [shape: f32[2,8,384], index: 0, kind: input, shape index: {}]
  %s1 = inlined_call_operand.vmem [shape: f32[1,384], index: 1, kind: input, shape index: {}]
  %s2 = inlined_call_operand.vmem [shape: f32[9,8,8], index: 2, kind: input, shape index: {}]
  %s3 = inlined_call_operand.vmem [shape: f32[4,8], index: 3, kind: input, shape index: {}]
  %s4 = inlined_call_operand.vmem [shape: f32[9,8,4], index: 4, kind: input, shape index: {}]
  %s5 = inlined_call_operand.vmem [shape: f32[9,4,8], index: 5, kind: input, shape index: {}]
  %s6 = inlined_call_operand.vmem [shape: f32[1,4], index: 6, kind: input, shape index: {}]
  %s7 = inlined_call_operand.vmem [shape: f32[9,1,1], index: 7, kind: input, shape index: {}]
  %s8 = inlined_call_operand.hbm [shape: f32[2,1,384], index: 8, kind: output, shape index: {}]
  %s9 = sld [smem:[#allocation0]]
  $region65: #{tpu_custom_call.1} parent=0
    _
  %s11 = ssub.s32 1, %s9
  %s12 = scalar_select 0, %s11, %s9
  $region1: #{tpu_custom_call.1} parent=0
    #allocation2 [shape = 'u8[3072]{0}', space=vmem, size = 0xc00, scoped, tag = 'output window, operand 0']
    #allocation3 [shape = 's32[2]{0}', space=sflag, size = 0x8, scoped, tag = 'scoped memory for tpu_custom_call.1']
    %13 = vsyncpa [#allocation3], 0
    %s14 = scalar_lea.sflag [#allocation3], 1
    %15 = vsyncpa %s14, 0
    loop: start=0, step=1, limit=4
    $region2: #{tpu_custom_call.1} parent=1 // loop_pre_header
      _
    $region3: #{tpu_custom_call.1} parent=1 // loop_header
      %s17 = sphi 0, %s21
      %p18 = scmp.ge.s32.totalorder %s17, 4
      %s27 = sphi 0, %s29
      %s30 = sphi 0, %s27
      %s31 = sphi 0, %s30
      %s47 = sphi 0, %s31
      %s51 = sphi 0, %s51
      %s53 = sphi 0, %s51
      %s54 = sphi 0, %s53
      %s68 = sphi 0, %s54
      %s72 = sphi 0, %s72
      %s74 = sphi 0, %s72
      %s75 = sphi 0, %s74
      %s89 = sphi 0, %s75
      %s93 = sphi 0, %s93
      %s95 = sphi 0, %s93
      %s96 = sphi 0, %s95
      %s110 = sphi 0, %s96
      %s114 = sphi 0, %s114
      %s116 = sphi 0, %s114
      %s117 = sphi 0, %s116
      %s131 = sphi 0, %s117
      %s135 = sphi 0, %s135
      %s137 = sphi 0, %s135
      %s138 = sphi 0, %s137
      %s152 = sphi 0, %s138
      %s156 = sphi 0, %s156
      %s158 = sphi 0, %s156
      %s159 = sphi 0, %s158
      %s173 = sphi 0, %s159
      %s177 = sphi 0, %s177
      %s179 = sphi 0, %s177
      %s180 = sphi 0, %s179
      %s194 = sphi 0, %s180
      %s200 = sphi 0, %s202
      %s203 = sphi 0, %s200
      %s204 = sphi 0, %s203
      %s220 = sphi 0, %s204
    $region4: #{tpu_custom_call.1} parent=1 // loop_header_branch
      %20 = sbr.rel (%p18) target = $region8
    $region5: #{tpu_custom_call.1} parent=1 // loop_body
      %s22 = ssub.s32 %s17, 1
      %s23 = ssub.s32 %s17, 2
      %s24 = sadd.s32 %s17, 1
      %s25 = ssub.s32 %s17, %s24
      %p26 = scmp.eq.s32.totalorder %s25, 0
      %s28 = sadd.s32 %s27, 1
      %s29 = scalar_select %p26, %s27, %s28
      %p32 = pneg %p26
      %p33 = scmp.eq.s32.totalorder %s17, 1
      %p34 = por %p32, %p33
      %p35 = scmp.ne.s32.totalorder %s27, %s30
      %p36 = scmp.eq.s32.totalorder %s17, 0
      %p37 = por %p35, %p36
      %p38 = scmp.ne.s32.totalorder %s27, %s30
      %p39 = scmp.eq.s32.totalorder %s22, 1
      %p40 = por %p38, %p39
      %p41 = scmp.ne.s32.totalorder %s30, %s31
      %p42 = scmp.eq.s32.totalorder %s22, 0
      %p43 = por %p41, %p42
      %p44 = scmp.ne.s32.totalorder %s30, %s31
      %p45 = scmp.eq.s32.totalorder %s23, 1
      %p46 = por %p44, %p45
      %p48 = scmp.ne.s32.totalorder %s31, %s47
      %p49 = scmp.eq.s32.totalorder %s23, 0
      %p50 = por %p48, %p49
      %s52 = sadd.s32 %s51, 1
      %p55 = scmp.eq.s32.totalorder %s17, 1
      %p56 = scmp.ne.s32.totalorder %s51, %s53
      %p57 = scmp.eq.s32.totalorder %s17, 0
      %p58 = por %p56, %p57
      %p59 = scmp.ne.s32.totalorder %s51, %s53
      %p60 = scmp.eq.s32.totalorder %s22, 1
      %p61 = por %p59, %p60
      %p62 = scmp.ne.s32.totalorder %s53, %s54
      %p63 = scmp.eq.s32.totalorder %s22, 0
      %p64 = por %p62, %p63
      %p65 = scmp.ne.s32.totalorder %s53, %s54
      %p66 = scmp.eq.s32.totalorder %s23, 1
      %p67 = por %p65, %p66
      %p69 = scmp.ne.s32.totalorder %s54, %s68
      %p70 = scmp.eq.s32.totalorder %s23, 0
      %p71 = por %p69, %p70
      %s73 = sadd.s32 %s72, 1
      %p76 = scmp.eq.s32.totalorder %s17, 1
      %p77 = scmp.ne.s32.totalorder %s72, %s74
      %p78 = scmp.eq.s32.totalorder %s17, 0
      %p79 = por %p77, %p78
      %p80 = scmp.ne.s32.totalorder %s72, %s74
      %p81 = scmp.eq.s32.totalorder %s22, 1
      %p82 = por %p80, %p81
      %p83 = scmp.ne.s32.totalorder %s74, %s75
      %p84 = scmp.eq.s32.totalorder %s22, 0
      %p85 = por %p83, %p84
      %p86 = scmp.ne.s32.totalorder %s74, %s75
      %p87 = scmp.eq.s32.totalorder %s23, 1
      %p88 = por %p86, %p87
      %p90 = scmp.ne.s32.totalorder %s75, %s89
      %p91 = scmp.eq.s32.totalorder %s23, 0
      %p92 = por %p90, %p91
      %s94 = sadd.s32 %s93, 1
      %p97 = scmp.eq.s32.totalorder %s17, 1
      %p98 = scmp.ne.s32.totalorder %s93, %s95
      %p99 = scmp.eq.s32.totalorder %s17, 0
      %p100 = por %p98, %p99
      %p101 = scmp.ne.s32.totalorder %s93, %s95
      %p102 = scmp.eq.s32.totalorder %s22, 1
      %p103 = por %p101, %p102
      %p104 = scmp.ne.s32.totalorder %s95, %s96
      %p105 = scmp.eq.s32.totalorder %s22, 0
      %p106 = por %p104, %p105
      %p107 = scmp.ne.s32.totalorder %s95, %s96
      %p108 = scmp.eq.s32.totalorder %s23, 1
      %p109 = por %p107, %p108
      %p111 = scmp.ne.s32.totalorder %s96, %s110
      %p112 = scmp.eq.s32.totalorder %s23, 0
      %p113 = por %p111, %p112
      %s115 = sadd.s32 %s114, 1
      %p118 = scmp.eq.s32.totalorder %s17, 1
      %p119 = scmp.ne.s32.totalorder %s114, %s116
      %p120 = scmp.eq.s32.totalorder %s17, 0
      %p121 = por %p119, %p120
      %p122 = scmp.ne.s32.totalorder %s114, %s116
      %p123 = scmp.eq.s32.totalorder %s22, 1
      %p124 = por %p122, %p123
      %p125 = scmp.ne.s32.totalorder %s116, %s117
      %p126 = scmp.eq.s32.totalorder %s22, 0
      %p127 = por %p125, %p126
      %p128 = scmp.ne.s32.totalorder %s116, %s117
      %p129 = scmp.eq.s32.totalorder %s23, 1
      %p130 = por %p128, %p129
      %p132 = scmp.ne.s32.totalorder %s117, %s131
      %p133 = scmp.eq.s32.totalorder %s23, 0
      %p134 = por %p132, %p133
      %s136 = sadd.s32 %s135, 1
      %p139 = scmp.eq.s32.totalorder %s17, 1
      %p140 = scmp.ne.s32.totalorder %s135, %s137
      %p141 = scmp.eq.s32.totalorder %s17, 0
      %p142 = por %p140, %p141
      %p143 = scmp.ne.s32.totalorder %s135, %s137
      %p144 = scmp.eq.s32.totalorder %s22, 1
      %p145 = por %p143, %p144
      %p146 = scmp.ne.s32.totalorder %s137, %s138
      %p147 = scmp.eq.s32.totalorder %s22, 0
      %p148 = por %p146, %p147
      %p149 = scmp.ne.s32.totalorder %s137, %s138
      %p150 = scmp.eq.s32.totalorder %s23, 1
      %p151 = por %p149, %p150
      %p153 = scmp.ne.s32.totalorder %s138, %s152
      %p154 = scmp.eq.s32.totalorder %s23, 0
      %p155 = por %p153, %p154
      %s157 = sadd.s32 %s156, 1
      %p160 = scmp.eq.s32.totalorder %s17, 1
      %p161 = scmp.ne.s32.totalorder %s156, %s158
      %p162 = scmp.eq.s32.totalorder %s17, 0
      %p163 = por %p161, %p162
      %p164 = scmp.ne.s32.totalorder %s156, %s158
      %p165 = scmp.eq.s32.totalorder %s22, 1
      %p166 = por %p164, %p165
      %p167 = scmp.ne.s32.totalorder %s158, %s159
      %p168 = scmp.eq.s32.totalorder %s22, 0
      %p169 = por %p167, %p168
      %p170 = scmp.ne.s32.totalorder %s158, %s159
      %p171 = scmp.eq.s32.totalorder %s23, 1
      %p172 = por %p170, %p171
      %p174 = scmp.ne.s32.totalorder %s159, %s173
      %p175 = scmp.eq.s32.totalorder %s23, 0
      %p176 = por %p174, %p175
      %s178 = sadd.s32 %s177, 1
      %p181 = scmp.eq.s32.totalorder %s17, 1
      %p182 = scmp.ne.s32.totalorder %s177, %s179
      %p183 = scmp.eq.s32.totalorder %s17, 0
      %p184 = por %p182, %p183
      %p185 = scmp.ne.s32.totalorder %s177, %s179
      %p186 = scmp.eq.s32.totalorder %s22, 1
      %p187 = por %p185, %p186
      %p188 = scmp.ne.s32.totalorder %s179, %s180
      %p189 = scmp.eq.s32.totalorder %s22, 0
      %p190 = por %p188, %p189
      %p191 = scmp.ne.s32.totalorder %s179, %s180
      %p192 = scmp.eq.s32.totalorder %s23, 1
      %p193 = por %p191, %p192
      %p195 = scmp.ne.s32.totalorder %s180, %s194
      %p196 = scmp.eq.s32.totalorder %s23, 0
      %p197 = por %p195, %p196
      %s198 = ssub.s32 %s17, %s24
      %p199 = scmp.eq.s32.totalorder %s198, 0
      %s201 = sadd.s32 %s200, 1
      %s202 = scalar_select %p199, %s200, %s201
      %p205 = pneg %p199
      %p206 = scmp.eq.s32.totalorder %s17, 1
      %p207 = por %p205, %p206
      %p208 = scmp.ne.s32.totalorder %s200, %s203
      %p209 = scmp.eq.s32.totalorder %s17, 0
      %p210 = por %p208, %p209
      %p211 = scmp.ne.s32.totalorder %s200, %s203
      %p212 = scmp.eq.s32.totalorder %s22, 1
      %p213 = por %p211, %p212
      %p214 = scmp.ne.s32.totalorder %s203, %s204
      %p215 = scmp.eq.s32.totalorder %s22, 0
      %p216 = por %p214, %p215
      %p217 = scmp.ne.s32.totalorder %s203, %s204
      %p218 = scmp.eq.s32.totalorder %s23, 1
      %p219 = por %p217, %p218
      %p221 = scmp.ne.s32.totalorder %s204, %s220
      %p222 = scmp.eq.s32.totalorder %s23, 0
      %p223 = por %p221, %p222
      %p224 = scmp.le.s32.totalorder 1, %s17
      %p225 = scmp.lt.s32.totalorder %s17, 3
      %p226 = pnand %p224, %p225
      %p227 = pneg %p226
      // Predicated region
      $region9: #{tpu_custom_call.1} parent=5 // pred_check
        _
      $region10: #{tpu_custom_call.1} parent=5 // pred_check_branch
        %229 = sbr.rel (%p226) target = $region12
      $region11: #{tpu_custom_call.1} parent=5 // pred_region
        %s230 = ssub.s32 %s17, 1
        // Predicated region
        $region13: #{tpu_custom_call.1} parent=11 // pred_check
          %p231 = pneg %p64
        $region14: #{tpu_custom_call.1} parent=11 // pred_check_branch
          %233 = sbr.rel (%p231) target = $region16
        $region15: #{tpu_custom_call.1} parent=11 // pred_region
          _
        $region16: #{tpu_custom_call.1} parent=11 // pred_fallthru
          _
        // Predicated region
        $region17: #{tpu_custom_call.1} parent=11 // pred_check
          %p234 = pneg %p85
        $region18: #{tpu_custom_call.1} parent=11 // pred_check_branch
          %236 = sbr.rel (%p234) target = $region20
        $region19: #{tpu_custom_call.1} parent=11 // pred_region
          _
        $region20: #{tpu_custom_call.1} parent=11 // pred_fallthru
          _
        // Predicated region
        $region21: #{tpu_custom_call.1} parent=11 // pred_check
          %p237 = pneg %p106
        $region22: #{tpu_custom_call.1} parent=11 // pred_check_branch
          %239 = sbr.rel (%p237) target = $region24
        $region23: #{tpu_custom_call.1} parent=11 // pred_region
          _
        $region24: #{tpu_custom_call.1} parent=11 // pred_fallthru
          _
        // Predicated region
        $region25: #{tpu_custom_call.1} parent=11 // pred_check
          %p240 = pneg %p127
        $region26: #{tpu_custom_call.1} parent=11 // pred_check_branch
          %242 = sbr.rel (%p240) target = $region28
        $region27: #{tpu_custom_call.1} parent=11 // pred_region
          _
        $region28: #{tpu_custom_call.1} parent=11 // pred_fallthru
          _
        // Predicated region
        $region29: #{tpu_custom_call.1} parent=11 // pred_check
          %p243 = pneg %p148
        $region30: #{tpu_custom_call.1} parent=11 // pred_check_branch
          %245 = sbr.rel (%p243) target = $region32
        $region31: #{tpu_custom_call.1} parent=11 // pred_region
          _
        $region32: #{tpu_custom_call.1} parent=11 // pred_fallthru
          _
        // Predicated region
        $region33: #{tpu_custom_call.1} parent=11 // pred_check
          %p246 = pneg %p169
        $region34: #{tpu_custom_call.1} parent=11 // pred_check_branch
          %248 = sbr.rel (%p246) target = $region36
        $region35: #{tpu_custom_call.1} parent=11 // pred_region
          _
        $region36: #{tpu_custom_call.1} parent=11 // pred_fallthru
          _
        // Predicated region
        $region37: #{tpu_custom_call.1} parent=11 // pred_check
          %p249 = pneg %p190
        $region38: #{tpu_custom_call.1} parent=11 // pred_check_branch
          %251 = sbr.rel (%p249) target = $region40
        $region39: #{tpu_custom_call.1} parent=11 // pred_region
          _
        $region40: #{tpu_custom_call.1} parent=11 // pred_fallthru
          _
      $region12: #{tpu_custom_call.1} parent=5 // pred_fallthru
        _
      %p252 = scmp.lt.s32.totalorder %s17, 2
      // Predicated region
      $region41: #{tpu_custom_call.1} parent=5 // pred_check
        %p253 = pneg %p252
      $region42: #{tpu_custom_call.1} parent=5 // pred_check_branch
        %255 = sbr.rel (%p253) target = $region44
      $region43: #{tpu_custom_call.1} parent=5 // pred_region
        // Predicated region
        $region45: #{tpu_custom_call.1} parent=43 // pred_check
          %p256 = pneg %p37
        $region46: #{tpu_custom_call.1} parent=43 // pred_check_branch
          %258 = sbr.rel (%p256) target = $region48
        $region47: #{tpu_custom_call.1} parent=43 // pred_region
          %p259 = scmp.lt.s32.totalorder %s17, 1
          %s260 = scalar_select %p259, %s17, 1
          %s261 = smul.addr %s260, 3
          %s262 = smul.addr %s261, 8
          %s263 = scalar_lea.vmem %s0, %s262
        $region48: #{tpu_custom_call.1} parent=43 // pred_fallthru
          _
      $region44: #{tpu_custom_call.1} parent=5 // pred_fallthru
        _
      %p264 = scmp.le.s32.totalorder 1, %s17
      %p265 = scmp.lt.s32.totalorder %s17, 3
      %p266 = pnand %p264, %p265
      %p267 = pneg %p266
      // Predicated region
      $region49: #{tpu_custom_call.1} parent=5 // pred_check
        _
      $region50: #{tpu_custom_call.1} parent=5 // pred_check_branch
        %269 = sbr.rel (%p266) target = $region52
      $region51: #{tpu_custom_call.1} parent=5 // pred_region
        %s270 = ssub.s32 %s17, 1
        %p271 = scmp.lt.s32.totalorder %s22, 1
        %s272 = scalar_select %p271, %s22, 1
        %s273 = smul.addr %s272, 3
        %s274 = smul.addr %s273, 8
        %s275 = scalar_lea.vmem %s0, %s274
        %p276 = pneg %p43
        %p277 = pneg %p40
        %p278 = pneg %p64
        %p279 = pneg %p61
        %p280 = pneg %p85
        %p281 = pneg %p82
        %p282 = pneg %p106
        %p283 = pneg %p103
        %p284 = pneg %p127
        %p285 = pneg %p124
        %p286 = pneg %p148
        %p287 = pneg %p145
        %p288 = pneg %p169
        %p289 = pneg %p166
        %p290 = pneg %p190
        %p291 = pneg %p187
        %p292 = pneg %p216
        %p293 = pneg %p213
        %s294 = sand.u32 %s203, 1
        %s295 = scalar_lea.sflag [#allocation3], %s294
        %s296 = sand.u32 %s203, 1
        %s297 = smul.addr %s296, 3
        %s298 = scalar_lea.vmem [#allocation2], %s297
        %p299 = scmp.lt.s32.totalorder %s22, 1
        %s300 = scalar_select %p299, %s22, 1
        %s301 = smul.addr %s300, 3
        %s302 = smul.addr %s301, 8
        %s303 = scalar_lea.vmem %s0, %s302
        %v304 = vld [vmem:[%s1] sm:$0x7]
        %v305 = vld [vmem:[%s303] sm:$0xff]
        %v306 = vld [vmem:[%s303 + $0x8] sm:$0xff]
        %v307 = vld [vmem:[%s303 + $0x10] sm:$0xff]
        %v308 = vld [vmem:[%s2] sm:$0xff]
        %312 = vrot.lane.b32.xlu0 %v305, 19
        %v313 = vpop.permute.xlu0 %312
        %314 = vrot.lane.b32.xlu0 %v306, 19
        %v315 = vpop.permute.xlu0 %314
        %316 = vrot.lane.b32.xlu0 %v307, 19
        %v317 = vpop.permute.xlu0 %316
        %vm318 = vcmask 154624
        %v319 = vsel %vm318, %v313, %v315
        %v320 = vsel %vm318, %v315, %v317
        %v324 = vsel %vm318, 0.0, %v313
        %s325 = scalar_lea.vmem %s2, 8
        %v326 = vld [vmem:[%s325] sm:$0xff]
        %327 = vrot.lane.b32.xlu0 %v305, 18
        %v328 = vpop.permute.xlu0 %327
        %329 = vrot.lane.b32.xlu0 %v306, 18
        %v330 = vpop.permute.xlu0 %329
        %331 = vrot.lane.b32.xlu0 %v307, 18
        %v332 = vpop.permute.xlu0 %331
        %vm333 = vcmask 146432
        %v334 = vsel %vm333, %v328, %v330
        %v335 = vsel %vm333, %v330, %v332
        %v339 = vsel %vm333, 0.0, %v328
        %vm340 = vcmask 64512
        %v342 = vsel %vm340, %v326, 0
        %344 = vmatpush.msra.mxu0 0.0
        %345 = vmatpush.msra.mxu0 0.0
        %346 = vmatpush.msra.mxu0 0.0
        %347 = vmatpush.msra.mxu0 0.0
        %348 = vmatpush.msra.mxu0 0.0
        %349 = vmatpush.msra.mxu0 0.0
        %350 = vmatpush.msra.mxu0 0.0
        %351 = vmatpush.msra.mxu0 0.0
        %352 = vmatpush.msra.mxu0 0.0
        %353 = vmatpush.msra.mxu0 0.0
        %354 = vmatpush.msra.mxu0 0.0
        %355 = vmatpush.msra.mxu0 0.0
        %356 = vmatpush.msra.mxu0 0.0
        %357 = vmatpush.msra.mxu0 0.0
        %358 = vmatpush.msra.mxu0 0.0
        %359 = vmatpush.msra.mxu0 %v339
        %360 = vmatmul.f32.gmra.mxu0 %v342
        %v361 = vpop.f32.mrf.mxu0
        %v362 = vadd.f32 0.0, %v361
        %363 = vdwg.mxu0
        %364 = vmatpush.msra.mxu0 0.0
        %365 = vmatpush.msra.mxu0 0.0
        %366 = vmatpush.msra.mxu0 0.0
        %367 = vmatpush.msra.mxu0 0.0
        %368 = vmatpush.msra.mxu0 0.0
        %369 = vmatpush.msra.mxu0 0.0
        %370 = vmatpush.msra.mxu0 0.0
        %371 = vmatpush.msra.mxu0 0.0
        %372 = vmatpush.msra.mxu0 0.0
        %373 = vmatpush.msra.mxu0 0.0
        %374 = vmatpush.msra.mxu0 0.0
        %375 = vmatpush.msra.mxu0 0.0
        %376 = vmatpush.msra.mxu0 0.0
        %377 = vmatpush.msra.mxu0 0.0
        %378 = vmatpush.msra.mxu0 0.0
        %379 = vmatpush.msra.mxu0 %v334
        %380 = vmatmul.f32.gmra.mxu0 %v342
        %v381 = vpop.f32.mrf.mxu0
        %v382 = vadd.f32 0.0, %v381
        %383 = vdwg.mxu0
        %384 = vmatpush.msra.mxu0 0.0
        %385 = vmatpush.msra.mxu0 0.0
        %386 = vmatpush.msra.mxu0 0.0
        %387 = vmatpush.msra.mxu0 0.0
        %388 = vmatpush.msra.mxu0 0.0
        %389 = vmatpush.msra.mxu0 0.0
        %390 = vmatpush.msra.mxu0 0.0
        %391 = vmatpush.msra.mxu0 0.0
        %392 = vmatpush.msra.mxu0 0.0
        %393 = vmatpush.msra.mxu0 0.0
        %394 = vmatpush.msra.mxu0 0.0
        %395 = vmatpush.msra.mxu0 0.0
        %396 = vmatpush.msra.mxu0 0.0
        %397 = vmatpush.msra.mxu0 0.0
        %398 = vmatpush.msra.mxu0 0.0
        %399 = vmatpush.msra.mxu0 %v335
        %400 = vmatmul.f32.gmra.mxu0 %v342
        %v401 = vpop.f32.mrf.mxu0
        %v402 = vadd.f32 0.0, %v401
        %403 = vdwg.mxu0
        %v405 = vsel %vm340, %v308, 0
        %407 = vmatpush.msra.mxu0 0.0
        %408 = vmatpush.msra.mxu0 0.0
        %409 = vmatpush.msra.mxu0 0.0
        %410 = vmatpush.msra.mxu0 0.0
        %411 = vmatpush.msra.mxu0 0.0
        %412 = vmatpush.msra.mxu0 0.0
        %413 = vmatpush.msra.mxu0 0.0
        %414 = vmatpush.msra.mxu0 0.0
        %415 = vmatpush.msra.mxu0 0.0
        %416 = vmatpush.msra.mxu0 0.0
        %417 = vmatpush.msra.mxu0 0.0
        %418 = vmatpush.msra.mxu0 0.0
        %419 = vmatpush.msra.mxu0 0.0
        %420 = vmatpush.msra.mxu0 0.0
        %421 = vmatpush.msra.mxu0 0.0
        %422 = vmatpush.msra.mxu0 %v324
        %423 = vmatmul.f32.gmra.mxu0 %v405
        %v424 = vpop.f32.mrf.mxu0
        %v425 = vadd.f32 %v362, %v424
        %426 = vdwg.mxu0
        %427 = vmatpush.msra.mxu0 0.0
        %428 = vmatpush.msra.mxu0 0.0
        %429 = vmatpush.msra.mxu0 0.0
        %430 = vmatpush.msra.mxu0 0.0
        %431 = vmatpush.msra.mxu0 0.0
        %432 = vmatpush.msra.mxu0 0.0
        %433 = vmatpush.msra.mxu0 0.0
        %434 = vmatpush.msra.mxu0 0.0
        %435 = vmatpush.msra.mxu0 0.0
        %436 = vmatpush.msra.mxu0 0.0
        %437 = vmatpush.msra.mxu0 0.0
        %438 = vmatpush.msra.mxu0 0.0
        %439 = vmatpush.msra.mxu0 0.0
        %440 = vmatpush.msra.mxu0 0.0
        %441 = vmatpush.msra.mxu0 0.0
        %442 = vmatpush.msra.mxu0 %v319
        %443 = vmatmul.f32.gmra.mxu0 %v405
        %v444 = vpop.f32.mrf.mxu0
        %v445 = vadd.f32 %v382, %v444
        %446 = vdwg.mxu0
        %447 = vmatpush.msra.mxu0 0.0
        %448 = vmatpush.msra.mxu0 0.0
        %449 = vmatpush.msra.mxu0 0.0
        %450 = vmatpush.msra.mxu0 0.0
        %451 = vmatpush.msra.mxu0 0.0
        %452 = vmatpush.msra.mxu0 0.0
        %453 = vmatpush.msra.mxu0 0.0
        %454 = vmatpush.msra.mxu0 0.0
        %455 = vmatpush.msra.mxu0 0.0
        %456 = vmatpush.msra.mxu0 0.0
        %457 = vmatpush.msra.mxu0 0.0
        %458 = vmatpush.msra.mxu0 0.0
        %459 = vmatpush.msra.mxu0 0.0
        %460 = vmatpush.msra.mxu0 0.0
        %461 = vmatpush.msra.mxu0 0.0
        %462 = vmatpush.msra.mxu0 %v320
        %463 = vmatmul.f32.gmra.mxu0 %v405
        %v464 = vpop.f32.mrf.mxu0
        %v465 = vadd.f32 %v402, %v464
        %466 = vdwg.mxu0
        %s467 = scalar_lea.vmem %s2, 16
        %v468 = vld [vmem:[%s467] sm:$0xff]
        %469 = vrot.lane.b32.xlu0 %v305, 17
        %v470 = vpop.permute.xlu0 %469
        %471 = vrot.lane.b32.xlu0 %v306, 17
        %v472 = vpop.permute.xlu0 %471
        %473 = vrot.lane.b32.xlu0 %v307, 17
        %v474 = vpop.permute.xlu0 %473
        %vm475 = vcmask 138240
        %v476 = vsel %vm475, %v470, %v472
        %v477 = vsel %vm475, %v472, %v474
        %v481 = vsel %vm475, 0.0, %v470
        %v483 = vsel %vm340, %v468, 0
        %485 = vmatpush.msra.mxu0 0.0
        %486 = vmatpush.msra.mxu0 0.0
        %487 = vmatpush.msra.mxu0 0.0
        %488 = vmatpush.msra.mxu0 0.0
        %489 = vmatpush.msra.mxu0 0.0
        %490 = vmatpush.msra.mxu0 0.0
        %491 = vmatpush.msra.mxu0 0.0
        %492 = vmatpush.msra.mxu0 0.0
        %493 = vmatpush.msra.mxu0 0.0
        %494 = vmatpush.msra.mxu0 0.0
        %495 = vmatpush.msra.mxu0 0.0
        %496 = vmatpush.msra.mxu0 0.0
        %497 = vmatpush.msra.mxu0 0.0
        %498 = vmatpush.msra.mxu0 0.0
        %499 = vmatpush.msra.mxu0 0.0
        %500 = vmatpush.msra.mxu0 %v481
        %501 = vmatmul.f32.gmra.mxu0 %v483
        %v502 = vpop.f32.mrf.mxu0
        %v503 = vadd.f32 0.0, %v502
        %504 = vdwg.mxu0
        %505 = vmatpush.msra.mxu0 0.0
        %506 = vmatpush.msra.mxu0 0.0
        %507 = vmatpush.msra.mxu0 0.0
        %508 = vmatpush.msra.mxu0 0.0
        %509 = vmatpush.msra.mxu0 0.0
        %510 = vmatpush.msra.mxu0 0.0
        %511 = vmatpush.msra.mxu0 0.0
        %512 = vmatpush.msra.mxu0 0.0
        %513 = vmatpush.msra.mxu0 0.0
        %514 = vmatpush.msra.mxu0 0.0
        %515 = vmatpush.msra.mxu0 0.0
        %516 = vmatpush.msra.mxu0 0.0
        %517 = vmatpush.msra.mxu0 0.0
        %518 = vmatpush.msra.mxu0 0.0
        %519 = vmatpush.msra.mxu0 0.0
        %520 = vmatpush.msra.mxu0 %v476
        %521 = vmatmul.f32.gmra.mxu0 %v483
        %v522 = vpop.f32.mrf.mxu0
        %v523 = vadd.f32 0.0, %v522
        %524 = vdwg.mxu0
        %525 = vmatpush.msra.mxu0 0.0
        %526 = vmatpush.msra.mxu0 0.0
        %527 = vmatpush.msra.mxu0 0.0
        %528 = vmatpush.msra.mxu0 0.0
        %529 = vmatpush.msra.mxu0 0.0
        %530 = vmatpush.msra.mxu0 0.0
        %531 = vmatpush.msra.mxu0 0.0
        %532 = vmatpush.msra.mxu0 0.0
        %533 = vmatpush.msra.mxu0 0.0
        %534 = vmatpush.msra.mxu0 0.0
        %535 = vmatpush.msra.mxu0 0.0
        %536 = vmatpush.msra.mxu0 0.0
        %537 = vmatpush.msra.mxu0 0.0
        %538 = vmatpush.msra.mxu0 0.0
        %539 = vmatpush.msra.mxu0 0.0
        %540 = vmatpush.msra.mxu0 %v477
        %541 = vmatmul.f32.gmra.mxu0 %v483
        %v542 = vpop.f32.mrf.mxu0
        %v543 = vadd.f32 0.0, %v542
        %544 = vdwg.mxu0
        %v545 = vadd.f32 %v425, %v503
        %v546 = vadd.f32 %v445, %v523
        %v547 = vadd.f32 %v465, %v543
        %s548 = scalar_lea.vmem %s2, 24
        %v549 = vld [vmem:[%s548] sm:$0xff]
        %550 = vrot.lane.b32.xlu0 %v305, 1
        %v551 = vpop.permute.xlu0 %550
        %552 = vrot.lane.b32.xlu0 %v306, 1
        %v553 = vpop.permute.xlu0 %552
        %554 = vrot.lane.b32.xlu0 %v307, 1
        %v555 = vpop.permute.xlu0 %554
        %vm556 = vcmask 7168
        %v557 = vsel %vm556, %v551, %v553
        %v558 = vsel %vm556, %v553, %v555
        %v562 = vsel %vm556, 0.0, %v551
        %v564 = vsel %vm340, %v549, 0
        %566 = vmatpush.msra.mxu0 0.0
        %567 = vmatpush.msra.mxu0 0.0
        %568 = vmatpush.msra.mxu0 0.0
        %569 = vmatpush.msra.mxu0 0.0
        %570 = vmatpush.msra.mxu0 0.0
        %571 = vmatpush.msra.mxu0 0.0
        %572 = vmatpush.msra.mxu0 0.0
        %573 = vmatpush.msra.mxu0 0.0
        %574 = vmatpush.msra.mxu0 0.0
        %575 = vmatpush.msra.mxu0 0.0
        %576 = vmatpush.msra.mxu0 0.0
        %577 = vmatpush.msra.mxu0 0.0
        %578 = vmatpush.msra.mxu0 0.0
        %579 = vmatpush.msra.mxu0 0.0
        %580 = vmatpush.msra.mxu0 0.0
        %581 = vmatpush.msra.mxu0 %v562
        %582 = vmatmul.f32.gmra.mxu0 %v564
        %v583 = vpop.f32.mrf.mxu0
        %v584 = vadd.f32 0.0, %v583
        %585 = vdwg.mxu0
        %586 = vmatpush.msra.mxu0 0.0
        %587 = vmatpush.msra.mxu0 0.0
        %588 = vmatpush.msra.mxu0 0.0
        %589 = vmatpush.msra.mxu0 0.0
        %590 = vmatpush.msra.mxu0 0.0
        %591 = vmatpush.msra.mxu0 0.0
        %592 = vmatpush.msra.mxu0 0.0
        %593 = vmatpush.msra.mxu0 0.0
        %594 = vmatpush.msra.mxu0 0.0
        %595 = vmatpush.msra.mxu0 0.0
        %596 = vmatpush.msra.mxu0 0.0
        %597 = vmatpush.msra.mxu0 0.0
        %598 = vmatpush.msra.mxu0 0.0
        %599 = vmatpush.msra.mxu0 0.0
        %600 = vmatpush.msra.mxu0 0.0
        %601 = vmatpush.msra.mxu0 %v557
        %602 = vmatmul.f32.gmra.mxu0 %v564
        %v603 = vpop.f32.mrf.mxu0
        %v604 = vadd.f32 0.0, %v603
        %605 = vdwg.mxu0
        %606 = vmatpush.msra.mxu0 0.0
        %607 = vmatpush.msra.mxu0 0.0
        %608 = vmatpush.msra.mxu0 0.0
        %609 = vmatpush.msra.mxu0 0.0
        %610 = vmatpush.msra.mxu0 0.0
        %611 = vmatpush.msra.mxu0 0.0
        %612 = vmatpush.msra.mxu0 0.0
        %613 = vmatpush.msra.mxu0 0.0
        %614 = vmatpush.msra.mxu0 0.0
        %615 = vmatpush.msra.mxu0 0.0
        %616 = vmatpush.msra.mxu0 0.0
        %617 = vmatpush.msra.mxu0 0.0
        %618 = vmatpush.msra.mxu0 0.0
        %619 = vmatpush.msra.mxu0 0.0
        %620 = vmatpush.msra.mxu0 0.0
        %621 = vmatpush.msra.mxu0 %v558
        %622 = vmatmul.f32.gmra.mxu0 %v564
        %v623 = vpop.f32.mrf.mxu0
        %v624 = vadd.f32 0.0, %v623
        %625 = vdwg.mxu0
        %v626 = vadd.f32 %v545, %v584
        %v627 = vadd.f32 %v546, %v604
        %v628 = vadd.f32 %v547, %v624
        %s629 = scalar_lea.vmem %s2, 32
        %v630 = vld [vmem:[%s629] sm:$0xff]
        %v632 = vsel %vm340, %v630, 0
        %634 = vmatpush.msra.mxu0 0.0
        %635 = vmatpush.msra.mxu0 0.0
        %636 = vmatpush.msra.mxu0 0.0
        %637 = vmatpush.msra.mxu0 0.0
        %638 = vmatpush.msra.mxu0 0.0
        %639 = vmatpush.msra.mxu0 0.0
        %640 = vmatpush.msra.mxu0 0.0
        %641 = vmatpush.msra.mxu0 0.0
        %642 = vmatpush.msra.mxu0 0.0
        %643 = vmatpush.msra.mxu0 0.0
        %644 = vmatpush.msra.mxu0 0.0
        %645 = vmatpush.msra.mxu0 0.0
        %646 = vmatpush.msra.mxu0 0.0
        %647 = vmatpush.msra.mxu0 0.0
        %648 = vmatpush.msra.mxu0 0.0
        %649 = vmatpush.msra.mxu0 %v305
        %650 = vmatmul.f32.gmra.mxu0 %v632
        %v651 = vpop.f32.mrf.mxu0
        %v652 = vadd.f32 0.0, %v651
        %653 = vdwg.mxu0
        %654 = vmatpush.msra.mxu0 0.0
        %655 = vmatpush.msra.mxu0 0.0
        %656 = vmatpush.msra.mxu0 0.0
        %657 = vmatpush.msra.mxu0 0.0
        %658 = vmatpush.msra.mxu0 0.0
        %659 = vmatpush.msra.mxu0 0.0
        %660 = vmatpush.msra.mxu0 0.0
        %661 = vmatpush.msra.mxu0 0.0
        %662 = vmatpush.msra.mxu0 0.0
        %663 = vmatpush.msra.mxu0 0.0
        %664 = vmatpush.msra.mxu0 0.0
        %665 = vmatpush.msra.mxu0 0.0
        %666 = vmatpush.msra.mxu0 0.0
        %667 = vmatpush.msra.mxu0 0.0
        %668 = vmatpush.msra.mxu0 0.0
        %669 = vmatpush.msra.mxu0 %v306
        %670 = vmatmul.f32.gmra.mxu0 %v632
        %v671 = vpop.f32.mrf.mxu0
        %v672 = vadd.f32 0.0, %v671
        %673 = vdwg.mxu0
        %674 = vmatpush.msra.mxu0 0.0
        %675 = vmatpush.msra.mxu0 0.0
        %676 = vmatpush.msra.mxu0 0.0
        %677 = vmatpush.msra.mxu0 0.0
        %678 = vmatpush.msra.mxu0 0.0
        %679 = vmatpush.msra.mxu0 0.0
        %680 = vmatpush.msra.mxu0 0.0
        %681 = vmatpush.msra.mxu0 0.0
        %682 = vmatpush.msra.mxu0 0.0
        %683 = vmatpush.msra.mxu0 0.0
        %684 = vmatpush.msra.mxu0 0.0
        %685 = vmatpush.msra.mxu0 0.0
        %686 = vmatpush.msra.mxu0 0.0
        %687 = vmatpush.msra.mxu0 0.0
        %688 = vmatpush.msra.mxu0 0.0
        %689 = vmatpush.msra.mxu0 %v307
        %690 = vmatmul.f32.gmra.mxu0 %v632
        %v691 = vpop.f32.mrf.mxu0
        %v692 = vadd.f32 0.0, %v691
        %693 = vdwg.mxu0
        %v694 = vadd.f32 %v626, %v652
        %v695 = vadd.f32 %v627, %v672
        %v696 = vadd.f32 %v628, %v692
        %s697 = scalar_lea.vmem %s2, 40
        %v698 = vld [vmem:[%s697] sm:$0xff]
        %699 = vrot.lane.b32.xlu0 %v305, 127
        %v700 = vpop.permute.xlu0 %699
        %701 = vrot.lane.b32.xlu0 %v306, 127
        %v702 = vpop.permute.xlu0 %701
        %703 = vrot.lane.b32.xlu0 %v307, 127
        %v704 = vpop.permute.xlu0 %703
        %vm705 = vcmask 1039360
        %v706 = vsel %vm705, %v700, %v702
        %v707 = vsel %vm705, %v702, %v704
        %v711 = vsel %vm705, %v704, 0.0
        %v713 = vsel %vm340, %v698, 0
        %715 = vmatpush.msra.mxu0 0.0
        %716 = vmatpush.msra.mxu0 0.0
        %717 = vmatpush.msra.mxu0 0.0
        %718 = vmatpush.msra.mxu0 0.0
        %719 = vmatpush.msra.mxu0 0.0
        %720 = vmatpush.msra.mxu0 0.0
        %721 = vmatpush.msra.mxu0 0.0
        %722 = vmatpush.msra.mxu0 0.0
        %723 = vmatpush.msra.mxu0 0.0
        %724 = vmatpush.msra.mxu0 0.0
        %725 = vmatpush.msra.mxu0 0.0
        %726 = vmatpush.msra.mxu0 0.0
        %727 = vmatpush.msra.mxu0 0.0
        %728 = vmatpush.msra.mxu0 0.0
        %729 = vmatpush.msra.mxu0 0.0
        %730 = vmatpush.msra.mxu0 %v706
        %731 = vmatmul.f32.gmra.mxu0 %v713
        %v732 = vpop.f32.mrf.mxu0
        %v733 = vadd.f32 0.0, %v732
        %734 = vdwg.mxu0
        %735 = vmatpush.msra.mxu0 0.0
        %736 = vmatpush.msra.mxu0 0.0
        %737 = vmatpush.msra.mxu0 0.0
        %738 = vmatpush.msra.mxu0 0.0
        %739 = vmatpush.msra.mxu0 0.0
        %740 = vmatpush.msra.mxu0 0.0
        %741 = vmatpush.msra.mxu0 0.0
        %742 = vmatpush.msra.mxu0 0.0
        %743 = vmatpush.msra.mxu0 0.0
        %744 = vmatpush.msra.mxu0 0.0
        %745 = vmatpush.msra.mxu0 0.0
        %746 = vmatpush.msra.mxu0 0.0
        %747 = vmatpush.msra.mxu0 0.0
        %748 = vmatpush.msra.mxu0 0.0
        %749 = vmatpush.msra.mxu0 0.0
        %750 = vmatpush.msra.mxu0 %v707
        %751 = vmatmul.f32.gmra.mxu0 %v713
        %v752 = vpop.f32.mrf.mxu0
        %v753 = vadd.f32 0.0, %v752
        %754 = vdwg.mxu0
        %755 = vmatpush.msra.mxu0 0.0
        %756 = vmatpush.msra.mxu0 0.0
        %757 = vmatpush.msra.mxu0 0.0
        %758 = vmatpush.msra.mxu0 0.0
        %759 = vmatpush.msra.mxu0 0.0
        %760 = vmatpush.msra.mxu0 0.0
        %761 = vmatpush.msra.mxu0 0.0
        %762 = vmatpush.msra.mxu0 0.0
        %763 = vmatpush.msra.mxu0 0.0
        %764 = vmatpush.msra.mxu0 0.0
        %765 = vmatpush.msra.mxu0 0.0
        %766 = vmatpush.msra.mxu0 0.0
        %767 = vmatpush.msra.mxu0 0.0
        %768 = vmatpush.msra.mxu0 0.0
        %769 = vmatpush.msra.mxu0 0.0
        %770 = vmatpush.msra.mxu0 %v711
        %771 = vmatmul.f32.gmra.mxu0 %v713
        %v772 = vpop.f32.mrf.mxu0
        %v773 = vadd.f32 0.0, %v772
        %774 = vdwg.mxu0
        %v775 = vadd.f32 %v694, %v733
        %v776 = vadd.f32 %v695, %v753
        %v777 = vadd.f32 %v696, %v773
        %s778 = scalar_lea.vmem %s2, 48
        %v779 = vld [vmem:[%s778] sm:$0xff]
        %780 = vrot.lane.b32.xlu0 %v305, 111
        %v781 = vpop.permute.xlu0 %780
        %782 = vrot.lane.b32.xlu0 %v306, 111
        %v783 = vpop.permute.xlu0 %782
        %784 = vrot.lane.b32.xlu0 %v307, 111
        %v785 = vpop.permute.xlu0 %784
        %vm786 = vcmask 908288
        %v787 = vsel %vm786, %v781, %v783
        %v788 = vsel %vm786, %v783, %v785
        %v792 = vsel %vm786, %v785, 0.0
        %v794 = vsel %vm340, %v779, 0
        %796 = vmatpush.msra.mxu0 0.0
        %797 = vmatpush.msra.mxu0 0.0
        %798 = vmatpush.msra.mxu0 0.0
        %799 = vmatpush.msra.mxu0 0.0
        %800 = vmatpush.msra.mxu0 0.0
        %801 = vmatpush.msra.mxu0 0.0
        %802 = vmatpush.msra.mxu0 0.0
        %803 = vmatpush.msra.mxu0 0.0
        %804 = vmatpush.msra.mxu0 0.0
        %805 = vmatpush.msra.mxu0 0.0
        %806 = vmatpush.msra.mxu0 0.0
        %807 = vmatpush.msra.mxu0 0.0
        %808 = vmatpush.msra.mxu0 0.0
        %809 = vmatpush.msra.mxu0 0.0
        %810 = vmatpush.msra.mxu0 0.0
        %811 = vmatpush.msra.mxu0 %v787
        %812 = vmatmul.f32.gmra.mxu0 %v794
        %v813 = vpop.f32.mrf.mxu0
        %v814 = vadd.f32 0.0, %v813
        %815 = vdwg.mxu0
        %816 = vmatpush.msra.mxu0 0.0
        %817 = vmatpush.msra.mxu0 0.0
        %818 = vmatpush.msra.mxu0 0.0
        %819 = vmatpush.msra.mxu0 0.0
        %820 = vmatpush.msra.mxu0 0.0
        %821 = vmatpush.msra.mxu0 0.0
        %822 = vmatpush.msra.mxu0 0.0
        %823 = vmatpush.msra.mxu0 0.0
        %824 = vmatpush.msra.mxu0 0.0
        %825 = vmatpush.msra.mxu0 0.0
        %826 = vmatpush.msra.mxu0 0.0
        %827 = vmatpush.msra.mxu0 0.0
        %828 = vmatpush.msra.mxu0 0.0
        %829 = vmatpush.msra.mxu0 0.0
        %830 = vmatpush.msra.mxu0 0.0
        %831 = vmatpush.msra.mxu0 %v788
        %832 = vmatmul.f32.gmra.mxu0 %v794
        %v833 = vpop.f32.mrf.mxu0
        %v834 = vadd.f32 0.0, %v833
        %835 = vdwg.mxu0
        %836 = vmatpush.msra.mxu0 0.0
        %837 = vmatpush.msra.mxu0 0.0
        %838 = vmatpush.msra.mxu0 0.0
        %839 = vmatpush.msra.mxu0 0.0
        %840 = vmatpush.msra.mxu0 0.0
        %841 = vmatpush.msra.mxu0 0.0
        %842 = vmatpush.msra.mxu0 0.0
        %843 = vmatpush.msra.mxu0 0.0
        %844 = vmatpush.msra.mxu0 0.0
        %845 = vmatpush.msra.mxu0 0.0
        %846 = vmatpush.msra.mxu0 0.0
        %847 = vmatpush.msra.mxu0 0.0
        %848 = vmatpush.msra.mxu0 0.0
        %849 = vmatpush.msra.mxu0 0.0
        %850 = vmatpush.msra.mxu0 0.0
        %851 = vmatpush.msra.mxu0 %v792
        %852 = vmatmul.f32.gmra.mxu0 %v794
        %v853 = vpop.f32.mrf.mxu0
        %v854 = vadd.f32 0.0, %v853
        %855 = vdwg.mxu0
        %v856 = vadd.f32 %v775, %v814
        %v857 = vadd.f32 %v776, %v834
        %v858 = vadd.f32 %v777, %v854
        %s859 = scalar_lea.vmem %s2, 56
        %v860 = vld [vmem:[%s859] sm:$0xff]
        %861 = vrot.lane.b32.xlu0 %v305, 110
        %v862 = vpop.permute.xlu0 %861
        %863 = vrot.lane.b32.xlu0 %v306, 110
        %v864 = vpop.permute.xlu0 %863
        %865 = vrot.lane.b32.xlu0 %v307, 110
        %v866 = vpop.permute.xlu0 %865
        %vm867 = vcmask 900096
        %v868 = vsel %vm867, %v862, %v864
        %v869 = vsel %vm867, %v864, %v866
        %v873 = vsel %vm867, %v866, 0.0
        %v875 = vsel %vm340, %v860, 0
        %877 = vmatpush.msra.mxu0 0.0
        %878 = vmatpush.msra.mxu0 0.0
        %879 = vmatpush.msra.mxu0 0.0
        %880 = vmatpush.msra.mxu0 0.0
        %881 = vmatpush.msra.mxu0 0.0
        %882 = vmatpush.msra.mxu0 0.0
        %883 = vmatpush.msra.mxu0 0.0
        %884 = vmatpush.msra.mxu0 0.0
        %885 = vmatpush.msra.mxu0 0.0
        %886 = vmatpush.msra.mxu0 0.0
        %887 = vmatpush.msra.mxu0 0.0
        %888 = vmatpush.msra.mxu0 0.0
        %889 = vmatpush.msra.mxu0 0.0
        %890 = vmatpush.msra.mxu0 0.0
        %891 = vmatpush.msra.mxu0 0.0
        %892 = vmatpush.msra.mxu0 %v868
        %893 = vmatmul.f32.gmra.mxu0 %v875
        %v894 = vpop.f32.mrf.mxu0
        %v895 = vadd.f32 0.0, %v894
        %896 = vdwg.mxu0
        %897 = vmatpush.msra.mxu0 0.0
        %898 = vmatpush.msra.mxu0 0.0
        %899 = vmatpush.msra.mxu0 0.0
        %900 = vmatpush.msra.mxu0 0.0
        %901 = vmatpush.msra.mxu0 0.0
        %902 = vmatpush.msra.mxu0 0.0
        %903 = vmatpush.msra.mxu0 0.0
        %904 = vmatpush.msra.mxu0 0.0
        %905 = vmatpush.msra.mxu0 0.0
        %906 = vmatpush.msra.mxu0 0.0
        %907 = vmatpush.msra.mxu0 0.0
        %908 = vmatpush.msra.mxu0 0.0
        %909 = vmatpush.msra.mxu0 0.0
        %910 = vmatpush.msra.mxu0 0.0
        %911 = vmatpush.msra.mxu0 0.0
        %912 = vmatpush.msra.mxu0 %v869
        %913 = vmatmul.f32.gmra.mxu0 %v875
        %v914 = vpop.f32.mrf.mxu0
        %v915 = vadd.f32 0.0, %v914
        %916 = vdwg.mxu0
        %917 = vmatpush.msra.mxu0 0.0
        %918 = vmatpush.msra.mxu0 0.0
        %919 = vmatpush.msra.mxu0 0.0
        %920 = vmatpush.msra.mxu0 0.0
        %921 = vmatpush.msra.mxu0 0.0
        %922 = vmatpush.msra.mxu0 0.0
        %923 = vmatpush.msra.mxu0 0.0
        %924 = vmatpush.msra.mxu0 0.0
        %925 = vmatpush.msra.mxu0 0.0
        %926 = vmatpush.msra.mxu0 0.0
        %927 = vmatpush.msra.mxu0 0.0
        %928 = vmatpush.msra.mxu0 0.0
        %929 = vmatpush.msra.mxu0 0.0
        %930 = vmatpush.msra.mxu0 0.0
        %931 = vmatpush.msra.mxu0 0.0
        %932 = vmatpush.msra.mxu0 %v873
        %933 = vmatmul.f32.gmra.mxu0 %v875
        %v934 = vpop.f32.mrf.mxu0
        %v935 = vadd.f32 0.0, %v934
        %936 = vdwg.mxu0
        %v937 = vadd.f32 %v856, %v895
        %v938 = vadd.f32 %v857, %v915
        %v939 = vadd.f32 %v858, %v935
        %s940 = scalar_lea.vmem %s2, 64
        %v941 = vld [vmem:[%s940] sm:$0xff]
        %942 = vrot.lane.b32.xlu0 %v305, 109
        %v943 = vpop.permute.xlu0 %942
        %944 = vrot.lane.b32.xlu0 %v306, 109
        %v945 = vpop.permute.xlu0 %944
        %946 = vrot.lane.b32.xlu0 %v307, 109
        %v947 = vpop.permute.xlu0 %946
        %vm948 = vcmask 891904
        %v949 = vsel %vm948, %v943, %v945
        %v950 = vsel %vm948, %v945, %v947
        %v954 = vsel %vm948, %v947, 0.0
        %v956 = vsel %vm340, %v941, 0
        %958 = vmatpush.msra.mxu0 0.0
        %959 = vmatpush.msra.mxu0 0.0
        %960 = vmatpush.msra.mxu0 0.0
        %961 = vmatpush.msra.mxu0 0.0
        %962 = vmatpush.msra.mxu0 0.0
        %963 = vmatpush.msra.mxu0 0.0
        %964 = vmatpush.msra.mxu0 0.0
        %965 = vmatpush.msra.mxu0 0.0
        %966 = vmatpush.msra.mxu0 0.0
        %967 = vmatpush.msra.mxu0 0.0
        %968 = vmatpush.msra.mxu0 0.0
        %969 = vmatpush.msra.mxu0 0.0
        %970 = vmatpush.msra.mxu0 0.0
        %971 = vmatpush.msra.mxu0 0.0
        %972 = vmatpush.msra.mxu0 0.0
        %973 = vmatpush.msra.mxu0 %v949
        %974 = vmatmul.f32.gmra.mxu0 %v956
        %v975 = vpop.f32.mrf.mxu0
        %v976 = vadd.f32 0.0, %v975
        %977 = vdwg.mxu0
        %978 = vmatpush.msra.mxu0 0.0
        %979 = vmatpush.msra.mxu0 0.0
        %980 = vmatpush.msra.mxu0 0.0
        %981 = vmatpush.msra.mxu0 0.0
        %982 = vmatpush.msra.mxu0 0.0
        %983 = vmatpush.msra.mxu0 0.0
        %984 = vmatpush.msra.mxu0 0.0
        %985 = vmatpush.msra.mxu0 0.0
        %986 = vmatpush.msra.mxu0 0.0
        %987 = vmatpush.msra.mxu0 0.0
        %988 = vmatpush.msra.mxu0 0.0
        %989 = vmatpush.msra.mxu0 0.0
        %990 = vmatpush.msra.mxu0 0.0
        %991 = vmatpush.msra.mxu0 0.0
        %992 = vmatpush.msra.mxu0 0.0
        %993 = vmatpush.msra.mxu0 %v950
        %994 = vmatmul.f32.gmra.mxu0 %v956
        %v995 = vpop.f32.mrf.mxu0
        %v996 = vadd.f32 0.0, %v995
        %997 = vdwg.mxu0
        %998 = vmatpush.msra.mxu0 0.0
        %999 = vmatpush.msra.mxu0 0.0
        %1000 = vmatpush.msra.mxu0 0.0
        %1001 = vmatpush.msra.mxu0 0.0
        %1002 = vmatpush.msra.mxu0 0.0
        %1003 = vmatpush.msra.mxu0 0.0
        %1004 = vmatpush.msra.mxu0 0.0
        %1005 = vmatpush.msra.mxu0 0.0
        %1006 = vmatpush.msra.mxu0 0.0
        %1007 = vmatpush.msra.mxu0 0.0
        %1008 = vmatpush.msra.mxu0 0.0
        %1009 = vmatpush.msra.mxu0 0.0
        %1010 = vmatpush.msra.mxu0 0.0
        %1011 = vmatpush.msra.mxu0 0.0
        %1012 = vmatpush.msra.mxu0 0.0
        %1013 = vmatpush.msra.mxu0 %v954
        %1014 = vmatmul.f32.gmra.mxu0 %v956
        %v1015 = vpop.f32.mrf.mxu0
        %v1016 = vadd.f32 0.0, %v1015
        %1017 = vdwg.mxu0
        %v1018 = vadd.f32 %v937, %v976
        %v1019 = vadd.f32 %v938, %v996
        %v1020 = vadd.f32 %v939, %v1016
        %v1021 = vmax.f32 %v1018, 0.0
        %v1022 = vmax.f32 %v1019, 0.0
        %v1023 = vmax.f32 %v1020, 0.0
        %v1024 = vld [vmem:[%s3] sm:$0xf]
        %v1026 = vsel %vm340, %v1024, 0
        %1028 = vmatpush.msra.mxu0 0.0
        %1029 = vmatpush.msra.mxu0 0.0
        %1030 = vmatpush.msra.mxu0 0.0
        %1031 = vmatpush.msra.mxu0 0.0
        %1032 = vmatpush.msra.mxu0 0.0
        %1033 = vmatpush.msra.mxu0 0.0
        %1034 = vmatpush.msra.mxu0 0.0
        %1035 = vmatpush.msra.mxu0 0.0
        %1036 = vmatpush.msra.mxu0 0.0
        %1037 = vmatpush.msra.mxu0 0.0
        %1038 = vmatpush.msra.mxu0 0.0
        %1039 = vmatpush.msra.mxu0 0.0
        %1040 = vmatpush.msra.mxu0 0.0
        %1041 = vmatpush.msra.mxu0 0.0
        %1042 = vmatpush.msra.mxu0 0.0
        %1043 = vmatpush.msra.mxu0 %v1021
        %1044 = vmatmul.f32.gmra.mxu0 %v1026
        %v1045 = vpop.f32.mrf.mxu0
        %v1046 = vadd.f32 0.0, %v1045
        %1047 = vdwg.mxu0
        %1048 = vmatpush.msra.mxu0 0.0
        %1049 = vmatpush.msra.mxu0 0.0
        %1050 = vmatpush.msra.mxu0 0.0
        %1051 = vmatpush.msra.mxu0 0.0
        %1052 = vmatpush.msra.mxu0 0.0
        %1053 = vmatpush.msra.mxu0 0.0
        %1054 = vmatpush.msra.mxu0 0.0
        %1055 = vmatpush.msra.mxu0 0.0
        %1056 = vmatpush.msra.mxu0 0.0
        %1057 = vmatpush.msra.mxu0 0.0
        %1058 = vmatpush.msra.mxu0 0.0
        %1059 = vmatpush.msra.mxu0 0.0
        %1060 = vmatpush.msra.mxu0 0.0
        %1061 = vmatpush.msra.mxu0 0.0
        %1062 = vmatpush.msra.mxu0 0.0
        %1063 = vmatpush.msra.mxu0 %v1022
        %1064 = vmatmul.f32.gmra.mxu0 %v1026
        %v1065 = vpop.f32.mrf.mxu0
        %v1066 = vadd.f32 0.0, %v1065
        %1067 = vdwg.mxu0
        %1068 = vmatpush.msra.mxu0 0.0
        %1069 = vmatpush.msra.mxu0 0.0
        %1070 = vmatpush.msra.mxu0 0.0
        %1071 = vmatpush.msra.mxu0 0.0
        %1072 = vmatpush.msra.mxu0 0.0
        %1073 = vmatpush.msra.mxu0 0.0
        %1074 = vmatpush.msra.mxu0 0.0
        %1075 = vmatpush.msra.mxu0 0.0
        %1076 = vmatpush.msra.mxu0 0.0
        %1077 = vmatpush.msra.mxu0 0.0
        %1078 = vmatpush.msra.mxu0 0.0
        %1079 = vmatpush.msra.mxu0 0.0
        %1080 = vmatpush.msra.mxu0 0.0
        %1081 = vmatpush.msra.mxu0 0.0
        %1082 = vmatpush.msra.mxu0 0.0
        %1083 = vmatpush.msra.mxu0 %v1023
        %1084 = vmatmul.f32.gmra.mxu0 %v1026
        %v1085 = vpop.f32.mrf.mxu0
        %v1086 = vadd.f32 0.0, %v1085
        %1087 = vdwg.mxu0
        %v1088 = vmax.f32 %v1046, 0.0
        %v1089 = vmax.f32 %v1066, 0.0
        %v1090 = vmax.f32 %v1086, 0.0
        %v1092 = vperm.slane %v304, 0
        %v1093 = vperm.slane %v304, 1
        %v1094 = vperm.slane %v304, 2
        %v1098 = vmul.f32 %v1088, %v1092
        %v1099 = vmul.f32 %v1089, %v1093
        %v1100 = vmul.f32 %v1090, %v1094
        %v1101 = vld [vmem:[%s4] sm:$0xff]
        %1105 = vrot.lane.b32.xlu0 %v1098, 19
        %v1106 = vpop.permute.xlu0 %1105
        %1107 = vrot.lane.b32.xlu0 %v1099, 19
        %v1108 = vpop.permute.xlu0 %1107
        %1109 = vrot.lane.b32.xlu0 %v1100, 19
        %v1110 = vpop.permute.xlu0 %1109
        %v1111 = vsel %vm318, %v1106, %v1108
        %v1112 = vsel %vm318, %v1108, %v1110
        %v1114 = vsel %vm318, 0.0, %v1106
        %s1115 = scalar_lea.vmem %s4, 8
        %v1116 = vld [vmem:[%s1115] sm:$0xff]
        %1117 = vrot.lane.b32.xlu0 %v1098, 18
        %v1118 = vpop.permute.xlu0 %1117
        %1119 = vrot.lane.b32.xlu0 %v1099, 18
        %v1120 = vpop.permute.xlu0 %1119
        %1121 = vrot.lane.b32.xlu0 %v1100, 18
        %v1122 = vpop.permute.xlu0 %1121
        %v1123 = vsel %vm333, %v1118, %v1120
        %v1124 = vsel %vm333, %v1120, %v1122
        %v1126 = vsel %vm333, 0.0, %v1118
        %vm1127 = vcmask 31744
        %v1129 = vsel %vm1127, %v1116, 0
        %vm1131 = vcmask 1043456
        %v1133 = vsel %vm1131, %v1126, 0
        %v1135 = vsel %vm1131, %v1123, 0
        %v1137 = vsel %vm1131, %v1124, 0
        %1139 = vmatpush.msra.mxu0 0.0
        %1140 = vmatpush.msra.mxu0 0.0
        %1141 = vmatpush.msra.mxu0 0.0
        %1142 = vmatpush.msra.mxu0 0.0
        %1143 = vmatpush.msra.mxu0 0.0
        %1144 = vmatpush.msra.mxu0 0.0
        %1145 = vmatpush.msra.mxu0 0.0
        %1146 = vmatpush.msra.mxu0 0.0
        %1147 = vmatpush.msra.mxu0 0.0
        %1148 = vmatpush.msra.mxu0 0.0
        %1149 = vmatpush.msra.mxu0 0.0
        %1150 = vmatpush.msra.mxu0 0.0
        %1151 = vmatpush.msra.mxu0 0.0
        %1152 = vmatpush.msra.mxu0 0.0
        %1153 = vmatpush.msra.mxu0 0.0
        %1154 = vmatpush.msra.mxu0 %v1133
        %1155 = vmatmul.f32.gmra.mxu0 %v1129
        %v1156 = vpop.f32.mrf.mxu0
        %v1157 = vadd.f32 0.0, %v1156
        %1158 = vdwg.mxu0
        %1159 = vmatpush.msra.mxu0 0.0
        %1160 = vmatpush.msra.mxu0 0.0
        %1161 = vmatpush.msra.mxu0 0.0
        %1162 = vmatpush.msra.mxu0 0.0
        %1163 = vmatpush.msra.mxu0 0.0
        %1164 = vmatpush.msra.mxu0 0.0
        %1165 = vmatpush.msra.mxu0 0.0
        %1166 = vmatpush.msra.mxu0 0.0
        %1167 = vmatpush.msra.mxu0 0.0
        %1168 = vmatpush.msra.mxu0 0.0
        %1169 = vmatpush.msra.mxu0 0.0
        %1170 = vmatpush.msra.mxu0 0.0
        %1171 = vmatpush.msra.mxu0 0.0
        %1172 = vmatpush.msra.mxu0 0.0
        %1173 = vmatpush.msra.mxu0 0.0
        %1174 = vmatpush.msra.mxu0 %v1135
        %1175 = vmatmul.f32.gmra.mxu0 %v1129
        %v1176 = vpop.f32.mrf.mxu0
        %v1177 = vadd.f32 0.0, %v1176
        %1178 = vdwg.mxu0
        %1179 = vmatpush.msra.mxu0 0.0
        %1180 = vmatpush.msra.mxu0 0.0
        %1181 = vmatpush.msra.mxu0 0.0
        %1182 = vmatpush.msra.mxu0 0.0
        %1183 = vmatpush.msra.mxu0 0.0
        %1184 = vmatpush.msra.mxu0 0.0
        %1185 = vmatpush.msra.mxu0 0.0
        %1186 = vmatpush.msra.mxu0 0.0
        %1187 = vmatpush.msra.mxu0 0.0
        %1188 = vmatpush.msra.mxu0 0.0
        %1189 = vmatpush.msra.mxu0 0.0
        %1190 = vmatpush.msra.mxu0 0.0
        %1191 = vmatpush.msra.mxu0 0.0
        %1192 = vmatpush.msra.mxu0 0.0
        %1193 = vmatpush.msra.mxu0 0.0
        %1194 = vmatpush.msra.mxu0 %v1137
        %1195 = vmatmul.f32.gmra.mxu0 %v1129
        %v1196 = vpop.f32.mrf.mxu0
        %v1197 = vadd.f32 0.0, %v1196
        %1198 = vdwg.mxu0
        %v1200 = vsel %vm1127, %v1101, 0
        %v1203 = vsel %vm1131, %v1114, 0
        %v1205 = vsel %vm1131, %v1111, 0
        %v1207 = vsel %vm1131, %v1112, 0
        %1209 = vmatpush.msra.mxu0 0.0
        %1210 = vmatpush.msra.mxu0 0.0
        %1211 = vmatpush.msra.mxu0 0.0
        %1212 = vmatpush.msra.mxu0 0.0
        %1213 = vmatpush.msra.mxu0 0.0
        %1214 = vmatpush.msra.mxu0 0.0
        %1215 = vmatpush.msra.mxu0 0.0
        %1216 = vmatpush.msra.mxu0 0.0
        %1217 = vmatpush.msra.mxu0 0.0
        %1218 = vmatpush.msra.mxu0 0.0
        %1219 = vmatpush.msra.mxu0 0.0
        %1220 = vmatpush.msra.mxu0 0.0
        %1221 = vmatpush.msra.mxu0 0.0
        %1222 = vmatpush.msra.mxu0 0.0
        %1223 = vmatpush.msra.mxu0 0.0
        %1224 = vmatpush.msra.mxu0 %v1203
        %1225 = vmatmul.f32.gmra.mxu0 %v1200
        %v1226 = vpop.f32.mrf.mxu0
        %v1227 = vadd.f32 %v1157, %v1226
        %1228 = vdwg.mxu0
        %1229 = vmatpush.msra.mxu0 0.0
        %1230 = vmatpush.msra.mxu0 0.0
        %1231 = vmatpush.msra.mxu0 0.0
        %1232 = vmatpush.msra.mxu0 0.0
        %1233 = vmatpush.msra.mxu0 0.0
        %1234 = vmatpush.msra.mxu0 0.0
        %1235 = vmatpush.msra.mxu0 0.0
        %1236 = vmatpush.msra.mxu0 0.0
        %1237 = vmatpush.msra.mxu0 0.0
        %1238 = vmatpush.msra.mxu0 0.0
        %1239 = vmatpush.msra.mxu0 0.0
        %1240 = vmatpush.msra.mxu0 0.0
        %1241 = vmatpush.msra.mxu0 0.0
        %1242 = vmatpush.msra.mxu0 0.0
        %1243 = vmatpush.msra.mxu0 0.0
        %1244 = vmatpush.msra.mxu0 %v1205
        %1245 = vmatmul.f32.gmra.mxu0 %v1200
        %v1246 = vpop.f32.mrf.mxu0
        %v1247 = vadd.f32 %v1177, %v1246
        %1248 = vdwg.mxu0
        %1249 = vmatpush.msra.mxu0 0.0
        %1250 = vmatpush.msra.mxu0 0.0
        %1251 = vmatpush.msra.mxu0 0.0
        %1252 = vmatpush.msra.mxu0 0.0
        %1253 = vmatpush.msra.mxu0 0.0
        %1254 = vmatpush.msra.mxu0 0.0
        %1255 = vmatpush.msra.mxu0 0.0
        %1256 = vmatpush.msra.mxu0 0.0
        %1257 = vmatpush.msra.mxu0 0.0
        %1258 = vmatpush.msra.mxu0 0.0
        %1259 = vmatpush.msra.mxu0 0.0
        %1260 = vmatpush.msra.mxu0 0.0
        %1261 = vmatpush.msra.mxu0 0.0
        %1262 = vmatpush.msra.mxu0 0.0
        %1263 = vmatpush.msra.mxu0 0.0
        %1264 = vmatpush.msra.mxu0 %v1207
        %1265 = vmatmul.f32.gmra.mxu0 %v1200
        %v1266 = vpop.f32.mrf.mxu0
        %v1267 = vadd.f32 %v1197, %v1266
        %1268 = vdwg.mxu0
        %s1269 = scalar_lea.vmem %s4, 16
        %v1270 = vld [vmem:[%s1269] sm:$0xff]
        %1271 = vrot.lane.b32.xlu0 %v1098, 17
        %v1272 = vpop.permute.xlu0 %1271
        %1273 = vrot.lane.b32.xlu0 %v1099, 17
        %v1274 = vpop.permute.xlu0 %1273
        %1275 = vrot.lane.b32.xlu0 %v1100, 17
        %v1276 = vpop.permute.xlu0 %1275
        %v1277 = vsel %vm475, %v1272, %v1274
        %v1278 = vsel %vm475, %v1274, %v1276
        %v1280 = vsel %vm475, 0.0, %v1272
        %v1282 = vsel %vm1127, %v1270, 0
        %v1285 = vsel %vm1131, %v1280, 0
        %v1287 = vsel %vm1131, %v1277, 0
        %v1289 = vsel %vm1131, %v1278, 0
        %1291 = vmatpush.msra.mxu0 0.0
        %1292 = vmatpush.msra.mxu0 0.0
        %1293 = vmatpush.msra.mxu0 0.0
        %1294 = vmatpush.msra.mxu0 0.0
        %1295 = vmatpush.msra.mxu0 0.0
        %1296 = vmatpush.msra.mxu0 0.0
        %1297 = vmatpush.msra.mxu0 0.0
        %1298 = vmatpush.msra.mxu0 0.0
        %1299 = vmatpush.msra.mxu0 0.0
        %1300 = vmatpush.msra.mxu0 0.0
        %1301 = vmatpush.msra.mxu0 0.0
        %1302 = vmatpush.msra.mxu0 0.0
        %1303 = vmatpush.msra.mxu0 0.0
        %1304 = vmatpush.msra.mxu0 0.0
        %1305 = vmatpush.msra.mxu0 0.0
        %1306 = vmatpush.msra.mxu0 %v1285
        %1307 = vmatmul.f32.gmra.mxu0 %v1282
        %v1308 = vpop.f32.mrf.mxu0
        %v1309 = vadd.f32 0.0, %v1308
        %1310 = vdwg.mxu0
        %1311 = vmatpush.msra.mxu0 0.0
        %1312 = vmatpush.msra.mxu0 0.0
        %1313 = vmatpush.msra.mxu0 0.0
        %1314 = vmatpush.msra.mxu0 0.0
        %1315 = vmatpush.msra.mxu0 0.0
        %1316 = vmatpush.msra.mxu0 0.0
        %1317 = vmatpush.msra.mxu0 0.0
        %1318 = vmatpush.msra.mxu0 0.0
        %1319 = vmatpush.msra.mxu0 0.0
        %1320 = vmatpush.msra.mxu0 0.0
        %1321 = vmatpush.msra.mxu0 0.0
        %1322 = vmatpush.msra.mxu0 0.0
        %1323 = vmatpush.msra.mxu0 0.0
        %1324 = vmatpush.msra.mxu0 0.0
        %1325 = vmatpush.msra.mxu0 0.0
        %1326 = vmatpush.msra.mxu0 %v1287
        %1327 = vmatmul.f32.gmra.mxu0 %v1282
        %v1328 = vpop.f32.mrf.mxu0
        %v1329 = vadd.f32 0.0, %v1328
        %1330 = vdwg.mxu0
        %1331 = vmatpush.msra.mxu0 0.0
        %1332 = vmatpush.msra.mxu0 0.0
        %1333 = vmatpush.msra.mxu0 0.0
        %1334 = vmatpush.msra.mxu0 0.0
        %1335 = vmatpush.msra.mxu0 0.0
        %1336 = vmatpush.msra.mxu0 0.0
        %1337 = vmatpush.msra.mxu0 0.0
        %1338 = vmatpush.msra.mxu0 0.0
        %1339 = vmatpush.msra.mxu0 0.0
        %1340 = vmatpush.msra.mxu0 0.0
        %1341 = vmatpush.msra.mxu0 0.0
        %1342 = vmatpush.msra.mxu0 0.0
        %1343 = vmatpush.msra.mxu0 0.0
        %1344 = vmatpush.msra.mxu0 0.0
        %1345 = vmatpush.msra.mxu0 0.0
        %1346 = vmatpush.msra.mxu0 %v1289
        %1347 = vmatmul.f32.gmra.mxu0 %v1282
        %v1348 = vpop.f32.mrf.mxu0
        %v1349 = vadd.f32 0.0, %v1348
        %1350 = vdwg.mxu0
        %v1351 = vadd.f32 %v1227, %v1309
        %v1352 = vadd.f32 %v1247, %v1329
        %v1353 = vadd.f32 %v1267, %v1349
        %s1354 = scalar_lea.vmem %s4, 24
        %v1355 = vld [vmem:[%s1354] sm:$0xff]
        %1356 = vrot.lane.b32.xlu0 %v1098, 1
        %v1357 = vpop.permute.xlu0 %1356
        %1358 = vrot.lane.b32.xlu0 %v1099, 1
        %v1359 = vpop.permute.xlu0 %1358
        %1360 = vrot.lane.b32.xlu0 %v1100, 1
        %v1361 = vpop.permute.xlu0 %1360
        %v1362 = vsel %vm556, %v1357, %v1359
        %v1363 = vsel %vm556, %v1359, %v1361
        %v1365 = vsel %vm556, 0.0, %v1357
        %v1367 = vsel %vm1127, %v1355, 0
        %v1370 = vsel %vm1131, %v1365, 0
        %v1372 = vsel %vm1131, %v1362, 0
        %v1374 = vsel %vm1131, %v1363, 0
        %1376 = vmatpush.msra.mxu0 0.0
        %1377 = vmatpush.msra.mxu0 0.0
        %1378 = vmatpush.msra.mxu0 0.0
        %1379 = vmatpush.msra.mxu0 0.0
        %1380 = vmatpush.msra.mxu0 0.0
        %1381 = vmatpush.msra.mxu0 0.0
        %1382 = vmatpush.msra.mxu0 0.0
        %1383 = vmatpush.msra.mxu0 0.0
        %1384 = vmatpush.msra.mxu0 0.0
        %1385 = vmatpush.msra.mxu0 0.0
        %1386 = vmatpush.msra.mxu0 0.0
        %1387 = vmatpush.msra.mxu0 0.0
        %1388 = vmatpush.msra.mxu0 0.0
        %1389 = vmatpush.msra.mxu0 0.0
        %1390 = vmatpush.msra.mxu0 0.0
        %1391 = vmatpush.msra.mxu0 %v1370
        %1392 = vmatmul.f32.gmra.mxu0 %v1367
        %v1393 = vpop.f32.mrf.mxu0
        %v1394 = vadd.f32 0.0, %v1393
        %1395 = vdwg.mxu0
        %1396 = vmatpush.msra.mxu0 0.0
        %1397 = vmatpush.msra.mxu0 0.0
        %1398 = vmatpush.msra.mxu0 0.0
        %1399 = vmatpush.msra.mxu0 0.0
        %1400 = vmatpush.msra.mxu0 0.0
        %1401 = vmatpush.msra.mxu0 0.0
        %1402 = vmatpush.msra.mxu0 0.0
        %1403 = vmatpush.msra.mxu0 0.0
        %1404 = vmatpush.msra.mxu0 0.0
        %1405 = vmatpush.msra.mxu0 0.0
        %1406 = vmatpush.msra.mxu0 0.0
        %1407 = vmatpush.msra.mxu0 0.0
        %1408 = vmatpush.msra.mxu0 0.0
        %1409 = vmatpush.msra.mxu0 0.0
        %1410 = vmatpush.msra.mxu0 0.0
        %1411 = vmatpush.msra.mxu0 %v1372
        %1412 = vmatmul.f32.gmra.mxu0 %v1367
        %v1413 = vpop.f32.mrf.mxu0
        %v1414 = vadd.f32 0.0, %v1413
        %1415 = vdwg.mxu0
        %1416 = vmatpush.msra.mxu0 0.0
        %1417 = vmatpush.msra.mxu0 0.0
        %1418 = vmatpush.msra.mxu0 0.0
        %1419 = vmatpush.msra.mxu0 0.0
        %1420 = vmatpush.msra.mxu0 0.0
        %1421 = vmatpush.msra.mxu0 0.0
        %1422 = vmatpush.msra.mxu0 0.0
        %1423 = vmatpush.msra.mxu0 0.0
        %1424 = vmatpush.msra.mxu0 0.0
        %1425 = vmatpush.msra.mxu0 0.0
        %1426 = vmatpush.msra.mxu0 0.0
        %1427 = vmatpush.msra.mxu0 0.0
        %1428 = vmatpush.msra.mxu0 0.0
        %1429 = vmatpush.msra.mxu0 0.0
        %1430 = vmatpush.msra.mxu0 0.0
        %1431 = vmatpush.msra.mxu0 %v1374
        %1432 = vmatmul.f32.gmra.mxu0 %v1367
        %v1433 = vpop.f32.mrf.mxu0
        %v1434 = vadd.f32 0.0, %v1433
        %1435 = vdwg.mxu0
        %v1436 = vadd.f32 %v1351, %v1394
        %v1437 = vadd.f32 %v1352, %v1414
        %v1438 = vadd.f32 %v1353, %v1434
        %s1439 = scalar_lea.vmem %s4, 32
        %v1440 = vld [vmem:[%s1439] sm:$0xff]
        %v1442 = vsel %vm1127, %v1440, 0
        %v1444 = vsel %vm1131, %v1098, 0
        %v1446 = vsel %vm1131, %v1099, 0
        %v1448 = vsel %vm1131, %v1100, 0
        %1450 = vmatpush.msra.mxu0 0.0
        %1451 = vmatpush.msra.mxu0 0.0
        %1452 = vmatpush.msra.mxu0 0.0
        %1453 = vmatpush.msra.mxu0 0.0
        %1454 = vmatpush.msra.mxu0 0.0
        %1455 = vmatpush.msra.mxu0 0.0
        %1456 = vmatpush.msra.mxu0 0.0
        %1457 = vmatpush.msra.mxu0 0.0
        %1458 = vmatpush.msra.mxu0 0.0
        %1459 = vmatpush.msra.mxu0 0.0
        %1460 = vmatpush.msra.mxu0 0.0
        %1461 = vmatpush.msra.mxu0 0.0
        %1462 = vmatpush.msra.mxu0 0.0
        %1463 = vmatpush.msra.mxu0 0.0
        %1464 = vmatpush.msra.mxu0 0.0
        %1465 = vmatpush.msra.mxu0 %v1444
        %1466 = vmatmul.f32.gmra.mxu0 %v1442
        %v1467 = vpop.f32.mrf.mxu0
        %v1468 = vadd.f32 0.0, %v1467
        %1469 = vdwg.mxu0
        %1470 = vmatpush.msra.mxu0 0.0
        %1471 = vmatpush.msra.mxu0 0.0
        %1472 = vmatpush.msra.mxu0 0.0
        %1473 = vmatpush.msra.mxu0 0.0
        %1474 = vmatpush.msra.mxu0 0.0
        %1475 = vmatpush.msra.mxu0 0.0
        %1476 = vmatpush.msra.mxu0 0.0
        %1477 = vmatpush.msra.mxu0 0.0
        %1478 = vmatpush.msra.mxu0 0.0
        %1479 = vmatpush.msra.mxu0 0.0
        %1480 = vmatpush.msra.mxu0 0.0
        %1481 = vmatpush.msra.mxu0 0.0
        %1482 = vmatpush.msra.mxu0 0.0
        %1483 = vmatpush.msra.mxu0 0.0
        %1484 = vmatpush.msra.mxu0 0.0
        %1485 = vmatpush.msra.mxu0 %v1446
        %1486 = vmatmul.f32.gmra.mxu0 %v1442
        %v1487 = vpop.f32.mrf.mxu0
        %v1488 = vadd.f32 0.0, %v1487
        %1489 = vdwg.mxu0
        %1490 = vmatpush.msra.mxu0 0.0
        %1491 = vmatpush.msra.mxu0 0.0
        %1492 = vmatpush.msra.mxu0 0.0
        %1493 = vmatpush.msra.mxu0 0.0
        %1494 = vmatpush.msra.mxu0 0.0
        %1495 = vmatpush.msra.mxu0 0.0
        %1496 = vmatpush.msra.mxu0 0.0
        %1497 = vmatpush.msra.mxu0 0.0
        %1498 = vmatpush.msra.mxu0 0.0
        %1499 = vmatpush.msra.mxu0 0.0
        %1500 = vmatpush.msra.mxu0 0.0
        %1501 = vmatpush.msra.mxu0 0.0
        %1502 = vmatpush.msra.mxu0 0.0
        %1503 = vmatpush.msra.mxu0 0.0
        %1504 = vmatpush.msra.mxu0 0.0
        %1505 = vmatpush.msra.mxu0 %v1448
        %1506 = vmatmul.f32.gmra.mxu0 %v1442
        %v1507 = vpop.f32.mrf.mxu0
        %v1508 = vadd.f32 0.0, %v1507
        %1509 = vdwg.mxu0
        %v1510 = vadd.f32 %v1436, %v1468
        %v1511 = vadd.f32 %v1437, %v1488
        %v1512 = vadd.f32 %v1438, %v1508
        %s1513 = scalar_lea.vmem %s4, 40
        %v1514 = vld [vmem:[%s1513] sm:$0xff]
        %1515 = vrot.lane.b32.xlu0 %v1098, 127
        %v1516 = vpop.permute.xlu0 %1515
        %1517 = vrot.lane.b32.xlu0 %v1099, 127
        %v1518 = vpop.permute.xlu0 %1517
        %1519 = vrot.lane.b32.xlu0 %v1100, 127
        %v1520 = vpop.permute.xlu0 %1519
        %v1521 = vsel %vm705, %v1516, %v1518
        %v1522 = vsel %vm705, %v1518, %v1520
        %v1524 = vsel %vm705, %v1520, 0.0
        %v1526 = vsel %vm1127, %v1514, 0
        %v1528 = vsel %vm1131, %v1521, 0
        %v1530 = vsel %vm1131, %v1522, 0
        %v1533 = vsel %vm1131, %v1524, 0
        %1535 = vmatpush.msra.mxu0 0.0
        %1536 = vmatpush.msra.mxu0 0.0
        %1537 = vmatpush.msra.mxu0 0.0
        %1538 = vmatpush.msra.mxu0 0.0
        %1539 = vmatpush.msra.mxu0 0.0
        %1540 = vmatpush.msra.mxu0 0.0
        %1541 = vmatpush.msra.mxu0 0.0
        %1542 = vmatpush.msra.mxu0 0.0
        %1543 = vmatpush.msra.mxu0 0.0
        %1544 = vmatpush.msra.mxu0 0.0
        %1545 = vmatpush.msra.mxu0 0.0
        %1546 = vmatpush.msra.mxu0 0.0
        %1547 = vmatpush.msra.mxu0 0.0
        %1548 = vmatpush.msra.mxu0 0.0
        %1549 = vmatpush.msra.mxu0 0.0
        %1550 = vmatpush.msra.mxu0 %v1528
        %1551 = vmatmul.f32.gmra.mxu0 %v1526
        %v1552 = vpop.f32.mrf.mxu0
        %v1553 = vadd.f32 0.0, %v1552
        %1554 = vdwg.mxu0
        %1555 = vmatpush.msra.mxu0 0.0
        %1556 = vmatpush.msra.mxu0 0.0
        %1557 = vmatpush.msra.mxu0 0.0
        %1558 = vmatpush.msra.mxu0 0.0
        %1559 = vmatpush.msra.mxu0 0.0
        %1560 = vmatpush.msra.mxu0 0.0
        %1561 = vmatpush.msra.mxu0 0.0
        %1562 = vmatpush.msra.mxu0 0.0
        %1563 = vmatpush.msra.mxu0 0.0
        %1564 = vmatpush.msra.mxu0 0.0
        %1565 = vmatpush.msra.mxu0 0.0
        %1566 = vmatpush.msra.mxu0 0.0
        %1567 = vmatpush.msra.mxu0 0.0
        %1568 = vmatpush.msra.mxu0 0.0
        %1569 = vmatpush.msra.mxu0 0.0
        %1570 = vmatpush.msra.mxu0 %v1530
        %1571 = vmatmul.f32.gmra.mxu0 %v1526
        %v1572 = vpop.f32.mrf.mxu0
        %v1573 = vadd.f32 0.0, %v1572
        %1574 = vdwg.mxu0
        %1575 = vmatpush.msra.mxu0 0.0
        %1576 = vmatpush.msra.mxu0 0.0
        %1577 = vmatpush.msra.mxu0 0.0
        %1578 = vmatpush.msra.mxu0 0.0
        %1579 = vmatpush.msra.mxu0 0.0
        %1580 = vmatpush.msra.mxu0 0.0
        %1581 = vmatpush.msra.mxu0 0.0
        %1582 = vmatpush.msra.mxu0 0.0
        %1583 = vmatpush.msra.mxu0 0.0
        %1584 = vmatpush.msra.mxu0 0.0
        %1585 = vmatpush.msra.mxu0 0.0
        %1586 = vmatpush.msra.mxu0 0.0
        %1587 = vmatpush.msra.mxu0 0.0
        %1588 = vmatpush.msra.mxu0 0.0
        %1589 = vmatpush.msra.mxu0 0.0
        %1590 = vmatpush.msra.mxu0 %v1533
        %1591 = vmatmul.f32.gmra.mxu0 %v1526
        %v1592 = vpop.f32.mrf.mxu0
        %v1593 = vadd.f32 0.0, %v1592
        %1594 = vdwg.mxu0
        %v1595 = vadd.f32 %v1510, %v1553
        %v1596 = vadd.f32 %v1511, %v1573
        %v1597 = vadd.f32 %v1512, %v1593
        %s1598 = scalar_lea.vmem %s4, 48
        %v1599 = vld [vmem:[%s1598] sm:$0xff]
        %1600 = vrot.lane.b32.xlu0 %v1098, 111
        %v1601 = vpop.permute.xlu0 %1600
        %1602 = vrot.lane.b32.xlu0 %v1099, 111
        %v1603 = vpop.permute.xlu0 %1602
        %1604 = vrot.lane.b32.xlu0 %v1100, 111
        %v1605 = vpop.permute.xlu0 %1604
        %v1606 = vsel %vm786, %v1601, %v1603
        %v1607 = vsel %vm786, %v1603, %v1605
        %v1609 = vsel %vm786, %v1605, 0.0
        %v1611 = vsel %vm1127, %v1599, 0
        %v1613 = vsel %vm1131, %v1606, 0
        %v1615 = vsel %vm1131, %v1607, 0
        %v1618 = vsel %vm1131, %v1609, 0
        %1620 = vmatpush.msra.mxu0 0.0
        %1621 = vmatpush.msra.mxu0 0.0
        %1622 = vmatpush.msra.mxu0 0.0
        %1623 = vmatpush.msra.mxu0 0.0
        %1624 = vmatpush.msra.mxu0 0.0
        %1625 = vmatpush.msra.mxu0 0.0
        %1626 = vmatpush.msra.mxu0 0.0
        %1627 = vmatpush.msra.mxu0 0.0
        %1628 = vmatpush.msra.mxu0 0.0
        %1629 = vmatpush.msra.mxu0 0.0
        %1630 = vmatpush.msra.mxu0 0.0
        %1631 = vmatpush.msra.mxu0 0.0
        %1632 = vmatpush.msra.mxu0 0.0
        %1633 = vmatpush.msra.mxu0 0.0
        %1634 = vmatpush.msra.mxu0 0.0
        %1635 = vmatpush.msra.mxu0 %v1613
        %1636 = vmatmul.f32.gmra.mxu0 %v1611
        %v1637 = vpop.f32.mrf.mxu0
        %v1638 = vadd.f32 0.0, %v1637
        %1639 = vdwg.mxu0
        %1640 = vmatpush.msra.mxu0 0.0
        %1641 = vmatpush.msra.mxu0 0.0
        %1642 = vmatpush.msra.mxu0 0.0
        %1643 = vmatpush.msra.mxu0 0.0
        %1644 = vmatpush.msra.mxu0 0.0
        %1645 = vmatpush.msra.mxu0 0.0
        %1646 = vmatpush.msra.mxu0 0.0
        %1647 = vmatpush.msra.mxu0 0.0
        %1648 = vmatpush.msra.mxu0 0.0
        %1649 = vmatpush.msra.mxu0 0.0
        %1650 = vmatpush.msra.mxu0 0.0
        %1651 = vmatpush.msra.mxu0 0.0
        %1652 = vmatpush.msra.mxu0 0.0
        %1653 = vmatpush.msra.mxu0 0.0
        %1654 = vmatpush.msra.mxu0 0.0
        %1655 = vmatpush.msra.mxu0 %v1615
        %1656 = vmatmul.f32.gmra.mxu0 %v1611
        %v1657 = vpop.f32.mrf.mxu0
        %v1658 = vadd.f32 0.0, %v1657
        %1659 = vdwg.mxu0
        %1660 = vmatpush.msra.mxu0 0.0
        %1661 = vmatpush.msra.mxu0 0.0
        %1662 = vmatpush.msra.mxu0 0.0
        %1663 = vmatpush.msra.mxu0 0.0
        %1664 = vmatpush.msra.mxu0 0.0
        %1665 = vmatpush.msra.mxu0 0.0
        %1666 = vmatpush.msra.mxu0 0.0
        %1667 = vmatpush.msra.mxu0 0.0
        %1668 = vmatpush.msra.mxu0 0.0
        %1669 = vmatpush.msra.mxu0 0.0
        %1670 = vmatpush.msra.mxu0 0.0
        %1671 = vmatpush.msra.mxu0 0.0
        %1672 = vmatpush.msra.mxu0 0.0
        %1673 = vmatpush.msra.mxu0 0.0
        %1674 = vmatpush.msra.mxu0 0.0
        %1675 = vmatpush.msra.mxu0 %v1618
        %1676 = vmatmul.f32.gmra.mxu0 %v1611
        %v1677 = vpop.f32.mrf.mxu0
        %v1678 = vadd.f32 0.0, %v1677
        %1679 = vdwg.mxu0
        %v1680 = vadd.f32 %v1595, %v1638
        %v1681 = vadd.f32 %v1596, %v1658
        %v1682 = vadd.f32 %v1597, %v1678
        %s1683 = scalar_lea.vmem %s4, 56
        %v1684 = vld [vmem:[%s1683] sm:$0xff]
        %1685 = vrot.lane.b32.xlu0 %v1098, 110
        %v1686 = vpop.permute.xlu0 %1685
        %1687 = vrot.lane.b32.xlu0 %v1099, 110
        %v1688 = vpop.permute.xlu0 %1687
        %1689 = vrot.lane.b32.xlu0 %v1100, 110
        %v1690 = vpop.permute.xlu0 %1689
        %v1691 = vsel %vm867, %v1686, %v1688
        %v1692 = vsel %vm867, %v1688, %v1690
        %v1694 = vsel %vm867, %v1690, 0.0
        %v1696 = vsel %vm1127, %v1684, 0
        %v1698 = vsel %vm1131, %v1691, 0
        %v1700 = vsel %vm1131, %v1692, 0
        %v1703 = vsel %vm1131, %v1694, 0
        %1705 = vmatpush.msra.mxu0 0.0
        %1706 = vmatpush.msra.mxu0 0.0
        %1707 = vmatpush.msra.mxu0 0.0
        %1708 = vmatpush.msra.mxu0 0.0
        %1709 = vmatpush.msra.mxu0 0.0
        %1710 = vmatpush.msra.mxu0 0.0
        %1711 = vmatpush.msra.mxu0 0.0
        %1712 = vmatpush.msra.mxu0 0.0
        %1713 = vmatpush.msra.mxu0 0.0
        %1714 = vmatpush.msra.mxu0 0.0
        %1715 = vmatpush.msra.mxu0 0.0
        %1716 = vmatpush.msra.mxu0 0.0
        %1717 = vmatpush.msra.mxu0 0.0
        %1718 = vmatpush.msra.mxu0 0.0
        %1719 = vmatpush.msra.mxu0 0.0
        %1720 = vmatpush.msra.mxu0 %v1698
        %1721 = vmatmul.f32.gmra.mxu0 %v1696
        %v1722 = vpop.f32.mrf.mxu0
        %v1723 = vadd.f32 0.0, %v1722
        %1724 = vdwg.mxu0
        %1725 = vmatpush.msra.mxu0 0.0
        %1726 = vmatpush.msra.mxu0 0.0
        %1727 = vmatpush.msra.mxu0 0.0
        %1728 = vmatpush.msra.mxu0 0.0
        %1729 = vmatpush.msra.mxu0 0.0
        %1730 = vmatpush.msra.mxu0 0.0
        %1731 = vmatpush.msra.mxu0 0.0
        %1732 = vmatpush.msra.mxu0 0.0
        %1733 = vmatpush.msra.mxu0 0.0
        %1734 = vmatpush.msra.mxu0 0.0
        %1735 = vmatpush.msra.mxu0 0.0
        %1736 = vmatpush.msra.mxu0 0.0
        %1737 = vmatpush.msra.mxu0 0.0
        %1738 = vmatpush.msra.mxu0 0.0
        %1739 = vmatpush.msra.mxu0 0.0
        %1740 = vmatpush.msra.mxu0 %v1700
        %1741 = vmatmul.f32.gmra.mxu0 %v1696
        %v1742 = vpop.f32.mrf.mxu0
        %v1743 = vadd.f32 0.0, %v1742
        %1744 = vdwg.mxu0
        %1745 = vmatpush.msra.mxu0 0.0
        %1746 = vmatpush.msra.mxu0 0.0
        %1747 = vmatpush.msra.mxu0 0.0
        %1748 = vmatpush.msra.mxu0 0.0
        %1749 = vmatpush.msra.mxu0 0.0
        %1750 = vmatpush.msra.mxu0 0.0
        %1751 = vmatpush.msra.mxu0 0.0
        %1752 = vmatpush.msra.mxu0 0.0
        %1753 = vmatpush.msra.mxu0 0.0
        %1754 = vmatpush.msra.mxu0 0.0
        %1755 = vmatpush.msra.mxu0 0.0
        %1756 = vmatpush.msra.mxu0 0.0
        %1757 = vmatpush.msra.mxu0 0.0
        %1758 = vmatpush.msra.mxu0 0.0
        %1759 = vmatpush.msra.mxu0 0.0
        %1760 = vmatpush.msra.mxu0 %v1703
        %1761 = vmatmul.f32.gmra.mxu0 %v1696
        %v1762 = vpop.f32.mrf.mxu0
        %v1763 = vadd.f32 0.0, %v1762
        %1764 = vdwg.mxu0
        %v1765 = vadd.f32 %v1680, %v1723
        %v1766 = vadd.f32 %v1681, %v1743
        %v1767 = vadd.f32 %v1682, %v1763
        %s1768 = scalar_lea.vmem %s4, 64
        %v1769 = vld [vmem:[%s1768] sm:$0xff]
        %1770 = vrot.lane.b32.xlu0 %v1098, 109
        %v1771 = vpop.permute.xlu0 %1770
        %1772 = vrot.lane.b32.xlu0 %v1099, 109
        %v1773 = vpop.permute.xlu0 %1772
        %1774 = vrot.lane.b32.xlu0 %v1100, 109
        %v1775 = vpop.permute.xlu0 %1774
        %v1776 = vsel %vm948, %v1771, %v1773
        %v1777 = vsel %vm948, %v1773, %v1775
        %v1779 = vsel %vm948, %v1775, 0.0
        %v1781 = vsel %vm1127, %v1769, 0
        %v1783 = vsel %vm1131, %v1776, 0
        %v1785 = vsel %vm1131, %v1777, 0
        %v1788 = vsel %vm1131, %v1779, 0
        %1790 = vmatpush.msra.mxu0 0.0
        %1791 = vmatpush.msra.mxu0 0.0
        %1792 = vmatpush.msra.mxu0 0.0
        %1793 = vmatpush.msra.mxu0 0.0
        %1794 = vmatpush.msra.mxu0 0.0
        %1795 = vmatpush.msra.mxu0 0.0
        %1796 = vmatpush.msra.mxu0 0.0
        %1797 = vmatpush.msra.mxu0 0.0
        %1798 = vmatpush.msra.mxu0 0.0
        %1799 = vmatpush.msra.mxu0 0.0
        %1800 = vmatpush.msra.mxu0 0.0
        %1801 = vmatpush.msra.mxu0 0.0
        %1802 = vmatpush.msra.mxu0 0.0
        %1803 = vmatpush.msra.mxu0 0.0
        %1804 = vmatpush.msra.mxu0 0.0
        %1805 = vmatpush.msra.mxu0 %v1783
        %1806 = vmatmul.f32.gmra.mxu0 %v1781
        %v1807 = vpop.f32.mrf.mxu0
        %v1808 = vadd.f32 0.0, %v1807
        %1809 = vdwg.mxu0
        %1810 = vmatpush.msra.mxu0 0.0
        %1811 = vmatpush.msra.mxu0 0.0
        %1812 = vmatpush.msra.mxu0 0.0
        %1813 = vmatpush.msra.mxu0 0.0
        %1814 = vmatpush.msra.mxu0 0.0
        %1815 = vmatpush.msra.mxu0 0.0
        %1816 = vmatpush.msra.mxu0 0.0
        %1817 = vmatpush.msra.mxu0 0.0
        %1818 = vmatpush.msra.mxu0 0.0
        %1819 = vmatpush.msra.mxu0 0.0
        %1820 = vmatpush.msra.mxu0 0.0
        %1821 = vmatpush.msra.mxu0 0.0
        %1822 = vmatpush.msra.mxu0 0.0
        %1823 = vmatpush.msra.mxu0 0.0
        %1824 = vmatpush.msra.mxu0 0.0
        %1825 = vmatpush.msra.mxu0 %v1785
        %1826 = vmatmul.f32.gmra.mxu0 %v1781
        %v1827 = vpop.f32.mrf.mxu0
        %v1828 = vadd.f32 0.0, %v1827
        %1829 = vdwg.mxu0
        %1830 = vmatpush.msra.mxu0 0.0
        %1831 = vmatpush.msra.mxu0 0.0
        %1832 = vmatpush.msra.mxu0 0.0
        %1833 = vmatpush.msra.mxu0 0.0
        %1834 = vmatpush.msra.mxu0 0.0
        %1835 = vmatpush.msra.mxu0 0.0
        %1836 = vmatpush.msra.mxu0 0.0
        %1837 = vmatpush.msra.mxu0 0.0
        %1838 = vmatpush.msra.mxu0 0.0
        %1839 = vmatpush.msra.mxu0 0.0
        %1840 = vmatpush.msra.mxu0 0.0
        %1841 = vmatpush.msra.mxu0 0.0
        %1842 = vmatpush.msra.mxu0 0.0
        %1843 = vmatpush.msra.mxu0 0.0
        %1844 = vmatpush.msra.mxu0 0.0
        %1845 = vmatpush.msra.mxu0 %v1788
        %1846 = vmatmul.f32.gmra.mxu0 %v1781
        %v1847 = vpop.f32.mrf.mxu0
        %v1848 = vadd.f32 0.0, %v1847
        %1849 = vdwg.mxu0
        %v1850 = vadd.f32 %v1765, %v1808
        %v1851 = vadd.f32 %v1766, %v1828
        %v1852 = vadd.f32 %v1767, %v1848
        %v1853 = vmax.f32 %v1850, 0.0
        %v1854 = vmax.f32 %v1851, 0.0
        %v1855 = vmax.f32 %v1852, 0.0
        %v1856 = vmul.f32 %v1853, %v1092
        %v1857 = vmul.f32 %v1854, %v1093
        %v1858 = vmul.f32 %v1855, %v1094
        %v1859 = vadd.f32 %v305, %v1856
        %v1860 = vadd.f32 %v306, %v1857
        %v1861 = vadd.f32 %v307, %v1858
        %v1862 = vld [vmem:[%s5] sm:$0xf]
        %1866 = vrot.lane.b32.xlu0 %v1859, 19
        %v1867 = vpop.permute.xlu0 %1866
        %1868 = vrot.lane.b32.xlu0 %v1860, 19
        %v1869 = vpop.permute.xlu0 %1868
        %1870 = vrot.lane.b32.xlu0 %v1861, 19
        %v1871 = vpop.permute.xlu0 %1870
        %v1872 = vsel %vm318, %v1867, %v1869
        %v1873 = vsel %vm318, %v1869, %v1871
        %v1877 = vsel %vm318, 0.0, %v1867
        %s1878 = scalar_lea.vmem %s5, 4
        %v1879 = vld [vmem:[%s1878] sm:$0xf]
        %1880 = vrot.lane.b32.xlu0 %v1859, 18
        %v1881 = vpop.permute.xlu0 %1880
        %1882 = vrot.lane.b32.xlu0 %v1860, 18
        %v1883 = vpop.permute.xlu0 %1882
        %1884 = vrot.lane.b32.xlu0 %v1861, 18
        %v1885 = vpop.permute.xlu0 %1884
        %v1886 = vsel %vm333, %v1881, %v1883
        %v1887 = vsel %vm333, %v1883, %v1885
        %v1891 = vsel %vm333, 0.0, %v1881
        %v1893 = vsel %vm340, %v1879, 0
        %1895 = vmatpush.msra.mxu0 0.0
        %1896 = vmatpush.msra.mxu0 0.0
        %1897 = vmatpush.msra.mxu0 0.0
        %1898 = vmatpush.msra.mxu0 0.0
        %1899 = vmatpush.msra.mxu0 0.0
        %1900 = vmatpush.msra.mxu0 0.0
        %1901 = vmatpush.msra.mxu0 0.0
        %1902 = vmatpush.msra.mxu0 0.0
        %1903 = vmatpush.msra.mxu0 0.0
        %1904 = vmatpush.msra.mxu0 0.0
        %1905 = vmatpush.msra.mxu0 0.0
        %1906 = vmatpush.msra.mxu0 0.0
        %1907 = vmatpush.msra.mxu0 0.0
        %1908 = vmatpush.msra.mxu0 0.0
        %1909 = vmatpush.msra.mxu0 0.0
        %1910 = vmatpush.msra.mxu0 %v1891
        %1911 = vmatmul.f32.gmra.mxu0 %v1893
        %v1912 = vpop.f32.mrf.mxu0
        %v1913 = vadd.f32 0.0, %v1912
        %1914 = vdwg.mxu0
        %1915 = vmatpush.msra.mxu0 0.0
        %1916 = vmatpush.msra.mxu0 0.0
        %1917 = vmatpush.msra.mxu0 0.0
        %1918 = vmatpush.msra.mxu0 0.0
        %1919 = vmatpush.msra.mxu0 0.0
        %1920 = vmatpush.msra.mxu0 0.0
        %1921 = vmatpush.msra.mxu0 0.0
        %1922 = vmatpush.msra.mxu0 0.0
        %1923 = vmatpush.msra.mxu0 0.0
        %1924 = vmatpush.msra.mxu0 0.0
        %1925 = vmatpush.msra.mxu0 0.0
        %1926 = vmatpush.msra.mxu0 0.0
        %1927 = vmatpush.msra.mxu0 0.0
        %1928 = vmatpush.msra.mxu0 0.0
        %1929 = vmatpush.msra.mxu0 0.0
        %1930 = vmatpush.msra.mxu0 %v1886
        %1931 = vmatmul.f32.gmra.mxu0 %v1893
        %v1932 = vpop.f32.mrf.mxu0
        %v1933 = vadd.f32 0.0, %v1932
        %1934 = vdwg.mxu0
        %1935 = vmatpush.msra.mxu0 0.0
        %1936 = vmatpush.msra.mxu0 0.0
        %1937 = vmatpush.msra.mxu0 0.0
        %1938 = vmatpush.msra.mxu0 0.0
        %1939 = vmatpush.msra.mxu0 0.0
        %1940 = vmatpush.msra.mxu0 0.0
        %1941 = vmatpush.msra.mxu0 0.0
        %1942 = vmatpush.msra.mxu0 0.0
        %1943 = vmatpush.msra.mxu0 0.0
        %1944 = vmatpush.msra.mxu0 0.0
        %1945 = vmatpush.msra.mxu0 0.0
        %1946 = vmatpush.msra.mxu0 0.0
        %1947 = vmatpush.msra.mxu0 0.0
        %1948 = vmatpush.msra.mxu0 0.0
        %1949 = vmatpush.msra.mxu0 0.0
        %1950 = vmatpush.msra.mxu0 %v1887
        %1951 = vmatmul.f32.gmra.mxu0 %v1893
        %v1952 = vpop.f32.mrf.mxu0
        %v1953 = vadd.f32 0.0, %v1952
        %1954 = vdwg.mxu0
        %v1956 = vsel %vm340, %v1862, 0
        %1958 = vmatpush.msra.mxu0 0.0
        %1959 = vmatpush.msra.mxu0 0.0
        %1960 = vmatpush.msra.mxu0 0.0
        %1961 = vmatpush.msra.mxu0 0.0
        %1962 = vmatpush.msra.mxu0 0.0
        %1963 = vmatpush.msra.mxu0 0.0
        %1964 = vmatpush.msra.mxu0 0.0
        %1965 = vmatpush.msra.mxu0 0.0
        %1966 = vmatpush.msra.mxu0 0.0
        %1967 = vmatpush.msra.mxu0 0.0
        %1968 = vmatpush.msra.mxu0 0.0
        %1969 = vmatpush.msra.mxu0 0.0
        %1970 = vmatpush.msra.mxu0 0.0
        %1971 = vmatpush.msra.mxu0 0.0
        %1972 = vmatpush.msra.mxu0 0.0
        %1973 = vmatpush.msra.mxu0 %v1877
        %1974 = vmatmul.f32.gmra.mxu0 %v1956
        %v1975 = vpop.f32.mrf.mxu0
        %v1976 = vadd.f32 %v1913, %v1975
        %1977 = vdwg.mxu0
        %1978 = vmatpush.msra.mxu0 0.0
        %1979 = vmatpush.msra.mxu0 0.0
        %1980 = vmatpush.msra.mxu0 0.0
        %1981 = vmatpush.msra.mxu0 0.0
        %1982 = vmatpush.msra.mxu0 0.0
        %1983 = vmatpush.msra.mxu0 0.0
        %1984 = vmatpush.msra.mxu0 0.0
        %1985 = vmatpush.msra.mxu0 0.0
        %1986 = vmatpush.msra.mxu0 0.0
        %1987 = vmatpush.msra.mxu0 0.0
        %1988 = vmatpush.msra.mxu0 0.0
        %1989 = vmatpush.msra.mxu0 0.0
        %1990 = vmatpush.msra.mxu0 0.0
        %1991 = vmatpush.msra.mxu0 0.0
        %1992 = vmatpush.msra.mxu0 0.0
        %1993 = vmatpush.msra.mxu0 %v1872
        %1994 = vmatmul.f32.gmra.mxu0 %v1956
        %v1995 = vpop.f32.mrf.mxu0
        %v1996 = vadd.f32 %v1933, %v1995
        %1997 = vdwg.mxu0
        %1998 = vmatpush.msra.mxu0 0.0
        %1999 = vmatpush.msra.mxu0 0.0
        %2000 = vmatpush.msra.mxu0 0.0
        %2001 = vmatpush.msra.mxu0 0.0
        %2002 = vmatpush.msra.mxu0 0.0
        %2003 = vmatpush.msra.mxu0 0.0
        %2004 = vmatpush.msra.mxu0 0.0
        %2005 = vmatpush.msra.mxu0 0.0
        %2006 = vmatpush.msra.mxu0 0.0
        %2007 = vmatpush.msra.mxu0 0.0
        %2008 = vmatpush.msra.mxu0 0.0
        %2009 = vmatpush.msra.mxu0 0.0
        %2010 = vmatpush.msra.mxu0 0.0
        %2011 = vmatpush.msra.mxu0 0.0
        %2012 = vmatpush.msra.mxu0 0.0
        %2013 = vmatpush.msra.mxu0 %v1873
        %2014 = vmatmul.f32.gmra.mxu0 %v1956
        %v2015 = vpop.f32.mrf.mxu0
        %v2016 = vadd.f32 %v1953, %v2015
        %2017 = vdwg.mxu0
        %s2018 = scalar_lea.vmem %s5, 8
        %v2019 = vld [vmem:[%s2018] sm:$0xf]
        %2020 = vrot.lane.b32.xlu0 %v1859, 17
        %v2021 = vpop.permute.xlu0 %2020
        %2022 = vrot.lane.b32.xlu0 %v1860, 17
        %v2023 = vpop.permute.xlu0 %2022
        %2024 = vrot.lane.b32.xlu0 %v1861, 17
        %v2025 = vpop.permute.xlu0 %2024
        %v2026 = vsel %vm475, %v2021, %v2023
        %v2027 = vsel %vm475, %v2023, %v2025
        %v2031 = vsel %vm475, 0.0, %v2021
        %v2033 = vsel %vm340, %v2019, 0
        %2035 = vmatpush.msra.mxu0 0.0
        %2036 = vmatpush.msra.mxu0 0.0
        %2037 = vmatpush.msra.mxu0 0.0
        %2038 = vmatpush.msra.mxu0 0.0
        %2039 = vmatpush.msra.mxu0 0.0
        %2040 = vmatpush.msra.mxu0 0.0
        %2041 = vmatpush.msra.mxu0 0.0
        %2042 = vmatpush.msra.mxu0 0.0
        %2043 = vmatpush.msra.mxu0 0.0
        %2044 = vmatpush.msra.mxu0 0.0
        %2045 = vmatpush.msra.mxu0 0.0
        %2046 = vmatpush.msra.mxu0 0.0
        %2047 = vmatpush.msra.mxu0 0.0
        %2048 = vmatpush.msra.mxu0 0.0
        %2049 = vmatpush.msra.mxu0 0.0
        %2050 = vmatpush.msra.mxu0 %v2031
        %2051 = vmatmul.f32.gmra.mxu0 %v2033
        %v2052 = vpop.f32.mrf.mxu0
        %v2053 = vadd.f32 0.0, %v2052
        %2054 = vdwg.mxu0
        %2055 = vmatpush.msra.mxu0 0.0
        %2056 = vmatpush.msra.mxu0 0.0
        %2057 = vmatpush.msra.mxu0 0.0
        %2058 = vmatpush.msra.mxu0 0.0
        %2059 = vmatpush.msra.mxu0 0.0
        %2060 = vmatpush.msra.mxu0 0.0
        %2061 = vmatpush.msra.mxu0 0.0
        %2062 = vmatpush.msra.mxu0 0.0
        %2063 = vmatpush.msra.mxu0 0.0
        %2064 = vmatpush.msra.mxu0 0.0
        %2065 = vmatpush.msra.mxu0 0.0
        %2066 = vmatpush.msra.mxu0 0.0
        %2067 = vmatpush.msra.mxu0 0.0
        %2068 = vmatpush.msra.mxu0 0.0
        %2069 = vmatpush.msra.mxu0 0.0
        %2070 = vmatpush.msra.mxu0 %v2026
        %2071 = vmatmul.f32.gmra.mxu0 %v2033
        %v2072 = vpop.f32.mrf.mxu0
        %v2073 = vadd.f32 0.0, %v2072
        %2074 = vdwg.mxu0
        %2075 = vmatpush.msra.mxu0 0.0
        %2076 = vmatpush.msra.mxu0 0.0
        %2077 = vmatpush.msra.mxu0 0.0
        %2078 = vmatpush.msra.mxu0 0.0
        %2079 = vmatpush.msra.mxu0 0.0
        %2080 = vmatpush.msra.mxu0 0.0
        %2081 = vmatpush.msra.mxu0 0.0
        %2082 = vmatpush.msra.mxu0 0.0
        %2083 = vmatpush.msra.mxu0 0.0
        %2084 = vmatpush.msra.mxu0 0.0
        %2085 = vmatpush.msra.mxu0 0.0
        %2086 = vmatpush.msra.mxu0 0.0
        %2087 = vmatpush.msra.mxu0 0.0
        %2088 = vmatpush.msra.mxu0 0.0
        %2089 = vmatpush.msra.mxu0 0.0
        %2090 = vmatpush.msra.mxu0 %v2027
        %2091 = vmatmul.f32.gmra.mxu0 %v2033
        %v2092 = vpop.f32.mrf.mxu0
        %v2093 = vadd.f32 0.0, %v2092
        %2094 = vdwg.mxu0
        %v2095 = vadd.f32 %v1976, %v2053
        %v2096 = vadd.f32 %v1996, %v2073
        %v2097 = vadd.f32 %v2016, %v2093
        %s2098 = scalar_lea.vmem %s5, 12
        %v2099 = vld [vmem:[%s2098] sm:$0xf]
        %2100 = vrot.lane.b32.xlu0 %v1859, 1
        %v2101 = vpop.permute.xlu0 %2100
        %2102 = vrot.lane.b32.xlu0 %v1860, 1
        %v2103 = vpop.permute.xlu0 %2102
        %2104 = vrot.lane.b32.xlu0 %v1861, 1
        %v2105 = vpop.permute.xlu0 %2104
        %v2106 = vsel %vm556, %v2101, %v2103
        %v2107 = vsel %vm556, %v2103, %v2105
        %v2111 = vsel %vm556, 0.0, %v2101
        %v2113 = vsel %vm340, %v2099, 0
        %2115 = vmatpush.msra.mxu0 0.0
        %2116 = vmatpush.msra.mxu0 0.0
        %2117 = vmatpush.msra.mxu0 0.0
        %2118 = vmatpush.msra.mxu0 0.0
        %2119 = vmatpush.msra.mxu0 0.0
        %2120 = vmatpush.msra.mxu0 0.0
        %2121 = vmatpush.msra.mxu0 0.0
        %2122 = vmatpush.msra.mxu0 0.0
        %2123 = vmatpush.msra.mxu0 0.0
        %2124 = vmatpush.msra.mxu0 0.0
        %2125 = vmatpush.msra.mxu0 0.0
        %2126 = vmatpush.msra.mxu0 0.0
        %2127 = vmatpush.msra.mxu0 0.0
        %2128 = vmatpush.msra.mxu0 0.0
        %2129 = vmatpush.msra.mxu0 0.0
        %2130 = vmatpush.msra.mxu0 %v2111
        %2131 = vmatmul.f32.gmra.mxu0 %v2113
        %v2132 = vpop.f32.mrf.mxu0
        %v2133 = vadd.f32 0.0, %v2132
        %2134 = vdwg.mxu0
        %2135 = vmatpush.msra.mxu0 0.0
        %2136 = vmatpush.msra.mxu0 0.0
        %2137 = vmatpush.msra.mxu0 0.0
        %2138 = vmatpush.msra.mxu0 0.0
        %2139 = vmatpush.msra.mxu0 0.0
        %2140 = vmatpush.msra.mxu0 0.0
        %2141 = vmatpush.msra.mxu0 0.0
        %2142 = vmatpush.msra.mxu0 0.0
        %2143 = vmatpush.msra.mxu0 0.0
        %2144 = vmatpush.msra.mxu0 0.0
        %2145 = vmatpush.msra.mxu0 0.0
        %2146 = vmatpush.msra.mxu0 0.0
        %2147 = vmatpush.msra.mxu0 0.0
        %2148 = vmatpush.msra.mxu0 0.0
        %2149 = vmatpush.msra.mxu0 0.0
        %2150 = vmatpush.msra.mxu0 %v2106
        %2151 = vmatmul.f32.gmra.mxu0 %v2113
        %v2152 = vpop.f32.mrf.mxu0
        %v2153 = vadd.f32 0.0, %v2152
        %2154 = vdwg.mxu0
        %2155 = vmatpush.msra.mxu0 0.0
        %2156 = vmatpush.msra.mxu0 0.0
        %2157 = vmatpush.msra.mxu0 0.0
        %2158 = vmatpush.msra.mxu0 0.0
        %2159 = vmatpush.msra.mxu0 0.0
        %2160 = vmatpush.msra.mxu0 0.0
        %2161 = vmatpush.msra.mxu0 0.0
        %2162 = vmatpush.msra.mxu0 0.0
        %2163 = vmatpush.msra.mxu0 0.0
        %2164 = vmatpush.msra.mxu0 0.0
        %2165 = vmatpush.msra.mxu0 0.0
        %2166 = vmatpush.msra.mxu0 0.0
        %2167 = vmatpush.msra.mxu0 0.0
        %2168 = vmatpush.msra.mxu0 0.0
        %2169 = vmatpush.msra.mxu0 0.0
        %2170 = vmatpush.msra.mxu0 %v2107
        %2171 = vmatmul.f32.gmra.mxu0 %v2113
        %v2172 = vpop.f32.mrf.mxu0
        %v2173 = vadd.f32 0.0, %v2172
        %2174 = vdwg.mxu0
        %v2175 = vadd.f32 %v2095, %v2133
        %v2176 = vadd.f32 %v2096, %v2153
        %v2177 = vadd.f32 %v2097, %v2173
        %s2178 = scalar_lea.vmem %s5, 16
        %v2179 = vld [vmem:[%s2178] sm:$0xf]
        %v2181 = vsel %vm340, %v2179, 0
        %2183 = vmatpush.msra.mxu0 0.0
        %2184 = vmatpush.msra.mxu0 0.0
        %2185 = vmatpush.msra.mxu0 0.0
        %2186 = vmatpush.msra.mxu0 0.0
        %2187 = vmatpush.msra.mxu0 0.0
        %2188 = vmatpush.msra.mxu0 0.0
        %2189 = vmatpush.msra.mxu0 0.0
        %2190 = vmatpush.msra.mxu0 0.0
        %2191 = vmatpush.msra.mxu0 0.0
        %2192 = vmatpush.msra.mxu0 0.0
        %2193 = vmatpush.msra.mxu0 0.0
        %2194 = vmatpush.msra.mxu0 0.0
        %2195 = vmatpush.msra.mxu0 0.0
        %2196 = vmatpush.msra.mxu0 0.0
        %2197 = vmatpush.msra.mxu0 0.0
        %2198 = vmatpush.msra.mxu0 %v1859
        %2199 = vmatmul.f32.gmra.mxu0 %v2181
        %v2200 = vpop.f32.mrf.mxu0
        %v2201 = vadd.f32 0.0, %v2200
        %2202 = vdwg.mxu0
        %2203 = vmatpush.msra.mxu0 0.0
        %2204 = vmatpush.msra.mxu0 0.0
        %2205 = vmatpush.msra.mxu0 0.0
        %2206 = vmatpush.msra.mxu0 0.0
        %2207 = vmatpush.msra.mxu0 0.0
        %2208 = vmatpush.msra.mxu0 0.0
        %2209 = vmatpush.msra.mxu0 0.0
        %2210 = vmatpush.msra.mxu0 0.0
        %2211 = vmatpush.msra.mxu0 0.0
        %2212 = vmatpush.msra.mxu0 0.0
        %2213 = vmatpush.msra.mxu0 0.0
        %2214 = vmatpush.msra.mxu0 0.0
        %2215 = vmatpush.msra.mxu0 0.0
        %2216 = vmatpush.msra.mxu0 0.0
        %2217 = vmatpush.msra.mxu0 0.0
        %2218 = vmatpush.msra.mxu0 %v1860
        %2219 = vmatmul.f32.gmra.mxu0 %v2181
        %v2220 = vpop.f32.mrf.mxu0
        %v2221 = vadd.f32 0.0, %v2220
        %2222 = vdwg.mxu0
        %2223 = vmatpush.msra.mxu0 0.0
        %2224 = vmatpush.msra.mxu0 0.0
        %2225 = vmatpush.msra.mxu0 0.0
        %2226 = vmatpush.msra.mxu0 0.0
        %2227 = vmatpush.msra.mxu0 0.0
        %2228 = vmatpush.msra.mxu0 0.0
        %2229 = vmatpush.msra.mxu0 0.0
        %2230 = vmatpush.msra.mxu0 0.0
        %2231 = vmatpush.msra.mxu0 0.0
        %2232 = vmatpush.msra.mxu0 0.0
        %2233 = vmatpush.msra.mxu0 0.0
        %2234 = vmatpush.msra.mxu0 0.0
        %2235 = vmatpush.msra.mxu0 0.0
        %2236 = vmatpush.msra.mxu0 0.0
        %2237 = vmatpush.msra.mxu0 0.0
        %2238 = vmatpush.msra.mxu0 %v1861
        %2239 = vmatmul.f32.gmra.mxu0 %v2181
        %v2240 = vpop.f32.mrf.mxu0
        %v2241 = vadd.f32 0.0, %v2240
        %2242 = vdwg.mxu0
        %v2243 = vadd.f32 %v2175, %v2201
        %v2244 = vadd.f32 %v2176, %v2221
        %v2245 = vadd.f32 %v2177, %v2241
        %s2246 = scalar_lea.vmem %s5, 20
        %v2247 = vld [vmem:[%s2246] sm:$0xf]
        %2248 = vrot.lane.b32.xlu0 %v1859, 127
        %v2249 = vpop.permute.xlu0 %2248
        %2250 = vrot.lane.b32.xlu0 %v1860, 127
        %v2251 = vpop.permute.xlu0 %2250
        %2252 = vrot.lane.b32.xlu0 %v1861, 127
        %v2253 = vpop.permute.xlu0 %2252
        %v2254 = vsel %vm705, %v2249, %v2251
        %v2255 = vsel %vm705, %v2251, %v2253
        %v2259 = vsel %vm705, %v2253, 0.0
        %v2261 = vsel %vm340, %v2247, 0
        %2263 = vmatpush.msra.mxu0 0.0
        %2264 = vmatpush.msra.mxu0 0.0
        %2265 = vmatpush.msra.mxu0 0.0
        %2266 = vmatpush.msra.mxu0 0.0
        %2267 = vmatpush.msra.mxu0 0.0
        %2268 = vmatpush.msra.mxu0 0.0
        %2269 = vmatpush.msra.mxu0 0.0
        %2270 = vmatpush.msra.mxu0 0.0
        %2271 = vmatpush.msra.mxu0 0.0
        %2272 = vmatpush.msra.mxu0 0.0
        %2273 = vmatpush.msra.mxu0 0.0
        %2274 = vmatpush.msra.mxu0 0.0
        %2275 = vmatpush.msra.mxu0 0.0
        %2276 = vmatpush.msra.mxu0 0.0
        %2277 = vmatpush.msra.mxu0 0.0
        %2278 = vmatpush.msra.mxu0 %v2254
        %2279 = vmatmul.f32.gmra.mxu0 %v2261
        %v2280 = vpop.f32.mrf.mxu0
        %v2281 = vadd.f32 0.0, %v2280
        %2282 = vdwg.mxu0
        %2283 = vmatpush.msra.mxu0 0.0
        %2284 = vmatpush.msra.mxu0 0.0
        %2285 = vmatpush.msra.mxu0 0.0
        %2286 = vmatpush.msra.mxu0 0.0
        %2287 = vmatpush.msra.mxu0 0.0
        %2288 = vmatpush.msra.mxu0 0.0
        %2289 = vmatpush.msra.mxu0 0.0
        %2290 = vmatpush.msra.mxu0 0.0
        %2291 = vmatpush.msra.mxu0 0.0
        %2292 = vmatpush.msra.mxu0 0.0
        %2293 = vmatpush.msra.mxu0 0.0
        %2294 = vmatpush.msra.mxu0 0.0
        %2295 = vmatpush.msra.mxu0 0.0
        %2296 = vmatpush.msra.mxu0 0.0
        %2297 = vmatpush.msra.mxu0 0.0
        %2298 = vmatpush.msra.mxu0 %v2255
        %2299 = vmatmul.f32.gmra.mxu0 %v2261
        %v2300 = vpop.f32.mrf.mxu0
        %v2301 = vadd.f32 0.0, %v2300
        %2302 = vdwg.mxu0
        %2303 = vmatpush.msra.mxu0 0.0
        %2304 = vmatpush.msra.mxu0 0.0
        %2305 = vmatpush.msra.mxu0 0.0
        %2306 = vmatpush.msra.mxu0 0.0
        %2307 = vmatpush.msra.mxu0 0.0
        %2308 = vmatpush.msra.mxu0 0.0
        %2309 = vmatpush.msra.mxu0 0.0
        %2310 = vmatpush.msra.mxu0 0.0
        %2311 = vmatpush.msra.mxu0 0.0
        %2312 = vmatpush.msra.mxu0 0.0
        %2313 = vmatpush.msra.mxu0 0.0
        %2314 = vmatpush.msra.mxu0 0.0
        %2315 = vmatpush.msra.mxu0 0.0
        %2316 = vmatpush.msra.mxu0 0.0
        %2317 = vmatpush.msra.mxu0 0.0
        %2318 = vmatpush.msra.mxu0 %v2259
        %2319 = vmatmul.f32.gmra.mxu0 %v2261
        %v2320 = vpop.f32.mrf.mxu0
        %v2321 = vadd.f32 0.0, %v2320
        %2322 = vdwg.mxu0
        %v2323 = vadd.f32 %v2243, %v2281
        %v2324 = vadd.f32 %v2244, %v2301
        %v2325 = vadd.f32 %v2245, %v2321
        %s2326 = scalar_lea.vmem %s5, 24
        %v2327 = vld [vmem:[%s2326] sm:$0xf]
        %2328 = vrot.lane.b32.xlu0 %v1859, 111
        %v2329 = vpop.permute.xlu0 %2328
        %2330 = vrot.lane.b32.xlu0 %v1860, 111
        %v2331 = vpop.permute.xlu0 %2330
        %2332 = vrot.lane.b32.xlu0 %v1861, 111
        %v2333 = vpop.permute.xlu0 %2332
        %v2334 = vsel %vm786, %v2329, %v2331
        %v2335 = vsel %vm786, %v2331, %v2333
        %v2339 = vsel %vm786, %v2333, 0.0
        %v2341 = vsel %vm340, %v2327, 0
        %2343 = vmatpush.msra.mxu0 0.0
        %2344 = vmatpush.msra.mxu0 0.0
        %2345 = vmatpush.msra.mxu0 0.0
        %2346 = vmatpush.msra.mxu0 0.0
        %2347 = vmatpush.msra.mxu0 0.0
        %2348 = vmatpush.msra.mxu0 0.0
        %2349 = vmatpush.msra.mxu0 0.0
        %2350 = vmatpush.msra.mxu0 0.0
        %2351 = vmatpush.msra.mxu0 0.0
        %2352 = vmatpush.msra.mxu0 0.0
        %2353 = vmatpush.msra.mxu0 0.0
        %2354 = vmatpush.msra.mxu0 0.0
        %2355 = vmatpush.msra.mxu0 0.0
        %2356 = vmatpush.msra.mxu0 0.0
        %2357 = vmatpush.msra.mxu0 0.0
        %2358 = vmatpush.msra.mxu0 %v2334
        %2359 = vmatmul.f32.gmra.mxu0 %v2341
        %v2360 = vpop.f32.mrf.mxu0
        %v2361 = vadd.f32 0.0, %v2360
        %2362 = vdwg.mxu0
        %2363 = vmatpush.msra.mxu0 0.0
        %2364 = vmatpush.msra.mxu0 0.0
        %2365 = vmatpush.msra.mxu0 0.0
        %2366 = vmatpush.msra.mxu0 0.0
        %2367 = vmatpush.msra.mxu0 0.0
        %2368 = vmatpush.msra.mxu0 0.0
        %2369 = vmatpush.msra.mxu0 0.0
        %2370 = vmatpush.msra.mxu0 0.0
        %2371 = vmatpush.msra.mxu0 0.0
        %2372 = vmatpush.msra.mxu0 0.0
        %2373 = vmatpush.msra.mxu0 0.0
        %2374 = vmatpush.msra.mxu0 0.0
        %2375 = vmatpush.msra.mxu0 0.0
        %2376 = vmatpush.msra.mxu0 0.0
        %2377 = vmatpush.msra.mxu0 0.0
        %2378 = vmatpush.msra.mxu0 %v2335
        %2379 = vmatmul.f32.gmra.mxu0 %v2341
        %v2380 = vpop.f32.mrf.mxu0
        %v2381 = vadd.f32 0.0, %v2380
        %2382 = vdwg.mxu0
        %2383 = vmatpush.msra.mxu0 0.0
        %2384 = vmatpush.msra.mxu0 0.0
        %2385 = vmatpush.msra.mxu0 0.0
        %2386 = vmatpush.msra.mxu0 0.0
        %2387 = vmatpush.msra.mxu0 0.0
        %2388 = vmatpush.msra.mxu0 0.0
        %2389 = vmatpush.msra.mxu0 0.0
        %2390 = vmatpush.msra.mxu0 0.0
        %2391 = vmatpush.msra.mxu0 0.0
        %2392 = vmatpush.msra.mxu0 0.0
        %2393 = vmatpush.msra.mxu0 0.0
        %2394 = vmatpush.msra.mxu0 0.0
        %2395 = vmatpush.msra.mxu0 0.0
        %2396 = vmatpush.msra.mxu0 0.0
        %2397 = vmatpush.msra.mxu0 0.0
        %2398 = vmatpush.msra.mxu0 %v2339
        %2399 = vmatmul.f32.gmra.mxu0 %v2341
        %v2400 = vpop.f32.mrf.mxu0
        %v2401 = vadd.f32 0.0, %v2400
        %2402 = vdwg.mxu0
        %v2403 = vadd.f32 %v2323, %v2361
        %v2404 = vadd.f32 %v2324, %v2381
        %v2405 = vadd.f32 %v2325, %v2401
        %s2406 = scalar_lea.vmem %s5, 28
        %v2407 = vld [vmem:[%s2406] sm:$0xf]
        %2408 = vrot.lane.b32.xlu0 %v1859, 110
        %v2409 = vpop.permute.xlu0 %2408
        %2410 = vrot.lane.b32.xlu0 %v1860, 110
        %v2411 = vpop.permute.xlu0 %2410
        %2412 = vrot.lane.b32.xlu0 %v1861, 110
        %v2413 = vpop.permute.xlu0 %2412
        %v2414 = vsel %vm867, %v2409, %v2411
        %v2415 = vsel %vm867, %v2411, %v2413
        %v2419 = vsel %vm867, %v2413, 0.0
        %v2421 = vsel %vm340, %v2407, 0
        %2423 = vmatpush.msra.mxu0 0.0
        %2424 = vmatpush.msra.mxu0 0.0
        %2425 = vmatpush.msra.mxu0 0.0
        %2426 = vmatpush.msra.mxu0 0.0
        %2427 = vmatpush.msra.mxu0 0.0
        %2428 = vmatpush.msra.mxu0 0.0
        %2429 = vmatpush.msra.mxu0 0.0
        %2430 = vmatpush.msra.mxu0 0.0
        %2431 = vmatpush.msra.mxu0 0.0
        %2432 = vmatpush.msra.mxu0 0.0
        %2433 = vmatpush.msra.mxu0 0.0
        %2434 = vmatpush.msra.mxu0 0.0
        %2435 = vmatpush.msra.mxu0 0.0
        %2436 = vmatpush.msra.mxu0 0.0
        %2437 = vmatpush.msra.mxu0 0.0
        %2438 = vmatpush.msra.mxu0 %v2414
        %2439 = vmatmul.f32.gmra.mxu0 %v2421
        %v2440 = vpop.f32.mrf.mxu0
        %v2441 = vadd.f32 0.0, %v2440
        %2442 = vdwg.mxu0
        %2443 = vmatpush.msra.mxu0 0.0
        %2444 = vmatpush.msra.mxu0 0.0
        %2445 = vmatpush.msra.mxu0 0.0
        %2446 = vmatpush.msra.mxu0 0.0
        %2447 = vmatpush.msra.mxu0 0.0
        %2448 = vmatpush.msra.mxu0 0.0
        %2449 = vmatpush.msra.mxu0 0.0
        %2450 = vmatpush.msra.mxu0 0.0
        %2451 = vmatpush.msra.mxu0 0.0
        %2452 = vmatpush.msra.mxu0 0.0
        %2453 = vmatpush.msra.mxu0 0.0
        %2454 = vmatpush.msra.mxu0 0.0
        %2455 = vmatpush.msra.mxu0 0.0
        %2456 = vmatpush.msra.mxu0 0.0
        %2457 = vmatpush.msra.mxu0 0.0
        %2458 = vmatpush.msra.mxu0 %v2415
        %2459 = vmatmul.f32.gmra.mxu0 %v2421
        %v2460 = vpop.f32.mrf.mxu0
        %v2461 = vadd.f32 0.0, %v2460
        %2462 = vdwg.mxu0
        %2463 = vmatpush.msra.mxu0 0.0
        %2464 = vmatpush.msra.mxu0 0.0
        %2465 = vmatpush.msra.mxu0 0.0
        %2466 = vmatpush.msra.mxu0 0.0
        %2467 = vmatpush.msra.mxu0 0.0
        %2468 = vmatpush.msra.mxu0 0.0
        %2469 = vmatpush.msra.mxu0 0.0
        %2470 = vmatpush.msra.mxu0 0.0
        %2471 = vmatpush.msra.mxu0 0.0
        %2472 = vmatpush.msra.mxu0 0.0
        %2473 = vmatpush.msra.mxu0 0.0
        %2474 = vmatpush.msra.mxu0 0.0
        %2475 = vmatpush.msra.mxu0 0.0
        %2476 = vmatpush.msra.mxu0 0.0
        %2477 = vmatpush.msra.mxu0 0.0
        %2478 = vmatpush.msra.mxu0 %v2419
        %2479 = vmatmul.f32.gmra.mxu0 %v2421
        %v2480 = vpop.f32.mrf.mxu0
        %v2481 = vadd.f32 0.0, %v2480
        %2482 = vdwg.mxu0
        %v2483 = vadd.f32 %v2403, %v2441
        %v2484 = vadd.f32 %v2404, %v2461
        %v2485 = vadd.f32 %v2405, %v2481
        %s2486 = scalar_lea.vmem %s5, 32
        %v2487 = vld [vmem:[%s2486] sm:$0xf]
        %2488 = vrot.lane.b32.xlu0 %v1859, 109
        %v2489 = vpop.permute.xlu0 %2488
        %2490 = vrot.lane.b32.xlu0 %v1860, 109
        %v2491 = vpop.permute.xlu0 %2490
        %2492 = vrot.lane.b32.xlu0 %v1861, 109
        %v2493 = vpop.permute.xlu0 %2492
        %v2494 = vsel %vm948, %v2489, %v2491
        %v2495 = vsel %vm948, %v2491, %v2493
        %v2499 = vsel %vm948, %v2493, 0.0
        %v2501 = vsel %vm340, %v2487, 0
        %2503 = vmatpush.msra.mxu0 0.0
        %2504 = vmatpush.msra.mxu0 0.0
        %2505 = vmatpush.msra.mxu0 0.0
        %2506 = vmatpush.msra.mxu0 0.0
        %2507 = vmatpush.msra.mxu0 0.0
        %2508 = vmatpush.msra.mxu0 0.0
        %2509 = vmatpush.msra.mxu0 0.0
        %2510 = vmatpush.msra.mxu0 0.0
        %2511 = vmatpush.msra.mxu0 0.0
        %2512 = vmatpush.msra.mxu0 0.0
        %2513 = vmatpush.msra.mxu0 0.0
        %2514 = vmatpush.msra.mxu0 0.0
        %2515 = vmatpush.msra.mxu0 0.0
        %2516 = vmatpush.msra.mxu0 0.0
        %2517 = vmatpush.msra.mxu0 0.0
        %2518 = vmatpush.msra.mxu0 %v2494
        %2519 = vmatmul.f32.gmra.mxu0 %v2501
        %v2520 = vpop.f32.mrf.mxu0
        %v2521 = vadd.f32 0.0, %v2520
        %2522 = vdwg.mxu0
        %2523 = vmatpush.msra.mxu0 0.0
        %2524 = vmatpush.msra.mxu0 0.0
        %2525 = vmatpush.msra.mxu0 0.0
        %2526 = vmatpush.msra.mxu0 0.0
        %2527 = vmatpush.msra.mxu0 0.0
        %2528 = vmatpush.msra.mxu0 0.0
        %2529 = vmatpush.msra.mxu0 0.0
        %2530 = vmatpush.msra.mxu0 0.0
        %2531 = vmatpush.msra.mxu0 0.0
        %2532 = vmatpush.msra.mxu0 0.0
        %2533 = vmatpush.msra.mxu0 0.0
        %2534 = vmatpush.msra.mxu0 0.0
        %2535 = vmatpush.msra.mxu0 0.0
        %2536 = vmatpush.msra.mxu0 0.0
        %2537 = vmatpush.msra.mxu0 0.0
        %2538 = vmatpush.msra.mxu0 %v2495
        %2539 = vmatmul.f32.gmra.mxu0 %v2501
        %v2540 = vpop.f32.mrf.mxu0
        %v2541 = vadd.f32 0.0, %v2540
        %2542 = vdwg.mxu0
        %2543 = vmatpush.msra.mxu0 0.0
        %2544 = vmatpush.msra.mxu0 0.0
        %2545 = vmatpush.msra.mxu0 0.0
        %2546 = vmatpush.msra.mxu0 0.0
        %2547 = vmatpush.msra.mxu0 0.0
        %2548 = vmatpush.msra.mxu0 0.0
        %2549 = vmatpush.msra.mxu0 0.0
        %2550 = vmatpush.msra.mxu0 0.0
        %2551 = vmatpush.msra.mxu0 0.0
        %2552 = vmatpush.msra.mxu0 0.0
        %2553 = vmatpush.msra.mxu0 0.0
        %2554 = vmatpush.msra.mxu0 0.0
        %2555 = vmatpush.msra.mxu0 0.0
        %2556 = vmatpush.msra.mxu0 0.0
        %2557 = vmatpush.msra.mxu0 0.0
        %2558 = vmatpush.msra.mxu0 %v2499
        %2559 = vmatmul.f32.gmra.mxu0 %v2501
        %v2560 = vpop.f32.mrf.mxu0
        %v2561 = vadd.f32 0.0, %v2560
        %2562 = vdwg.mxu0
        %v2563 = vadd.f32 %v2483, %v2521
        %v2564 = vadd.f32 %v2484, %v2541
        %v2565 = vadd.f32 %v2485, %v2561
        %v2566 = vmax.f32 %v2563, 0.0
        %v2567 = vmax.f32 %v2564, 0.0
        %v2568 = vmax.f32 %v2565, 0.0
        %v2569 = vld [vmem:[%s6] sm:$0x1]
        %v2571 = vsel %vm1127, %v2569, 0
        %v2574 = vsel %vm1131, %v2566, 0
        %v2577 = vsel %vm1131, %v2567, 0
        %v2580 = vsel %vm1131, %v2568, 0
        %2582 = vmatpush.msra.mxu0 0.0
        %2583 = vmatpush.msra.mxu0 0.0
        %2584 = vmatpush.msra.mxu0 0.0
        %2585 = vmatpush.msra.mxu0 0.0
        %2586 = vmatpush.msra.mxu0 0.0
        %2587 = vmatpush.msra.mxu0 0.0
        %2588 = vmatpush.msra.mxu0 0.0
        %2589 = vmatpush.msra.mxu0 0.0
        %2590 = vmatpush.msra.mxu0 0.0
        %2591 = vmatpush.msra.mxu0 0.0
        %2592 = vmatpush.msra.mxu0 0.0
        %2593 = vmatpush.msra.mxu0 0.0
        %2594 = vmatpush.msra.mxu0 0.0
        %2595 = vmatpush.msra.mxu0 0.0
        %2596 = vmatpush.msra.mxu0 0.0
        %2597 = vmatpush.msra.mxu0 %v2574
        %2598 = vmatmul.f32.gmra.mxu0 %v2571
        %v2599 = vpop.f32.mrf.mxu0
        %v2600 = vadd.f32 0.0, %v2599
        %2601 = vdwg.mxu0
        %2602 = vmatpush.msra.mxu0 0.0
        %2603 = vmatpush.msra.mxu0 0.0
        %2604 = vmatpush.msra.mxu0 0.0
        %2605 = vmatpush.msra.mxu0 0.0
        %2606 = vmatpush.msra.mxu0 0.0
        %2607 = vmatpush.msra.mxu0 0.0
        %2608 = vmatpush.msra.mxu0 0.0
        %2609 = vmatpush.msra.mxu0 0.0
        %2610 = vmatpush.msra.mxu0 0.0
        %2611 = vmatpush.msra.mxu0 0.0
        %2612 = vmatpush.msra.mxu0 0.0
        %2613 = vmatpush.msra.mxu0 0.0
        %2614 = vmatpush.msra.mxu0 0.0
        %2615 = vmatpush.msra.mxu0 0.0
        %2616 = vmatpush.msra.mxu0 0.0
        %2617 = vmatpush.msra.mxu0 %v2577
        %2618 = vmatmul.f32.gmra.mxu0 %v2571
        %v2619 = vpop.f32.mrf.mxu0
        %v2620 = vadd.f32 0.0, %v2619
        %2621 = vdwg.mxu0
        %2622 = vmatpush.msra.mxu0 0.0
        %2623 = vmatpush.msra.mxu0 0.0
        %2624 = vmatpush.msra.mxu0 0.0
        %2625 = vmatpush.msra.mxu0 0.0
        %2626 = vmatpush.msra.mxu0 0.0
        %2627 = vmatpush.msra.mxu0 0.0
        %2628 = vmatpush.msra.mxu0 0.0
        %2629 = vmatpush.msra.mxu0 0.0
        %2630 = vmatpush.msra.mxu0 0.0
        %2631 = vmatpush.msra.mxu0 0.0
        %2632 = vmatpush.msra.mxu0 0.0
        %2633 = vmatpush.msra.mxu0 0.0
        %2634 = vmatpush.msra.mxu0 0.0
        %2635 = vmatpush.msra.mxu0 0.0
        %2636 = vmatpush.msra.mxu0 0.0
        %2637 = vmatpush.msra.mxu0 %v2580
        %2638 = vmatmul.f32.gmra.mxu0 %v2571
        %v2639 = vpop.f32.mrf.mxu0
        %v2640 = vadd.f32 0.0, %v2639
        %2641 = vdwg.mxu0
        %v2642 = vmax.f32 %v2600, 0.0
        %v2643 = vmax.f32 %v2620, 0.0
        %v2644 = vmax.f32 %v2640, 0.0
        %v2645 = vmul.f32 %v2642, %v1092
        %v2646 = vmul.f32 %v2643, %v1093
        %v2647 = vmul.f32 %v2644, %v1094
        %v2648 = vld [vmem:[%s7] sm:$0x1]
        %2652 = vrot.lane.b32.xlu0 %v2645, 19
        %v2653 = vpop.permute.xlu0 %2652
        %2654 = vrot.lane.b32.xlu0 %v2646, 19
        %v2655 = vpop.permute.xlu0 %2654
        %2656 = vrot.lane.b32.xlu0 %v2647, 19
        %v2657 = vpop.permute.xlu0 %2656
        %v2658 = vsel %vm318, %v2653, %v2655
        %v2659 = vsel %vm318, %v2655, %v2657
        %v2663 = vsel %vm318, 0.0, %v2653
        %2665 = vset.pattern.permute.xlu0 0
        %2666 = vperm.xlu0 %2665, %v2648
        %v2667 = vpop.permute.xlu0 %2666
        %v2669 = vperm.slane %v2667, 0
        %v2670 = vmul.f32 %v2669, %v2663
        %v2671 = vmul.f32 %v2669, %v2658
        %v2672 = vmul.f32 %v2669, %v2659
        %v2673 = vadd.f32 %v2670, 0.0
        %v2674 = vadd.f32 %v2671, 0.0
        %v2675 = vadd.f32 %v2672, 0.0
        %s2676 = scalar_lea.vmem %s7, 1
        %v2677 = vld [vmem:[%s2676] sm:$0x1]
        %2678 = vrot.lane.b32.xlu0 %v2645, 18
        %v2679 = vpop.permute.xlu0 %2678
        %2680 = vrot.lane.b32.xlu0 %v2646, 18
        %v2681 = vpop.permute.xlu0 %2680
        %2682 = vrot.lane.b32.xlu0 %v2647, 18
        %v2683 = vpop.permute.xlu0 %2682
        %v2684 = vsel %vm333, %v2679, %v2681
        %v2685 = vsel %vm333, %v2681, %v2683
        %v2689 = vsel %vm333, 0.0, %v2679
        %2691 = vset.pattern.permute.xlu0 0
        %2692 = vperm.xlu0 %2691, %v2677
        %v2693 = vpop.permute.xlu0 %2692
        %v2695 = vperm.slane %v2693, 0
        %v2696 = vmul.f32 %v2695, %v2689
        %v2697 = vmul.f32 %v2695, %v2684
        %v2698 = vmul.f32 %v2695, %v2685
        %v2699 = vadd.f32 %v2673, %v2696
        %v2700 = vadd.f32 %v2674, %v2697
        %v2701 = vadd.f32 %v2675, %v2698
        %s2702 = scalar_lea.vmem %s7, 2
        %v2703 = vld [vmem:[%s2702] sm:$0x1]
        %2704 = vrot.lane.b32.xlu0 %v2645, 17
        %v2705 = vpop.permute.xlu0 %2704
        %2706 = vrot.lane.b32.xlu0 %v2646, 17
        %v2707 = vpop.permute.xlu0 %2706
        %2708 = vrot.lane.b32.xlu0 %v2647, 17
        %v2709 = vpop.permute.xlu0 %2708
        %v2710 = vsel %vm475, %v2705, %v2707
        %v2711 = vsel %vm475, %v2707, %v2709
        %v2715 = vsel %vm475, 0.0, %v2705
        %2717 = vset.pattern.permute.xlu0 0
        %2718 = vperm.xlu0 %2717, %v2703
        %v2719 = vpop.permute.xlu0 %2718
        %v2721 = vperm.slane %v2719, 0
        %v2722 = vmul.f32 %v2721, %v2715
        %v2723 = vmul.f32 %v2721, %v2710
        %v2724 = vmul.f32 %v2721, %v2711
        %v2725 = vadd.f32 %v2699, %v2722
        %v2726 = vadd.f32 %v2700, %v2723
        %v2727 = vadd.f32 %v2701, %v2724
        %s2728 = scalar_lea.vmem %s7, 3
        %v2729 = vld [vmem:[%s2728] sm:$0x1]
        %2730 = vrot.lane.b32.xlu0 %v2645, 1
        %v2731 = vpop.permute.xlu0 %2730
        %2732 = vrot.lane.b32.xlu0 %v2646, 1
        %v2733 = vpop.permute.xlu0 %2732
        %2734 = vrot.lane.b32.xlu0 %v2647, 1
        %v2735 = vpop.permute.xlu0 %2734
        %v2736 = vsel %vm556, %v2731, %v2733
        %v2737 = vsel %vm556, %v2733, %v2735
        %v2741 = vsel %vm556, 0.0, %v2731
        %2743 = vset.pattern.permute.xlu0 0
        %2744 = vperm.xlu0 %2743, %v2729
        %v2745 = vpop.permute.xlu0 %2744
        %v2747 = vperm.slane %v2745, 0
        %v2748 = vmul.f32 %v2747, %v2741
        %v2749 = vmul.f32 %v2747, %v2736
        %v2750 = vmul.f32 %v2747, %v2737
        %v2751 = vadd.f32 %v2725, %v2748
        %v2752 = vadd.f32 %v2726, %v2749
        %v2753 = vadd.f32 %v2727, %v2750
        %s2754 = scalar_lea.vmem %s7, 4
        %v2755 = vld [vmem:[%s2754] sm:$0x1]
        %2757 = vset.pattern.permute.xlu0 0
        %2758 = vperm.xlu0 %2757, %v2755
        %v2759 = vpop.permute.xlu0 %2758
        %v2761 = vperm.slane %v2759, 0
        %v2762 = vmul.f32 %v2761, %v2645
        %v2763 = vmul.f32 %v2761, %v2646
        %v2764 = vmul.f32 %v2761, %v2647
        %v2765 = vadd.f32 %v2751, %v2762
        %v2766 = vadd.f32 %v2752, %v2763
        %v2767 = vadd.f32 %v2753, %v2764
        %s2768 = scalar_lea.vmem %s7, 5
        %v2769 = vld [vmem:[%s2768] sm:$0x1]
        %2770 = vrot.lane.b32.xlu0 %v2645, 127
        %v2771 = vpop.permute.xlu0 %2770
        %2772 = vrot.lane.b32.xlu0 %v2646, 127
        %v2773 = vpop.permute.xlu0 %2772
        %2774 = vrot.lane.b32.xlu0 %v2647, 127
        %v2775 = vpop.permute.xlu0 %2774
        %v2776 = vsel %vm705, %v2771, %v2773
        %v2777 = vsel %vm705, %v2773, %v2775
        %v2781 = vsel %vm705, %v2775, 0.0
        %2783 = vset.pattern.permute.xlu0 0
        %2784 = vperm.xlu0 %2783, %v2769
        %v2785 = vpop.permute.xlu0 %2784
        %v2787 = vperm.slane %v2785, 0
        %v2788 = vmul.f32 %v2787, %v2776
        %v2789 = vmul.f32 %v2787, %v2777
        %v2790 = vmul.f32 %v2787, %v2781
        %v2791 = vadd.f32 %v2765, %v2788
        %v2792 = vadd.f32 %v2766, %v2789
        %v2793 = vadd.f32 %v2767, %v2790
        %s2794 = scalar_lea.vmem %s7, 6
        %v2795 = vld [vmem:[%s2794] sm:$0x1]
        %2796 = vrot.lane.b32.xlu0 %v2645, 111
        %v2797 = vpop.permute.xlu0 %2796
        %2798 = vrot.lane.b32.xlu0 %v2646, 111
        %v2799 = vpop.permute.xlu0 %2798
        %2800 = vrot.lane.b32.xlu0 %v2647, 111
        %v2801 = vpop.permute.xlu0 %2800
        %v2802 = vsel %vm786, %v2797, %v2799
        %v2803 = vsel %vm786, %v2799, %v2801
        %v2807 = vsel %vm786, %v2801, 0.0
        %2809 = vset.pattern.permute.xlu0 0
        %2810 = vperm.xlu0 %2809, %v2795
        %v2811 = vpop.permute.xlu0 %2810
        %v2813 = vperm.slane %v2811, 0
        %v2814 = vmul.f32 %v2813, %v2802
        %v2815 = vmul.f32 %v2813, %v2803
        %v2816 = vmul.f32 %v2813, %v2807
        %v2817 = vadd.f32 %v2791, %v2814
        %v2818 = vadd.f32 %v2792, %v2815
        %v2819 = vadd.f32 %v2793, %v2816
        %s2820 = scalar_lea.vmem %s7, 7
        %v2821 = vld [vmem:[%s2820] sm:$0x1]
        %2822 = vrot.lane.b32.xlu0 %v2645, 110
        %v2823 = vpop.permute.xlu0 %2822
        %2824 = vrot.lane.b32.xlu0 %v2646, 110
        %v2825 = vpop.permute.xlu0 %2824
        %2826 = vrot.lane.b32.xlu0 %v2647, 110
        %v2827 = vpop.permute.xlu0 %2826
        %v2828 = vsel %vm867, %v2823, %v2825
        %v2829 = vsel %vm867, %v2825, %v2827
        %v2833 = vsel %vm867, %v2827, 0.0
        %2835 = vset.pattern.permute.xlu0 0
        %2836 = vperm.xlu0 %2835, %v2821
        %v2837 = vpop.permute.xlu0 %2836
        %v2839 = vperm.slane %v2837, 0
        %v2840 = vmul.f32 %v2839, %v2828
        %v2841 = vmul.f32 %v2839, %v2829
        %v2842 = vmul.f32 %v2839, %v2833
        %v2843 = vadd.f32 %v2817, %v2840
        %v2844 = vadd.f32 %v2818, %v2841
        %v2845 = vadd.f32 %v2819, %v2842
        %s2846 = scalar_lea.vmem %s7, 8
        %v2847 = vld [vmem:[%s2846] sm:$0x1]
        %2848 = vrot.lane.b32.xlu0 %v2645, 109
        %v2849 = vpop.permute.xlu0 %2848
        %2850 = vrot.lane.b32.xlu0 %v2646, 109
        %v2851 = vpop.permute.xlu0 %2850
        %2852 = vrot.lane.b32.xlu0 %v2647, 109
        %v2853 = vpop.permute.xlu0 %2852
        %v2854 = vsel %vm948, %v2849, %v2851
        %v2855 = vsel %vm948, %v2851, %v2853
        %v2859 = vsel %vm948, %v2853, 0.0
        %2861 = vset.pattern.permute.xlu0 0
        %2862 = vperm.xlu0 %2861, %v2847
        %v2863 = vpop.permute.xlu0 %2862
        %v2865 = vperm.slane %v2863, 0
        %v2866 = vmul.f32 %v2865, %v2854
        %v2867 = vmul.f32 %v2865, %v2855
        %v2868 = vmul.f32 %v2865, %v2859
        %v2869 = vadd.f32 %v2843, %v2866
        %v2870 = vadd.f32 %v2844, %v2867
        %v2871 = vadd.f32 %v2845, %v2868
        %v2872 = vadd.f32 %v2869, 0.0
        %v2873 = vadd.f32 %v2870, 0.0
        %v2874 = vadd.f32 %v2871, 0.0
        %v2878 = vrot.slane %v2873, 7
        %v2879 = vrot.slane %v2874, 6
        %vm2880 = vcmask 1040384
        %v2881 = vsel %vm2880, %v2872, %v2878
        %vm2882 = vcmask 1041408
        %v2883 = vsel %vm2882, %v2881, %v2879
        %v2885 = vlaneseq
        %vm2886 = vcmp.ge.s32.totalorder %v2885, 0
        %vm2887 = vcmp.lt.s32.totalorder %v2885, 384
        %vm2888 = vmand %vm2886, %vm2887
        %2889 = vst.msk [vmem:[%s298] sm:$0x7] %vm2888, %v2883
        %s2890 = sand.u32 %s203, 1
        %s2891 = scalar_lea.sflag [#allocation3], %s2890
        %s2892 = sand.u32 %s203, 1
        %s2893 = smul.addr %s2892, 3
        %s2894 = scalar_lea.vmem [#allocation2], %s2893
        // Predicated region
        $region53: #{tpu_custom_call.1} parent=51 // pred_check
          %p2895 = pneg %p213
        $region54: #{tpu_custom_call.1} parent=51 // pred_check_branch
          %2897 = sbr.rel (%p2895) target = $region56
        $region55: #{tpu_custom_call.1} parent=51 // pred_region
          %2899 = vsyncadd %s2891, 0
          %s2900 = smul.addr %s22, 3
          %s2901 = scalar_lea.hbm %s8, %s2900
          %s2903 = sshll.u32 %s2894, 4
          %s2904 = int_to_ptr.vmem [resolvable:$true] %s2903
          %s2905 = sshll.u32 %s2901, 4
          %s2906 = int_to_ptr.hbm [resolvable:$true] %s2905
          %2908 = dma.vmem_to_hbm [thread:$0]  %s2904, 48, %s2906, %s2891
        $region56: #{tpu_custom_call.1} parent=51 // pred_fallthru
          _
      $region52: #{tpu_custom_call.1} parent=5 // pred_fallthru
        _
      %p2909 = scmp.le.s32.totalorder 2, %s17
      // Predicated region
      $region57: #{tpu_custom_call.1} parent=5 // pred_check
        %p2910 = pneg %p2909
      $region58: #{tpu_custom_call.1} parent=5 // pred_check_branch
        %2912 = sbr.rel (%p2910) target = $region60
      $region59: #{tpu_custom_call.1} parent=5 // pred_region
        %s2913 = ssub.s32 %s17, 2
        // Predicated region
        $region61: #{tpu_custom_call.1} parent=59 // pred_check
          %p2914 = pneg %p219
        $region62: #{tpu_custom_call.1} parent=59 // pred_check_branch
          %2916 = sbr.rel (%p2914) target = $region64
        $region63: #{tpu_custom_call.1} parent=59 // pred_region
          %s2917 = sand.u32 %s204, 1
          %s2918 = scalar_lea.sflag [#allocation3], %s2917
          %s2919 = sand.u32 %s204, 1
          %s2920 = smul.addr %s2919, 3
          %s2921 = scalar_lea.vmem [#allocation2], %s2920
          %2923 = dma.done %s2918, 48
        $region64: #{tpu_custom_call.1} parent=59 // pred_fallthru
          _
      $region60: #{tpu_custom_call.1} parent=5 // pred_fallthru
        _
    $region6: #{tpu_custom_call.1} parent=1 // loop_footer
      %s21 = sadd.s32 1, %s17
    $region7: #{tpu_custom_call.1} parent=1 // loop_footer_branch
      %16 = sbr.rel target = $region3
    $region8: #{tpu_custom_call.1} parent=1 // loop_exit
      _
    %2924 = vsyncpa [#allocation3], 1
    %s2925 = scalar_lea.sflag [#allocation3], 1
    %2926 = vsyncpa %s2925, 1

</llo_original>
